<compile_context>
chip_gen: v7x
topology: tpu7x:2x2x1
jax: 0.10.0
libtpu: 0.0.40
codegen_flags: <defaults>
</compile_context>

<pallas_src>
import jax
import jax.numpy as jnp
from jax.experimental import pallas as pl
from jax.experimental.pallas import tpu as pltpu


def _round_up(v, m):
    return -(-v // m) * m


def _tile(total, cap):
    """Largest divisor of `total` <= cap, preferring sublane-aligned (x8) ones
    (or the full extent, which is always layout-legal)."""
    cap = max(1, min(total, cap))
    divs = [d for d in range(1, cap + 1) if total % d == 0]
    aligned = [d for d in divs if d % 8 == 0 or d == total]
    return (aligned or divs)[-1]


def _const_spec(a):
    """Whole (small) weight/bias array resident in VMEM every grid step."""
    nd = a.ndim

    def index_map(*_):
        return (0,) * nd

    return pl.BlockSpec(a.shape, index_map)


def _rows_cfg():
    """(rows_per_step, vmem_limit_bytes or None), chosen per TPU generation.

    2048 rows -> 8 MiB (rows,1024) f32 intermediate: fits the 32 MiB
    scoped-VMEM default on every generation (incl. v7x's 64 MiB physical
    VMEM).  On 128 MiB-VMEM chips (v5e/v6e) we double the tile and raise the
    scoped limit so the ~0.35us/step pipeline overhead is amortized over more
    MXU work per step.
    """
    rows, limit = 2048, None
    try:
        info = pltpu.get_tpu_info()
        vmem = (getattr(info, "vmem_capacity_bytes", None)
                or getattr(info, "vmem_size_bytes", None) or 0)
        if vmem >= (96 << 20):
            rows, limit = 4096, 96 << 20
    except Exception:
        pass  # conservative defaults work on all generations
    return rows, limit


# ---------------------------------------------------------------------------
# Fused kernel: SharedMLP -> running raw max over point tiles -> (last tile)
# bias + ReLU + fc1/fc2 head.
# grid = (B // bt, N_pad // nt); axis 0 parallel over cloud tiles, axis 1 is
# the point-tile reduction with a VMEM-scratch running-max accumulator.
# ---------------------------------------------------------------------------
def _make_point_kernel(bt, nt, n_valid, has_pad):
    neg = float(jnp.finfo(jnp.float32).min)

    def kernel(x_ref, w1_ref, b1_ref, w2_ref, b2_ref, w3_ref, b3_ref,
               fw1_ref, fb1_ref, fw2_ref, fb2_ref, o_ref, acc_ref):
        rows = bt * nt
        x = x_ref[...].reshape(rows, 3)                          # (rows, 3)

        # Linear(3,64) + ReLU: K=3 wastes the MXU -> 3 VPU FMAs.
        h = (x[:, 0:1] * w1_ref[0:1, :]
             + x[:, 1:2] * w1_ref[1:2, :]
             + x[:, 2:3] * w1_ref[2:3, :]
             + b1_ref[...])
        h = jnp.maximum(h, 0.0)                                  # (rows, 64)

        # Linear(64,128) + ReLU  (bf16 in, f32 accumulation).
        h = jnp.dot(h.astype(jnp.bfloat16), w2_ref[...],
                    preferred_element_type=jnp.float32) + b2_ref[...]
        h = jnp.maximum(h, 0.0)                                  # (rows, 128)

        # Linear(128,1024) -- dominant FLOPs.  Bias and ReLU are deliberately
        # NOT applied here: the per-channel bias commutes with max-over-points
        # and relu(max(.)) == max(relu(.)), so both are applied once per cloud
        # in the finalize step.  That removes two full VPU passes (+ stores)
        # over the (rows,1024) f32 intermediate on every grid step.
        h = jnp.dot(h.astype(jnp.bfloat16), w3_ref[...],
                    preferred_element_type=jnp.float32)          # (rows,1024)
        h = h.reshape(bt, nt, 1024)

        if has_pad:
            # Padded points must never win the max: mask them to -FLT_MAX.
            grow = (pl.program_id(1) * nt
                    + jax.lax.broadcasted_iota(jnp.int32, (bt, nt, 1), 1))
            h = jnp.where(grow < n_valid, h, neg)

        tile_max = jnp.max(h, axis=1)                            # (bt, 1024)

        # Running raw max across point tiles (seeded by the first tile).
        @pl.when(pl.program_id(1) == 0)
        def _():
            acc_ref[...] = tile_max

        @pl.when(pl.program_id(1) > 0)
        def _():
            acc_ref[...] = jnp.maximum(acc_ref[...], tile_max)

        # Finalize once per cloud tile: hoisted bias + ReLU on the pooled
        # vector, then the fused fc1/fc2 head (bf16 weights, f32 accumulate).
        @pl.when(pl.program_id(1) == pl.num_programs(1) - 1)
        def _():
            g = jnp.maximum(acc_ref[...] + b3_ref[...], 0.0)     # (bt, 1024)
            h1 = jnp.dot(g.astype(jnp.bfloat16), fw1_ref[...],
                         preferred_element_type=jnp.float32) + fb1_ref[...]
            h1 = jnp.maximum(h1, 0.0)                            # (bt, 512)
            h2 = jnp.dot(h1.astype(jnp.bfloat16), fw2_ref[...],
                         preferred_element_type=jnp.float32) + fb2_ref[...]
            o_ref[...] = jnp.maximum(h2, 0.0).astype(o_ref.dtype)  # (bt, 256)

    return kernel


@jax.jit
def t1_forward(x, params):
    """x: (B, N, 3) float32 point clouds.  Returns (B, 256) float32."""
    B, N, C = x.shape
    assert C == 3
    (w1, b1, w2, b2, w3, b3, fw1, fb1, fw2, fb2) = params

    # bf16 weights for every MXU layer (f32 accumulation keeps accuracy).
    w2b, w3b = w2.astype(jnp.bfloat16), w3.astype(jnp.bfloat16)
    fw1b, fw2b = fw1.astype(jnp.bfloat16), fw2.astype(jnp.bfloat16)

    rows_cap, vmem_limit = _rows_cfg()

    # --- point-axis tiling: nt is always a multiple of 8 (pad + mask) -------
    n_tiles = -(-N // rows_cap)
    nt = min(rows_cap, _round_up(-(-N // n_tiles), 8))
    n_pad = nt * n_tiles
    has_pad = n_pad != N
    if has_pad:
        x = jnp.pad(x, ((0, 0), (0, n_pad - N), (0, 0)))

    # --- batch-axis tiling ---------------------------------------------------
    bt = _tile(B, max(1, rows_cap // nt))
    if B >= 2 and bt == B:
        # Keep the parallel grid axis at extent >= 2 so both v7x TensorCores
        # get work -- but only when a sublane-aligned split of B exists.
        half = _tile(B, B // 2)
        if half % 8 == 0:
            bt = half

    grid = (B // bt, n_pad // nt)

    flops = (2 * B * n_pad * (3 * 64 + 64 * 128 + 128 * 1024)
             + 2 * B * (1024 * 512 + 512 * 256))
    bytes_accessed = (B * n_pad * 3 * 4
                      + w1.size * 4 + b1.size * 4
                      + w2b.size * 2 + b2.size * 4
                      + w3b.size * 2 + b3.size * 4
                      + fw1b.size * 2 + fb1.size * 4
                      + fw2b.size * 2 + fb2.size * 4
                      + B * 256 * 4)

    cp_kwargs = dict(dimension_semantics=("parallel", "arbitrary"))
    if vmem_limit is not None:
        cp_kwargs["vmem_limit_bytes"] = vmem_limit

    kernel = _make_point_kernel(bt, nt, N, has_pad)

    out = pl.pallas_call(
        kernel,
        out_shape=jax.ShapeDtypeStruct((B, 256), jnp.float32),
        grid=grid,
        in_specs=[
            pl.BlockSpec((bt, nt, 3), lambda b, n: (b, n, 0)),
            _const_spec(w1), _const_spec(b1),
            _const_spec(w2b), _const_spec(b2),
            _const_spec(w3b), _const_spec(b3),
            _const_spec(fw1b), _const_spec(fb1),
            _const_spec(fw2b), _const_spec(fb2),
        ],
        out_specs=pl.BlockSpec((bt, 256), lambda b, n: (b, 0)),
        scratch_shapes=[pltpu.VMEM((bt, 1024), jnp.float32)],
        compiler_params=pltpu.CompilerParams(**cp_kwargs),
        cost_estimate=pl.CostEstimate(flops=flops, transcendentals=0,
                                      bytes_accessed=bytes_accessed),
    )(x, w1, b1, w2b, b2, w3b, b3, fw1b, fb1, fw2b, fb2)
    return out


def init_params(key):
    """Deterministic PyTorch-style (uniform +-1/sqrt(fan_in)) Linear init.

    Weights stored already transposed to (in, out); biases as (1, out).
    """
    dims = [(3, 64), (64, 128), (128, 1024), (1024, 512), (512, 256)]
    params = []
    keys = jax.random.split(key, 2 * len(dims))
    for i, (fan_in, fan_out) in enumerate(dims):
        bound = 1.0 / (fan_in ** 0.5)
        w = jax.random.uniform(keys[2 * i], (fan_in, fan_out),
                               minval=-bound, maxval=bound, dtype=jnp.float32)
        b = jax.random.uniform(keys[2 * i + 1], (1, fan_out),
                               minval=-bound, maxval=bound, dtype=jnp.float32)
        params += [w, b]
    return tuple(params)


def t1_reference(x, params):
    """Pure-JAX f32 reference of the intended T1 forward (sanity check)."""
    (w1, b1, w2, b2, w3, b3, fw1, fb1, fw2, fb2) = params
    h = jax.nn.relu(x @ w1 + b1)
    h = jax.nn.relu(h @ w2 + b2)
    h = h @ w3 + b3
    h = jax.nn.relu(h)
    g = jnp.max(h, axis=-2)
    g = jax.nn.relu(g)
    g = jax.nn.relu(g @ fw1 + fb1[0])
    g = jax.nn.relu(g @ fw2 + fb2[0])
    return g


if __name__ == "__main__":
    key = jax.random.PRNGKey(0)
    k_param, k_x = jax.random.split(key)

    B, N = 2, 16                  # small point cloud: 2 clouds x 16 points x xyz
    params = init_params(k_param)
    x = jax.random.normal(k_x, (B, N, 3), dtype=jnp.float32)

    out = t1_forward(x, params)
    out = jax.block_until_ready(out)

    ref = t1_reference(x, params)
    assert out.shape == (B, 256), out.shape
    # Tolerance accounts for bf16 inputs/weights (f32 accumulation) on the
    # MXU matmuls; the reference uses full f32 precision.
    assert jnp.allclose(out, ref, atol=3e-2, rtol=3e-2), \
        float(jnp.max(jnp.abs(out - ref)))

    print("KERNEL_OK")
</pallas_src>

<mosaic_0001>
module attributes {stable_mosaic.version = 11 : i64} {
  func.func @kernel(%arg0: i32, %arg1: i32, %arg2: memref<2x16x3xf32, #tpu.memory_space<vmem>>, %arg3: memref<3x64xf32, #tpu.memory_space<vmem>>, %arg4: memref<1x64xf32, #tpu.memory_space<vmem>>, %arg5: memref<64x128xbf16, #tpu.memory_space<vmem>>, %arg6: memref<1x128xf32, #tpu.memory_space<vmem>>, %arg7: memref<128x1024xbf16, #tpu.memory_space<vmem>>, %arg8: memref<1x1024xf32, #tpu.memory_space<vmem>>, %arg9: memref<1024x512xbf16, #tpu.memory_space<vmem>>, %arg10: memref<1x512xf32, #tpu.memory_space<vmem>>, %arg11: memref<512x256xbf16, #tpu.memory_space<vmem>>, %arg12: memref<1x256xf32, #tpu.memory_space<vmem>>, %arg13: memref<2x256xf32, #tpu.memory_space<vmem>>, %arg14: memref<2x1024xf32, #tpu.memory_space<vmem>>) attributes {dimension_semantics = [#tpu.dimension_semantics<parallel>, #tpu.dimension_semantics<arbitrary>], iteration_bounds = array<i64: 1, 1>, scalar_prefetch = 0 : i64, scratch_operands = 1 : i64, tpu.core_type = #tpu.core_type<tc>, window_params = [{transform_indices = @transform_0, window_bounds = array<i64: 2, 16, 3>}, {pipeline_mode = #tpu.pipeline_mode<synchronous>, transform_indices = @transform_1, window_bounds = array<i64: 3, 64>}, {pipeline_mode = #tpu.pipeline_mode<synchronous>, transform_indices = @transform_2, window_bounds = array<i64: 1, 64>}, {pipeline_mode = #tpu.pipeline_mode<synchronous>, transform_indices = @transform_3, window_bounds = array<i64: 64, 128>}, {pipeline_mode = #tpu.pipeline_mode<synchronous>, transform_indices = @transform_4, window_bounds = array<i64: 1, 128>}, {pipeline_mode = #tpu.pipeline_mode<synchronous>, transform_indices = @transform_5, window_bounds = array<i64: 128, 1024>}, {pipeline_mode = #tpu.pipeline_mode<synchronous>, transform_indices = @transform_6, window_bounds = array<i64: 1, 1024>}, {pipeline_mode = #tpu.pipeline_mode<synchronous>, transform_indices = @transform_7, window_bounds = array<i64: 1024, 512>}, {pipeline_mode = #tpu.pipeline_mode<synchronous>, transform_indices = @transform_8, window_bounds = array<i64: 1, 512>}, {pipeline_mode = #tpu.pipeline_mode<synchronous>, transform_indices = @transform_9, window_bounds = array<i64: 512, 256>}, {pipeline_mode = #tpu.pipeline_mode<synchronous>, transform_indices = @transform_10, window_bounds = array<i64: 1, 256>}, {transform_indices = @transform_11, window_bounds = array<i64: 2, 256>}]} {
    %c0 = arith.constant 0 : index
    %c0_0 = arith.constant 0 : index
    %c0_1 = arith.constant 0 : index
    %0 = vector.load %arg2[%c0, %c0_0, %c0_1] : memref<2x16x3xf32, #tpu.memory_space<vmem>>, vector<2x16x3xf32>
    %1 = vector.shape_cast %0 : vector<2x16x3xf32> to vector<32x3xf32>
    %2 = vector.extract_strided_slice %1 {offsets = [0, 0], sizes = [32, 1], strides = [1, 1]} : vector<32x3xf32> to vector<32x1xf32>
    %c0_2 = arith.constant 0 : index
    %c0_3 = arith.constant 0 : index
    %3 = vector.load %arg3[%c0_2, %c0_3] : memref<3x64xf32, #tpu.memory_space<vmem>>, vector<1x64xf32>
    %4 = vector.broadcast %2 : vector<32x1xf32> to vector<32x64xf32>
    %5 = vector.broadcast %3 : vector<1x64xf32> to vector<32x64xf32>
    %6 = arith.mulf %4, %5 : vector<32x64xf32>
    %7 = vector.extract_strided_slice %1 {offsets = [0, 1], sizes = [32, 1], strides = [1, 1]} : vector<32x3xf32> to vector<32x1xf32>
    %c1 = arith.constant 1 : index
    %c0_4 = arith.constant 0 : index
    %8 = vector.load %arg3[%c1, %c0_4] : memref<3x64xf32, #tpu.memory_space<vmem>>, vector<1x64xf32>
    %9 = vector.broadcast %7 : vector<32x1xf32> to vector<32x64xf32>
    %10 = vector.broadcast %8 : vector<1x64xf32> to vector<32x64xf32>
    %11 = arith.mulf %9, %10 : vector<32x64xf32>
    %12 = arith.addf %6, %11 : vector<32x64xf32>
    %13 = vector.extract_strided_slice %1 {offsets = [0, 2], sizes = [32, 1], strides = [1, 1]} : vector<32x3xf32> to vector<32x1xf32>
    %c2 = arith.constant 2 : index
    %c0_5 = arith.constant 0 : index
    %14 = vector.load %arg3[%c2, %c0_5] : memref<3x64xf32, #tpu.memory_space<vmem>>, vector<1x64xf32>
    %15 = vector.broadcast %13 : vector<32x1xf32> to vector<32x64xf32>
    %16 = vector.broadcast %14 : vector<1x64xf32> to vector<32x64xf32>
    %17 = arith.mulf %15, %16 : vector<32x64xf32>
    %18 = arith.addf %12, %17 : vector<32x64xf32>
    %c0_6 = arith.constant 0 : index
    %c0_7 = arith.constant 0 : index
    %19 = vector.load %arg4[%c0_6, %c0_7] : memref<1x64xf32, #tpu.memory_space<vmem>>, vector<1x64xf32>
    %20 = vector.broadcast %19 : vector<1x64xf32> to vector<32x64xf32>
    %21 = arith.addf %18, %20 : vector<32x64xf32>
    %cst = arith.constant 0.000000e+00 : f32
    %22 = vector.broadcast %cst : f32 to vector<32x64xf32>
    %23 = arith.maximumf %21, %22 : vector<32x64xf32>
    %24 = arith.truncf %23 : vector<32x64xf32> to vector<32x64xbf16>
    %c0_8 = arith.constant 0 : index
    %c0_9 = arith.constant 0 : index
    %25 = vector.load %arg5[%c0_8, %c0_9] : memref<64x128xbf16, #tpu.memory_space<vmem>>, vector<64x128xbf16>
    %cst_10 = arith.constant dense<0.000000e+00> : vector<32x128xf32>
    %26 = tpu.matmul %24, %25, %cst_10 {dimension_numbers = #tpu.dot_dimension_numbers<[1], [0], [0], [1], [0, 0, 1, 1], [], []>} : vector<32x64xbf16>, vector<64x128xbf16>, vector<32x128xf32> -> vector<32x128xf32>
    %c0_11 = arith.constant 0 : index
    %c0_12 = arith.constant 0 : index
    %27 = vector.load %arg6[%c0_11, %c0_12] : memref<1x128xf32, #tpu.memory_space<vmem>>, vector<1x128xf32>
    %28 = vector.broadcast %27 : vector<1x128xf32> to vector<32x128xf32>
    %29 = arith.addf %26, %28 : vector<32x128xf32>
    %cst_13 = arith.constant 0.000000e+00 : f32
    %30 = vector.broadcast %cst_13 : f32 to vector<32x128xf32>
    %31 = arith.maximumf %29, %30 : vector<32x128xf32>
    %32 = arith.truncf %31 : vector<32x128xf32> to vector<32x128xbf16>
    %c0_14 = arith.constant 0 : index
    %c0_15 = arith.constant 0 : index
    %33 = vector.load %arg7[%c0_14, %c0_15] : memref<128x1024xbf16, #tpu.memory_space<vmem>>, vector<128x1024xbf16>
    %cst_16 = arith.constant dense<0.000000e+00> : vector<32x1024xf32>
    %34 = tpu.matmul %32, %33, %cst_16 {dimension_numbers = #tpu.dot_dimension_numbers<[1], [0], [0], [1], [0, 0, 1, 1], [], []>} : vector<32x128xbf16>, vector<128x1024xbf16>, vector<32x1024xf32> -> vector<32x1024xf32>
    %35 = vector.shape_cast %34 : vector<32x1024xf32> to vector<2x16x1024xf32>
    %cst_17 = arith.constant dense<0xFF800000> : vector<2x1024xf32>
    %36 = vector.multi_reduction <maximumf>, %35, %cst_17 [1] : vector<2x16x1024xf32> to vector<2x1024xf32>
    %c0_i32 = arith.constant 0 : i32
    %37 = arith.cmpi eq, %arg1, %c0_i32 : i32
    %38 = arith.extui %37 : i1 to i32
    %c0_i32_18 = arith.constant 0 : i32
    %39 = arith.cmpi ne, %38, %c0_i32_18 : i32
    scf.if %39 {
      %c0_23 = arith.constant 0 : index
      %c0_24 = arith.constant 0 : index
      %46 = vector.load %arg14[%c0_23, %c0_24] : memref<2x1024xf32, #tpu.memory_space<vmem>>, vector<2x1024xf32>
      tpu.vector_store %arg14[%c0_23, %c0_24], %36 {strides = array<i32>} : memref<2x1024xf32, #tpu.memory_space<vmem>>, vector<2x1024xf32>,
    } else {
    }
    %c0_i32_19 = arith.constant 0 : i32
    %40 = arith.cmpi sgt, %arg1, %c0_i32_19 : i32
    %41 = arith.extui %40 : i1 to i32
    %c0_i32_20 = arith.constant 0 : i32
    %42 = arith.cmpi ne, %41, %c0_i32_20 : i32
    scf.if %42 {
      %c0_23 = arith.constant 0 : index
      %c0_24 = arith.constant 0 : index
      %46 = vector.load %arg14[%c0_23, %c0_24] : memref<2x1024xf32, #tpu.memory_space<vmem>>, vector<2x1024xf32>
      %47 = arith.maximumf %46, %36 : vector<2x1024xf32>
      %c0_25 = arith.constant 0 : index
      %c0_26 = arith.constant 0 : index
      %48 = vector.load %arg14[%c0_25, %c0_26] : memref<2x1024xf32, #tpu.memory_space<vmem>>, vector<2x1024xf32>
      tpu.vector_store %arg14[%c0_25, %c0_26], %47 {strides = array<i32>} : memref<2x1024xf32, #tpu.memory_space<vmem>>, vector<2x1024xf32>,
    } else {
    }
    %c0_i32_21 = arith.constant 0 : i32
    %43 = arith.cmpi eq, %arg1, %c0_i32_21 : i32
    %44 = arith.extui %43 : i1 to i32
    %c0_i32_22 = arith.constant 0 : i32
    %45 = arith.cmpi ne, %44, %c0_i32_22 : i32
    scf.if %45 {
      %c0_23 = arith.constant 0 : index
      %c0_24 = arith.constant 0 : index
      %46 = vector.load %arg14[%c0_23, %c0_24] : memref<2x1024xf32, #tpu.memory_space<vmem>>, vector<2x1024xf32>
      %c0_25 = arith.constant 0 : index
      %c0_26 = arith.constant 0 : index
      %47 = vector.load %arg8[%c0_25, %c0_26] : memref<1x1024xf32, #tpu.memory_space<vmem>>, vector<1x1024xf32>
      %48 = vector.broadcast %47 : vector<1x1024xf32> to vector<2x1024xf32>
      %49 = arith.addf %46, %48 : vector<2x1024xf32>
      %cst_27 = arith.constant 0.000000e+00 : f32
      %50 = vector.broadcast %cst_27 : f32 to vector<2x1024xf32>
      %51 = arith.maximumf %49, %50 : vector<2x1024xf32>
      %52 = arith.truncf %51 : vector<2x1024xf32> to vector<2x1024xbf16>
      %c0_28 = arith.constant 0 : index
      %c0_29 = arith.constant 0 : index
      %53 = vector.load %arg9[%c0_28, %c0_29] : memref<1024x512xbf16, #tpu.memory_space<vmem>>, vector<1024x512xbf16>
      %cst_30 = arith.constant dense<0.000000e+00> : vector<2x512xf32>
      %54 = tpu.matmul %52, %53, %cst_30 {dimension_numbers = #tpu.dot_dimension_numbers<[1], [0], [0], [1], [0, 0, 1, 1], [], []>} : vector<2x1024xbf16>, vector<1024x512xbf16>, vector<2x512xf32> -> vector<2x512xf32>
      %c0_31 = arith.constant 0 : index
      %c0_32 = arith.constant 0 : index
      %55 = vector.load %arg10[%c0_31, %c0_32] : memref<1x512xf32, #tpu.memory_space<vmem>>, vector<1x512xf32>
      %56 = vector.broadcast %55 : vector<1x512xf32> to vector<2x512xf32>
      %57 = arith.addf %54, %56 : vector<2x512xf32>
      %cst_33 = arith.constant 0.000000e+00 : f32
      %58 = vector.broadcast %cst_33 : f32 to vector<2x512xf32>
      %59 = arith.maximumf %57, %58 : vector<2x512xf32>
      %60 = arith.truncf %59 : vector<2x512xf32> to vector<2x512xbf16>
      %c0_34 = arith.constant 0 : index
      %c0_35 = arith.constant 0 : index
      %61 = vector.load %arg11[%c0_34, %c0_35] : memref<512x256xbf16, #tpu.memory_space<vmem>>, vector<512x256xbf16>
      %cst_36 = arith.constant dense<0.000000e+00> : vector<2x256xf32>
      %62 = tpu.matmul %60, %61, %cst_36 {dimension_numbers = #tpu.dot_dimension_numbers<[1], [0], [0], [1], [0, 0, 1, 1], [], []>} : vector<2x512xbf16>, vector<512x256xbf16>, vector<2x256xf32> -> vector<2x256xf32>
      %c0_37 = arith.constant 0 : index
      %c0_38 = arith.constant 0 : index
      %63 = vector.load %arg12[%c0_37, %c0_38] : memref<1x256xf32, #tpu.memory_space<vmem>>, vector<1x256xf32>
      %64 = vector.broadcast %63 : vector<1x256xf32> to vector<2x256xf32>
      %65 = arith.addf %62, %64 : vector<2x256xf32>
      %cst_39 = arith.constant 0.000000e+00 : f32
      %66 = vector.broadcast %cst_39 : f32 to vector<2x256xf32>
      %67 = arith.maximumf %65, %66 : vector<2x256xf32>
      %c0_40 = arith.constant 0 : index
      %c0_41 = arith.constant 0 : index
      %68 = vector.load %arg13[%c0_40, %c0_41] : memref<2x256xf32, #tpu.memory_space<vmem>>, vector<2x256xf32>
      tpu.vector_store %arg13[%c0_40, %c0_41], %67 {strides = array<i32>} : memref<2x256xf32, #tpu.memory_space<vmem>>, vector<2x256xf32>,
    } else {
    }
    return
  }
  func.func @transform_0(%arg0: i32, %arg1: i32) -> (i32, i32, i32) {
    %c0_i32 = arith.constant 0 : i32
    %c0_i32_0 = arith.constant 0 : i32
    return %arg0, %arg1, %c0_i32 : i32, i32, i32
  }
  func.func @transform_1(%arg0: i32, %arg1: i32) -> (i32, i32) {
    %c0_i32 = arith.constant 0 : i32
    %c0_i32_0 = arith.constant 0 : i32
    %c0_i32_1 = arith.constant 0 : i32
    return %c0_i32, %c0_i32_0 : i32, i32
  }
  func.func @transform_2(%arg0: i32, %arg1: i32) -> (i32, i32) {
    %c0_i32 = arith.constant 0 : i32
    %c0_i32_0 = arith.constant 0 : i32
    %c0_i32_1 = arith.constant 0 : i32
    return %c0_i32, %c0_i32_0 : i32, i32
  }
  func.func @transform_3(%arg0: i32, %arg1: i32) -> (i32, i32) {
    %c0_i32 = arith.constant 0 : i32
    %c0_i32_0 = arith.constant 0 : i32
    %c0_i32_1 = arith.constant 0 : i32
    return %c0_i32, %c0_i32_0 : i32, i32
  }
  func.func @transform_4(%arg0: i32, %arg1: i32) -> (i32, i32) {
    %c0_i32 = arith.constant 0 : i32
    %c0_i32_0 = arith.constant 0 : i32
    %c0_i32_1 = arith.constant 0 : i32
    return %c0_i32, %c0_i32_0 : i32, i32
  }
  func.func @transform_5(%arg0: i32, %arg1: i32) -> (i32, i32) {
    %c0_i32 = arith.constant 0 : i32
    %c0_i32_0 = arith.constant 0 : i32
    %c0_i32_1 = arith.constant 0 : i32
    return %c0_i32, %c0_i32_0 : i32, i32
  }
  func.func @transform_6(%arg0: i32, %arg1: i32) -> (i32, i32) {
    %c0_i32 = arith.constant 0 : i32
    %c0_i32_0 = arith.constant 0 : i32
    %c0_i32_1 = arith.constant 0 : i32
    return %c0_i32, %c0_i32_0 : i32, i32
  }
  func.func @transform_7(%arg0: i32, %arg1: i32) -> (i32, i32) {
    %c0_i32 = arith.constant 0 : i32
    %c0_i32_0 = arith.constant 0 : i32
    %c0_i32_1 = arith.constant 0 : i32
    return %c0_i32, %c0_i32_0 : i32, i32
  }
  func.func @transform_8(%arg0: i32, %arg1: i32) -> (i32, i32) {
    %c0_i32 = arith.constant 0 : i32
    %c0_i32_0 = arith.constant 0 : i32
    %c0_i32_1 = arith.constant 0 : i32
    return %c0_i32, %c0_i32_0 : i32, i32
  }
  func.func @transform_9(%arg0: i32, %arg1: i32) -> (i32, i32) {
    %c0_i32 = arith.constant 0 : i32
    %c0_i32_0 = arith.constant 0 : i32
    %c0_i32_1 = arith.constant 0 : i32
    return %c0_i32, %c0_i32_0 : i32, i32
  }
  func.func @transform_10(%arg0: i32, %arg1: i32) -> (i32, i32) {
    %c0_i32 = arith.constant 0 : i32
    %c0_i32_0 = arith.constant 0 : i32
    %c0_i32_1 = arith.constant 0 : i32
    return %c0_i32, %c0_i32_0 : i32, i32
  }
  func.func @transform_11(%arg0: i32, %arg1: i32) -> (i32, i32) {
    %c0_i32 = arith.constant 0 : i32
    %c0_i32_0 = arith.constant 0 : i32
    return %arg0, %c0_i32 : i32, i32
  }
}

</mosaic_0001>

<llo_original>
// kernel: t1_forward.1
$region0: #{t1_forward.1}
  #allocation0 [shape = 'u32[]', space=smem, size = 0x4, offset = 0x4, fixed_abs, tag = 'smem constant byte address 0x4 - core index']
  #allocation1 [shape = 'u32[144,128]{1,0:T(1,128)}', space=vmem, size = 0x12000, scoped, tag = 'internal scratch']
  #allocation2 [shape = 'f32[2,1024]{1,0:T(2,128)}', space=vmem, size = 0x2000, scoped, tag = 'scratch operand']
  %s0 = inlined_call_operand.vmem [shape: f32[2,16,3], index: 0, kind: input, shape index: {}]
  %s1 = inlined_call_operand.vmem [shape: f32[3,64], index: 1, kind: input, shape index: {}]
  %s2 = inlined_call_operand.vmem [shape: f32[1,64], index: 2, kind: input, shape index: {}]
  %s3 = inlined_call_operand.vmem [shape: bf16[64,128], index: 3, kind: input, shape index: {}]
  %s4 = inlined_call_operand.vmem [shape: f32[1,128], index: 4, kind: input, shape index: {}]
  %s5 = inlined_call_operand.vmem [shape: bf16[128,1024], index: 5, kind: input, shape index: {}]
  %s6 = inlined_call_operand.vmem [shape: f32[1,1024], index: 6, kind: input, shape index: {}]
  %s7 = inlined_call_operand.vmem [shape: bf16[1024,512], index: 7, kind: input, shape index: {}]
  %s8 = inlined_call_operand.vmem [shape: f32[1,512], index: 8, kind: input, shape index: {}]
  %s9 = inlined_call_operand.vmem [shape: bf16[512,256], index: 9, kind: input, shape index: {}]
  %s10 = inlined_call_operand.vmem [shape: f32[1,256], index: 10, kind: input, shape index: {}]
  %s11 = inlined_call_operand.hbm [shape: f32[2,256], index: 11, kind: output, shape index: {}]
  %s12 = sld [smem:[#allocation0]]
  $region66: #{t1_forward.1} parent=0
    _
  %s14 = ssub.s32 1, %s12
  %s15 = scalar_select 0, %s14, %s12
  $region1: #{t1_forward.1} parent=0
    #allocation3 [shape = 'u8[2048]{0}', space=vmem, size = 0x800, scoped, tag = 'output window, operand 0, single buffered']
    #allocation4 [shape = 's32[1]{0}', space=sflag, size = 0x4, scoped, tag = 'scoped memory for t1_forward.1']
    %16 = vsyncpa [#allocation4], 0
    // Predicated region
    $region2: #{t1_forward.1} parent=1 // pred_check
      _
    $region3: #{t1_forward.1} parent=1 // pred_check_branch
      %18 = sbr.rel (0) target = $region5
    $region4: #{t1_forward.1} parent=1 // pred_region
      _
    $region5: #{t1_forward.1} parent=1 // pred_fallthru
      _
    // Predicated region
    $region6: #{t1_forward.1} parent=1 // pred_check
      _
    $region7: #{t1_forward.1} parent=1 // pred_check_branch
      %20 = sbr.rel (0) target = $region9
    $region8: #{t1_forward.1} parent=1 // pred_region
      _
    $region9: #{t1_forward.1} parent=1 // pred_fallthru
      _
    // Predicated region
    $region10: #{t1_forward.1} parent=1 // pred_check
      _
    $region11: #{t1_forward.1} parent=1 // pred_check_branch
      %22 = sbr.rel (0) target = $region13
    $region12: #{t1_forward.1} parent=1 // pred_region
      _
    $region13: #{t1_forward.1} parent=1 // pred_fallthru
      _
    // Predicated region
    $region14: #{t1_forward.1} parent=1 // pred_check
      _
    $region15: #{t1_forward.1} parent=1 // pred_check_branch
      %24 = sbr.rel (0) target = $region17
    $region16: #{t1_forward.1} parent=1 // pred_region
      _
    $region17: #{t1_forward.1} parent=1 // pred_fallthru
      _
    // Predicated region
    $region18: #{t1_forward.1} parent=1 // pred_check
      _
    $region19: #{t1_forward.1} parent=1 // pred_check_branch
      %26 = sbr.rel (0) target = $region21
    $region20: #{t1_forward.1} parent=1 // pred_region
      _
    $region21: #{t1_forward.1} parent=1 // pred_fallthru
      _
    // Predicated region
    $region22: #{t1_forward.1} parent=1 // pred_check
      _
    $region23: #{t1_forward.1} parent=1 // pred_check_branch
      %28 = sbr.rel (0) target = $region25
    $region24: #{t1_forward.1} parent=1 // pred_region
      _
    $region25: #{t1_forward.1} parent=1 // pred_fallthru
      _
    // Predicated region
    $region26: #{t1_forward.1} parent=1 // pred_check
      _
    $region27: #{t1_forward.1} parent=1 // pred_check_branch
      %30 = sbr.rel (0) target = $region29
    $region28: #{t1_forward.1} parent=1 // pred_region
      _
    $region29: #{t1_forward.1} parent=1 // pred_fallthru
      _
    // Predicated region
    $region30: #{t1_forward.1} parent=1 // pred_check
      _
    $region31: #{t1_forward.1} parent=1 // pred_check_branch
      %32 = sbr.rel (0) target = $region33
    $region32: #{t1_forward.1} parent=1 // pred_region
      _
    $region33: #{t1_forward.1} parent=1 // pred_fallthru
      _
    // Predicated region
    $region34: #{t1_forward.1} parent=1 // pred_check
      _
    $region35: #{t1_forward.1} parent=1 // pred_check_branch
      %34 = sbr.rel (0) target = $region37
    $region36: #{t1_forward.1} parent=1 // pred_region
      _
    $region37: #{t1_forward.1} parent=1 // pred_fallthru
      _
    // Predicated region
    $region38: #{t1_forward.1} parent=1 // pred_check
      _
    $region39: #{t1_forward.1} parent=1 // pred_check_branch
      %36 = sbr.rel (0) target = $region41
    $region40: #{t1_forward.1} parent=1 // pred_region
      _
    $region41: #{t1_forward.1} parent=1 // pred_fallthru
      _
    // Predicated region
    $region42: #{t1_forward.1} parent=1 // pred_check
      _
    $region43: #{t1_forward.1} parent=1 // pred_check_branch
      %38 = sbr.rel (0) target = $region45
    $region44: #{t1_forward.1} parent=1 // pred_region
      _
    $region45: #{t1_forward.1} parent=1 // pred_fallthru
      _
    %v40 = vld [vmem:[%s0] sm:$0xff]
    %v41 = vld [vmem:[%s0 + $0x8] sm:$0xff]
    %v42 = vld [vmem:[%s0 + $0x10] sm:$0xff]
    %v43 = vld [vmem:[%s0 + $0x18] sm:$0xff]
    %v44 = vld [vmem:[%s1] sm:$0x1]
    %46 = vset.pattern.permute.xlu0 0
    %47 = vperm.xlu0 %46, %v40
    %v48 = vpop.permute.xlu0 %47
    %51 = vset.pattern.permute.xlu0 0
    %52 = vperm.xlu0 %51, %v41
    %v53 = vpop.permute.xlu0 %52
    %56 = vset.pattern.permute.xlu0 0
    %57 = vperm.xlu0 %56, %v42
    %v58 = vpop.permute.xlu0 %57
    %61 = vset.pattern.permute.xlu0 0
    %62 = vperm.xlu0 %61, %v43
    %v63 = vpop.permute.xlu0 %62
    %v65 = vlaneseq
    %v66 = vshrl.u32 %v65, 7
    %v67 = vsub.s32 0, %v66
    %v68 = vrot.slane %v44, %v67
    %v69 = vmul.f32 %v48, %v68
    %v70 = vmul.f32 %v53, %v68
    %v71 = vmul.f32 %v58, %v68
    %v72 = vmul.f32 %v63, %v68
    %v73 = vld [vmem:[%s1 + $0x1] sm:$0x1]
    %74 = vset.pattern.permute.xlu0 1
    %75 = vperm.xlu0 %74, %v40
    %v76 = vpop.permute.xlu0 %75
    %78 = vset.pattern.permute.xlu0 1
    %79 = vperm.xlu0 %78, %v41
    %v80 = vpop.permute.xlu0 %79
    %82 = vset.pattern.permute.xlu0 1
    %83 = vperm.xlu0 %82, %v42
    %v84 = vpop.permute.xlu0 %83
    %86 = vset.pattern.permute.xlu0 1
    %87 = vperm.xlu0 %86, %v43
    %v88 = vpop.permute.xlu0 %87
    %v90 = vlaneseq
    %v91 = vshrl.u32 %v90, 7
    %v92 = vsub.s32 0, %v91
    %v93 = vrot.slane %v73, %v92
    %v94 = vmul.f32 %v76, %v93
    %v95 = vmul.f32 %v80, %v93
    %v96 = vmul.f32 %v84, %v93
    %v97 = vmul.f32 %v88, %v93
    %v98 = vadd.f32 %v69, %v94
    %v99 = vadd.f32 %v70, %v95
    %v100 = vadd.f32 %v71, %v96
    %v101 = vadd.f32 %v72, %v97
    %v102 = vld [vmem:[%s1 + $0x2] sm:$0x1]
    %103 = vset.pattern.permute.xlu0 2
    %104 = vperm.xlu0 %103, %v40
    %v105 = vpop.permute.xlu0 %104
    %107 = vset.pattern.permute.xlu0 2
    %108 = vperm.xlu0 %107, %v41
    %v109 = vpop.permute.xlu0 %108
    %111 = vset.pattern.permute.xlu0 2
    %112 = vperm.xlu0 %111, %v42
    %v113 = vpop.permute.xlu0 %112
    %115 = vset.pattern.permute.xlu0 2
    %116 = vperm.xlu0 %115, %v43
    %v117 = vpop.permute.xlu0 %116
    %v119 = vlaneseq
    %v120 = vshrl.u32 %v119, 7
    %v121 = vsub.s32 0, %v120
    %v122 = vrot.slane %v102, %v121
    %v123 = vmul.f32 %v105, %v122
    %v124 = vmul.f32 %v109, %v122
    %v125 = vmul.f32 %v113, %v122
    %v126 = vmul.f32 %v117, %v122
    %v127 = vadd.f32 %v98, %v123
    %v128 = vadd.f32 %v99, %v124
    %v129 = vadd.f32 %v100, %v125
    %v130 = vadd.f32 %v101, %v126
    %v131 = vld [vmem:[%s2] sm:$0x1]
    %v133 = vlaneseq
    %v134 = vshrl.u32 %v133, 7
    %v135 = vsub.s32 0, %v134
    %v136 = vrot.slane %v131, %v135
    %v138 = vadd.f32 %v127, %v136
    %v139 = vadd.f32 %v128, %v136
    %v140 = vadd.f32 %v129, %v136
    %v141 = vadd.f32 %v130, %v136
    %v142 = vmax.f32 %v138, 0.0
    %v143 = vmax.f32 %v139, 0.0
    %v144 = vmax.f32 %v140, 0.0
    %v145 = vmax.f32 %v141, 0.0
    %v146 = vpack.c.bf16 %v143, %v142
    %v147 = vpack.c.bf16 %v145, %v144
    %v148 = vld [vmem:[%s3] sm:$0xf]
    %v149 = vld [vmem:[%s3 + $0x4] sm:$0xf]
    %v150 = vld [vmem:[%s3 + $0x8] sm:$0xf]
    %v151 = vld [vmem:[%s3 + $0xc] sm:$0xf]
    %v152 = vld [vmem:[%s3 + $0x10] sm:$0xf]
    %v153 = vld [vmem:[%s3 + $0x14] sm:$0xf]
    %v154 = vld [vmem:[%s3 + $0x18] sm:$0xf]
    %v155 = vld [vmem:[%s3 + $0x1c] sm:$0xf]
    %v156 = vld [vmem:[%s4] sm:$0x1]
    %v158 = vlaneseq
    %v159 = vshrl.u32 %v158, 7
    %v160 = vsub.s32 0, %v159
    %v161 = vrot.slane %v156, %v160
    %v171 = vunpack.c.l.b16 %v148
    %v172 = vunpack.c.l.b16 %v149
    %v173 = vunpack.c.l.b16 %v150
    %v174 = vunpack.c.l.b16 %v151
    %v175 = vunpack.c.l.b16 %v152
    %v176 = vunpack.c.l.b16 %v153
    %v177 = vunpack.c.l.b16 %v154
    %v178 = vunpack.c.l.b16 %v155
    %v179 = vpack.c.b16 %v172, %v171
    %v180 = vpack.c.b16 %v174, %v173
    %v181 = vpack.c.b16 %v176, %v175
    %v182 = vpack.c.b16 %v178, %v177
    %vm187 = vcmask 523264
    %v189 = vsel %vm187, %v146, 0
    %v192 = vsel %vm187, %v147, 0
    %194 = vmatprep.subr.bf16.mxu0 0
    %195 = vmatpush1.bf16.msra.mxu0 %v179
    %196 = vmatprep.subr.bf16.mxu0 0
    %197 = vmatpush1.bf16.msra.mxu0 %v180
    %198 = vmatprep.subr.bf16.mxu0 0
    %199 = vmatpush1.bf16.msra.mxu0 %v181
    %200 = vmatprep.subr.bf16.mxu0 0
    %201 = vmatpush1.bf16.msra.mxu0 %v182
    %202 = vmatprep.subr.bf16.mxu0 0
    %203 = vmatpush1.bf16.msra.mxu0 0
    %204 = vmatprep.subr.bf16.mxu0 0
    %205 = vmatpush1.bf16.msra.mxu0 0
    %206 = vmatprep.subr.bf16.mxu0 0
    %207 = vmatpush1.bf16.msra.mxu0 0
    %208 = vmatprep.subr.bf16.mxu0 0
    %209 = vmatpush1.bf16.msra.mxu0 0
    %210 = vmatprep.subr.bf16.mxu0 0
    %211 = vmatpush1.bf16.msra.mxu0 0
    %212 = vmatprep.subr.bf16.mxu0 0
    %213 = vmatpush1.bf16.msra.mxu0 0
    %214 = vmatprep.subr.bf16.mxu0 0
    %215 = vmatpush1.bf16.msra.mxu0 0
    %216 = vmatprep.subr.bf16.mxu0 0
    %217 = vmatpush1.bf16.msra.mxu0 0
    %218 = vmatprep.subr.bf16.mxu0 0
    %219 = vmatpush1.bf16.msra.mxu0 0
    %220 = vmatprep.subr.bf16.mxu0 0
    %221 = vmatpush1.bf16.msra.mxu0 0
    %222 = vmatprep.subr.bf16.mxu0 0
    %223 = vmatpush1.bf16.msra.mxu0 0
    %224 = vmatprep.subr.bf16.mxu0 0
    %225 = vmatpush1.bf16.msra.mxu0 0
    %226 = vmatprep.mubr.bf16.mxu0 0
    %227 = vmatmul.mubr.bf16.gmra.mrb[0].mxu0 %v189
    %v228 = vpop.f32.mrb[0].mxu0
    %v229 = vadd.f32 %v161, %v228
    %v230 = vpop.f32.mrb[0].mxu0
    %v231 = vpop.f32.mrb[0].mxu0
    %v232 = vadd.f32 %v161, %v231
    %v233 = vpop.f32.mrb[0].mxu0
    %234 = vmatprep.mubr.bf16.mxu0 0
    %235 = vmatmul.mubr.bf16.gmra.mrb[0].mxu0 %v192
    %v236 = vpop.f32.mrb[0].mxu0
    %v237 = vadd.f32 %v161, %v236
    %v238 = vpop.f32.mrb[0].mxu0
    %v239 = vpop.f32.mrb[0].mxu0
    %v240 = vadd.f32 %v161, %v239
    %v241 = vpop.f32.mrb[0].mxu0
    %242 = vdwg.mxu0
    %v243 = vmax.f32 %v229, 0.0
    %v244 = vmax.f32 %v232, 0.0
    %v245 = vmax.f32 %v237, 0.0
    %v246 = vmax.f32 %v240, 0.0
    %v247 = vpack.c.bf16 %v244, %v243
    %v248 = vpack.c.bf16 %v246, %v245
    %v249 = vld [vmem:[%s5] sm:$0xff]
    %v250 = vld [vmem:[%s5 + $0x8] sm:$0xff]
    %v251 = vld [vmem:[%s5 + $0x10] sm:$0xff]
    %v252 = vld [vmem:[%s5 + $0x18] sm:$0xff]
    %v253 = vld [vmem:[%s5 + $0x20] sm:$0xff]
    %v254 = vld [vmem:[%s5 + $0x28] sm:$0xff]
    %v255 = vld [vmem:[%s5 + $0x30] sm:$0xff]
    %v256 = vld [vmem:[%s5 + $0x38] sm:$0xff]
    %v257 = vld [vmem:[%s5 + $0x40] sm:$0xff]
    %v258 = vld [vmem:[%s5 + $0x48] sm:$0xff]
    %v259 = vld [vmem:[%s5 + $0x50] sm:$0xff]
    %v260 = vld [vmem:[%s5 + $0x58] sm:$0xff]
    %v261 = vld [vmem:[%s5 + $0x60] sm:$0xff]
    %v262 = vld [vmem:[%s5 + $0x68] sm:$0xff]
    %v263 = vld [vmem:[%s5 + $0x70] sm:$0xff]
    %v264 = vld [vmem:[%s5 + $0x78] sm:$0xff]
    %v265 = vld [vmem:[%s5 + $0x80] sm:$0xff]
    %v266 = vld [vmem:[%s5 + $0x88] sm:$0xff]
    %v267 = vld [vmem:[%s5 + $0x90] sm:$0xff]
    %v268 = vld [vmem:[%s5 + $0x98] sm:$0xff]
    %v269 = vld [vmem:[%s5 + $0xa0] sm:$0xff]
    %v270 = vld [vmem:[%s5 + $0xa8] sm:$0xff]
    %v271 = vld [vmem:[%s5 + $0xb0] sm:$0xff]
    %v272 = vld [vmem:[%s5 + $0xb8] sm:$0xff]
    %v273 = vld [vmem:[%s5 + $0xc0] sm:$0xff]
    %v274 = vld [vmem:[%s5 + $0xc8] sm:$0xff]
    %v275 = vld [vmem:[%s5 + $0xd0] sm:$0xff]
    %v276 = vld [vmem:[%s5 + $0xd8] sm:$0xff]
    %v277 = vld [vmem:[%s5 + $0xe0] sm:$0xff]
    %v278 = vld [vmem:[%s5 + $0xe8] sm:$0xff]
    %v279 = vld [vmem:[%s5 + $0xf0] sm:$0xff]
    %v280 = vld [vmem:[%s5 + $0xf8] sm:$0xff]
    %v281 = vld [vmem:[%s5 + $0x100] sm:$0xff]
    %v282 = vld [vmem:[%s5 + $0x108] sm:$0xff]
    %v283 = vld [vmem:[%s5 + $0x110] sm:$0xff]
    %v284 = vld [vmem:[%s5 + $0x118] sm:$0xff]
    %v285 = vld [vmem:[%s5 + $0x120] sm:$0xff]
    %v286 = vld [vmem:[%s5 + $0x128] sm:$0xff]
    %v287 = vld [vmem:[%s5 + $0x130] sm:$0xff]
    %v288 = vld [vmem:[%s5 + $0x138] sm:$0xff]
    %v289 = vld [vmem:[%s5 + $0x140] sm:$0xff]
    %v290 = vld [vmem:[%s5 + $0x148] sm:$0xff]
    %v291 = vld [vmem:[%s5 + $0x150] sm:$0xff]
    %v292 = vld [vmem:[%s5 + $0x158] sm:$0xff]
    %v293 = vld [vmem:[%s5 + $0x160] sm:$0xff]
    %v294 = vld [vmem:[%s5 + $0x168] sm:$0xff]
    %v295 = vld [vmem:[%s5 + $0x170] sm:$0xff]
    %v296 = vld [vmem:[%s5 + $0x178] sm:$0xff]
    %v297 = vld [vmem:[%s5 + $0x180] sm:$0xff]
    %v298 = vld [vmem:[%s5 + $0x188] sm:$0xff]
    %v299 = vld [vmem:[%s5 + $0x190] sm:$0xff]
    %v300 = vld [vmem:[%s5 + $0x198] sm:$0xff]
    %v301 = vld [vmem:[%s5 + $0x1a0] sm:$0xff]
    %v302 = vld [vmem:[%s5 + $0x1a8] sm:$0xff]
    %v303 = vld [vmem:[%s5 + $0x1b0] sm:$0xff]
    %v304 = vld [vmem:[%s5 + $0x1b8] sm:$0xff]
    %v305 = vld [vmem:[%s5 + $0x1c0] sm:$0xff]
    %v306 = vld [vmem:[%s5 + $0x1c8] sm:$0xff]
    %v307 = vld [vmem:[%s5 + $0x1d0] sm:$0xff]
    %v308 = vld [vmem:[%s5 + $0x1d8] sm:$0xff]
    %v309 = vld [vmem:[%s5 + $0x1e0] sm:$0xff]
    %v310 = vld [vmem:[%s5 + $0x1e8] sm:$0xff]
    %v311 = vld [vmem:[%s5 + $0x1f0] sm:$0xff]
    %v312 = vld [vmem:[%s5 + $0x1f8] sm:$0xff]
    %v377 = vunpack.c.l.b16 %v249
    %v378 = vunpack.c.h.b16 %v249
    %v379 = vunpack.c.l.b16 %v250
    %v380 = vunpack.c.h.b16 %v250
    %v381 = vunpack.c.l.b16 %v251
    %v382 = vunpack.c.h.b16 %v251
    %v383 = vunpack.c.l.b16 %v252
    %v384 = vunpack.c.h.b16 %v252
    %v385 = vunpack.c.l.b16 %v253
    %v386 = vunpack.c.h.b16 %v253
    %v387 = vunpack.c.l.b16 %v254
    %v388 = vunpack.c.h.b16 %v254
    %v389 = vunpack.c.l.b16 %v255
    %v390 = vunpack.c.h.b16 %v255
    %v391 = vunpack.c.l.b16 %v256
    %v392 = vunpack.c.h.b16 %v256
    %v393 = vunpack.c.l.b16 %v257
    %v394 = vunpack.c.h.b16 %v257
    %v395 = vunpack.c.l.b16 %v258
    %v396 = vunpack.c.h.b16 %v258
    %v397 = vunpack.c.l.b16 %v259
    %v398 = vunpack.c.h.b16 %v259
    %v399 = vunpack.c.l.b16 %v260
    %v400 = vunpack.c.h.b16 %v260
    %v401 = vunpack.c.l.b16 %v261
    %v402 = vunpack.c.h.b16 %v261
    %v403 = vunpack.c.l.b16 %v262
    %v404 = vunpack.c.h.b16 %v262
    %v405 = vunpack.c.l.b16 %v263
    %v406 = vunpack.c.h.b16 %v263
    %v407 = vunpack.c.l.b16 %v264
    %v408 = vunpack.c.h.b16 %v264
    %v409 = vunpack.c.l.b16 %v265
    %v410 = vunpack.c.h.b16 %v265
    %v411 = vunpack.c.l.b16 %v266
    %v412 = vunpack.c.h.b16 %v266
    %v413 = vunpack.c.l.b16 %v267
    %v414 = vunpack.c.h.b16 %v267
    %v415 = vunpack.c.l.b16 %v268
    %v416 = vunpack.c.h.b16 %v268
    %v417 = vunpack.c.l.b16 %v269
    %v418 = vunpack.c.h.b16 %v269
    %v419 = vunpack.c.l.b16 %v270
    %v420 = vunpack.c.h.b16 %v270
    %v421 = vunpack.c.l.b16 %v271
    %v422 = vunpack.c.h.b16 %v271
    %v423 = vunpack.c.l.b16 %v272
    %v424 = vunpack.c.h.b16 %v272
    %v425 = vunpack.c.l.b16 %v273
    %v426 = vunpack.c.h.b16 %v273
    %v427 = vunpack.c.l.b16 %v274
    %v428 = vunpack.c.h.b16 %v274
    %v429 = vunpack.c.l.b16 %v275
    %v430 = vunpack.c.h.b16 %v275
    %v431 = vunpack.c.l.b16 %v276
    %v432 = vunpack.c.h.b16 %v276
    %v433 = vunpack.c.l.b16 %v277
    %v434 = vunpack.c.h.b16 %v277
    %v435 = vunpack.c.l.b16 %v278
    %v436 = vunpack.c.h.b16 %v278
    %v437 = vunpack.c.l.b16 %v279
    %v438 = vunpack.c.h.b16 %v279
    %v439 = vunpack.c.l.b16 %v280
    %v440 = vunpack.c.h.b16 %v280
    %v441 = vunpack.c.l.b16 %v281
    %v442 = vunpack.c.h.b16 %v281
    %v443 = vunpack.c.l.b16 %v282
    %v444 = vunpack.c.h.b16 %v282
    %v445 = vunpack.c.l.b16 %v283
    %v446 = vunpack.c.h.b16 %v283
    %v447 = vunpack.c.l.b16 %v284
    %v448 = vunpack.c.h.b16 %v284
    %v449 = vunpack.c.l.b16 %v285
    %v450 = vunpack.c.h.b16 %v285
    %v451 = vunpack.c.l.b16 %v286
    %v452 = vunpack.c.h.b16 %v286
    %v453 = vunpack.c.l.b16 %v287
    %v454 = vunpack.c.h.b16 %v287
    %v455 = vunpack.c.l.b16 %v288
    %v456 = vunpack.c.h.b16 %v288
    %v457 = vunpack.c.l.b16 %v289
    %v458 = vunpack.c.h.b16 %v289
    %v459 = vunpack.c.l.b16 %v290
    %v460 = vunpack.c.h.b16 %v290
    %v461 = vunpack.c.l.b16 %v291
    %v462 = vunpack.c.h.b16 %v291
    %v463 = vunpack.c.l.b16 %v292
    %v464 = vunpack.c.h.b16 %v292
    %v465 = vunpack.c.l.b16 %v293
    %v466 = vunpack.c.h.b16 %v293
    %v467 = vunpack.c.l.b16 %v294
    %v468 = vunpack.c.h.b16 %v294
    %v469 = vunpack.c.l.b16 %v295
    %v470 = vunpack.c.h.b16 %v295
    %v471 = vunpack.c.l.b16 %v296
    %v472 = vunpack.c.h.b16 %v296
    %v473 = vunpack.c.l.b16 %v297
    %v474 = vunpack.c.h.b16 %v297
    %v475 = vunpack.c.l.b16 %v298
    %v476 = vunpack.c.h.b16 %v298
    %v477 = vunpack.c.l.b16 %v299
    %v478 = vunpack.c.h.b16 %v299
    %v479 = vunpack.c.l.b16 %v300
    %v480 = vunpack.c.h.b16 %v300
    %v481 = vunpack.c.l.b16 %v301
    %v482 = vunpack.c.h.b16 %v301
    %v483 = vunpack.c.l.b16 %v302
    %v484 = vunpack.c.h.b16 %v302
    %v485 = vunpack.c.l.b16 %v303
    %v486 = vunpack.c.h.b16 %v303
    %v487 = vunpack.c.l.b16 %v304
    %v488 = vunpack.c.h.b16 %v304
    %v489 = vunpack.c.l.b16 %v305
    %v490 = vunpack.c.h.b16 %v305
    %v491 = vunpack.c.l.b16 %v306
    %v492 = vunpack.c.h.b16 %v306
    %v493 = vunpack.c.l.b16 %v307
    %v494 = vunpack.c.h.b16 %v307
    %v495 = vunpack.c.l.b16 %v308
    %v496 = vunpack.c.h.b16 %v308
    %v497 = vunpack.c.l.b16 %v309
    %v498 = vunpack.c.h.b16 %v309
    %v499 = vunpack.c.l.b16 %v310
    %v500 = vunpack.c.h.b16 %v310
    %v501 = vunpack.c.l.b16 %v311
    %v502 = vunpack.c.h.b16 %v311
    %v503 = vunpack.c.l.b16 %v312
    %v504 = vunpack.c.h.b16 %v312
    %v505 = vpack.c.b16 %v385, %v377
    %v506 = vpack.c.b16 %v386, %v378
    %v507 = vpack.c.b16 %v387, %v379
    %v508 = vpack.c.b16 %v388, %v380
    %v509 = vpack.c.b16 %v389, %v381
    %v510 = vpack.c.b16 %v390, %v382
    %v511 = vpack.c.b16 %v391, %v383
    %v512 = vpack.c.b16 %v392, %v384
    %v513 = vpack.c.b16 %v401, %v393
    %v514 = vpack.c.b16 %v402, %v394
    %v515 = vpack.c.b16 %v403, %v395
    %v516 = vpack.c.b16 %v404, %v396
    %v517 = vpack.c.b16 %v405, %v397
    %v518 = vpack.c.b16 %v406, %v398
    %v519 = vpack.c.b16 %v407, %v399
    %v520 = vpack.c.b16 %v408, %v400
    %v521 = vpack.c.b16 %v417, %v409
    %v522 = vpack.c.b16 %v418, %v410
    %v523 = vpack.c.b16 %v419, %v411
    %v524 = vpack.c.b16 %v420, %v412
    %v525 = vpack.c.b16 %v421, %v413
    %v526 = vpack.c.b16 %v422, %v414
    %v527 = vpack.c.b16 %v423, %v415
    %v528 = vpack.c.b16 %v424, %v416
    %v529 = vpack.c.b16 %v433, %v425
    %v530 = vpack.c.b16 %v434, %v426
    %v531 = vpack.c.b16 %v435, %v427
    %v532 = vpack.c.b16 %v436, %v428
    %v533 = vpack.c.b16 %v437, %v429
    %v534 = vpack.c.b16 %v438, %v430
    %v535 = vpack.c.b16 %v439, %v431
    %v536 = vpack.c.b16 %v440, %v432
    %v537 = vpack.c.b16 %v449, %v441
    %v538 = vpack.c.b16 %v450, %v442
    %v539 = vpack.c.b16 %v451, %v443
    %v540 = vpack.c.b16 %v452, %v444
    %v541 = vpack.c.b16 %v453, %v445
    %v542 = vpack.c.b16 %v454, %v446
    %v543 = vpack.c.b16 %v455, %v447
    %v544 = vpack.c.b16 %v456, %v448
    %v545 = vpack.c.b16 %v465, %v457
    %v546 = vpack.c.b16 %v466, %v458
    %v547 = vpack.c.b16 %v467, %v459
    %v548 = vpack.c.b16 %v468, %v460
    %v549 = vpack.c.b16 %v469, %v461
    %v550 = vpack.c.b16 %v470, %v462
    %v551 = vpack.c.b16 %v471, %v463
    %v552 = vpack.c.b16 %v472, %v464
    %v553 = vpack.c.b16 %v481, %v473
    %v554 = vpack.c.b16 %v482, %v474
    %v555 = vpack.c.b16 %v483, %v475
    %v556 = vpack.c.b16 %v484, %v476
    %v557 = vpack.c.b16 %v485, %v477
    %v558 = vpack.c.b16 %v486, %v478
    %v559 = vpack.c.b16 %v487, %v479
    %v560 = vpack.c.b16 %v488, %v480
    %v561 = vpack.c.b16 %v497, %v489
    %v562 = vpack.c.b16 %v498, %v490
    %v563 = vpack.c.b16 %v499, %v491
    %v564 = vpack.c.b16 %v500, %v492
    %v565 = vpack.c.b16 %v501, %v493
    %v566 = vpack.c.b16 %v502, %v494
    %v567 = vpack.c.b16 %v503, %v495
    %v568 = vpack.c.b16 %v504, %v496
    %633 = vmatprep.subr.bf16.mxu0 %v506
    %634 = vmatpush1.bf16.msra.mxu0 %v505
    %635 = vmatprep.subr.bf16.mxu0 %v514
    %636 = vmatpush1.bf16.msra.mxu0 %v513
    %637 = vmatprep.subr.bf16.mxu0 %v522
    %638 = vmatpush1.bf16.msra.mxu0 %v521
    %639 = vmatprep.subr.bf16.mxu0 %v530
    %640 = vmatpush1.bf16.msra.mxu0 %v529
    %641 = vmatprep.subr.bf16.mxu0 %v538
    %642 = vmatpush1.bf16.msra.mxu0 %v537
    %643 = vmatprep.subr.bf16.mxu0 %v546
    %644 = vmatpush1.bf16.msra.mxu0 %v545
    %645 = vmatprep.subr.bf16.mxu0 %v554
    %646 = vmatpush1.bf16.msra.mxu0 %v553
    %647 = vmatprep.subr.bf16.mxu0 %v562
    %648 = vmatpush1.bf16.msra.mxu0 %v561
    %649 = vmatprep.subr.bf16.mxu0 0
    %650 = vmatpush1.bf16.msra.mxu0 0
    %651 = vmatprep.subr.bf16.mxu0 0
    %652 = vmatpush1.bf16.msra.mxu0 0
    %653 = vmatprep.subr.bf16.mxu0 0
    %654 = vmatpush1.bf16.msra.mxu0 0
    %655 = vmatprep.subr.bf16.mxu0 0
    %656 = vmatpush1.bf16.msra.mxu0 0
    %657 = vmatprep.subr.bf16.mxu0 0
    %658 = vmatpush1.bf16.msra.mxu0 0
    %659 = vmatprep.subr.bf16.mxu0 0
    %660 = vmatpush1.bf16.msra.mxu0 0
    %661 = vmatprep.subr.bf16.mxu0 0
    %662 = vmatpush1.bf16.msra.mxu0 0
    %663 = vmatprep.subr.bf16.mxu0 0
    %664 = vmatpush1.bf16.msra.mxu0 0
    %665 = vmatprep.mubr.bf16.mxu0 0
    %666 = vmatmul.mubr.bf16.gmra.mrb[0].mxu0 %v247
    %v667 = vpop.f32.mrb[0].mxu0
    %v668 = vadd.f32 0.0, %v667
    %v669 = vpop.f32.mrb[0].mxu0
    %v670 = vadd.f32 0.0, %v669
    %v671 = vpop.f32.mrb[0].mxu0
    %v672 = vadd.f32 0.0, %v671
    %v673 = vpop.f32.mrb[0].mxu0
    %v674 = vadd.f32 0.0, %v673
    %675 = vmatprep.mubr.bf16.mxu0 0
    %676 = vmatmul.mubr.bf16.gmra.mrb[0].mxu0 %v248
    %v677 = vpop.f32.mrb[0].mxu0
    %v678 = vadd.f32 0.0, %v677
    %v679 = vpop.f32.mrb[0].mxu0
    %v680 = vadd.f32 0.0, %v679
    %v681 = vpop.f32.mrb[0].mxu0
    %v682 = vadd.f32 0.0, %v681
    %v683 = vpop.f32.mrb[0].mxu0
    %v684 = vadd.f32 0.0, %v683
    %685 = vdwg.mxu0
    %686 = vmatprep.subr.bf16.mxu0 %v508
    %687 = vmatpush1.bf16.msra.mxu0 %v507
    %688 = vmatprep.subr.bf16.mxu0 %v516
    %689 = vmatpush1.bf16.msra.mxu0 %v515
    %690 = vmatprep.subr.bf16.mxu0 %v524
    %691 = vmatpush1.bf16.msra.mxu0 %v523
    %692 = vmatprep.subr.bf16.mxu0 %v532
    %693 = vmatpush1.bf16.msra.mxu0 %v531
    %694 = vmatprep.subr.bf16.mxu0 %v540
    %695 = vmatpush1.bf16.msra.mxu0 %v539
    %696 = vmatprep.subr.bf16.mxu0 %v548
    %697 = vmatpush1.bf16.msra.mxu0 %v547
    %698 = vmatprep.subr.bf16.mxu0 %v556
    %699 = vmatpush1.bf16.msra.mxu0 %v555
    %700 = vmatprep.subr.bf16.mxu0 %v564
    %701 = vmatpush1.bf16.msra.mxu0 %v563
    %702 = vmatprep.subr.bf16.mxu0 0
    %703 = vmatpush1.bf16.msra.mxu0 0
    %704 = vmatprep.subr.bf16.mxu0 0
    %705 = vmatpush1.bf16.msra.mxu0 0
    %706 = vmatprep.subr.bf16.mxu0 0
    %707 = vmatpush1.bf16.msra.mxu0 0
    %708 = vmatprep.subr.bf16.mxu0 0
    %709 = vmatpush1.bf16.msra.mxu0 0
    %710 = vmatprep.subr.bf16.mxu0 0
    %711 = vmatpush1.bf16.msra.mxu0 0
    %712 = vmatprep.subr.bf16.mxu0 0
    %713 = vmatpush1.bf16.msra.mxu0 0
    %714 = vmatprep.subr.bf16.mxu0 0
    %715 = vmatpush1.bf16.msra.mxu0 0
    %716 = vmatprep.subr.bf16.mxu0 0
    %717 = vmatpush1.bf16.msra.mxu0 0
    %718 = vmatprep.mubr.bf16.mxu0 0
    %719 = vmatmul.mubr.bf16.gmra.mrb[0].mxu0 %v247
    %v720 = vpop.f32.mrb[0].mxu0
    %v721 = vadd.f32 0.0, %v720
    %v722 = vpop.f32.mrb[0].mxu0
    %v723 = vadd.f32 0.0, %v722
    %v724 = vpop.f32.mrb[0].mxu0
    %v725 = vadd.f32 0.0, %v724
    %v726 = vpop.f32.mrb[0].mxu0
    %v727 = vadd.f32 0.0, %v726
    %728 = vmatprep.mubr.bf16.mxu0 0
    %729 = vmatmul.mubr.bf16.gmra.mrb[0].mxu0 %v248
    %v730 = vpop.f32.mrb[0].mxu0
    %v731 = vadd.f32 0.0, %v730
    %v732 = vpop.f32.mrb[0].mxu0
    %v733 = vadd.f32 0.0, %v732
    %v734 = vpop.f32.mrb[0].mxu0
    %v735 = vadd.f32 0.0, %v734
    %v736 = vpop.f32.mrb[0].mxu0
    %v737 = vadd.f32 0.0, %v736
    %738 = vdwg.mxu0
    %739 = vmatprep.subr.bf16.mxu0 %v510
    %740 = vmatpush1.bf16.msra.mxu0 %v509
    %741 = vmatprep.subr.bf16.mxu0 %v518
    %742 = vmatpush1.bf16.msra.mxu0 %v517
    %743 = vmatprep.subr.bf16.mxu0 %v526
    %744 = vmatpush1.bf16.msra.mxu0 %v525
    %745 = vmatprep.subr.bf16.mxu0 %v534
    %746 = vmatpush1.bf16.msra.mxu0 %v533
    %747 = vmatprep.subr.bf16.mxu0 %v542
    %748 = vmatpush1.bf16.msra.mxu0 %v541
    %749 = vmatprep.subr.bf16.mxu0 %v550
    %750 = vmatpush1.bf16.msra.mxu0 %v549
    %751 = vmatprep.subr.bf16.mxu0 %v558
    %752 = vmatpush1.bf16.msra.mxu0 %v557
    %753 = vmatprep.subr.bf16.mxu0 %v566
    %754 = vmatpush1.bf16.msra.mxu0 %v565
    %755 = vmatprep.subr.bf16.mxu0 0
    %756 = vmatpush1.bf16.msra.mxu0 0
    %757 = vmatprep.subr.bf16.mxu0 0
    %758 = vmatpush1.bf16.msra.mxu0 0
    %759 = vmatprep.subr.bf16.mxu0 0
    %760 = vmatpush1.bf16.msra.mxu0 0
    %761 = vmatprep.subr.bf16.mxu0 0
    %762 = vmatpush1.bf16.msra.mxu0 0
    %763 = vmatprep.subr.bf16.mxu0 0
    %764 = vmatpush1.bf16.msra.mxu0 0
    %765 = vmatprep.subr.bf16.mxu0 0
    %766 = vmatpush1.bf16.msra.mxu0 0
    %767 = vmatprep.subr.bf16.mxu0 0
    %768 = vmatpush1.bf16.msra.mxu0 0
    %769 = vmatprep.subr.bf16.mxu0 0
    %770 = vmatpush1.bf16.msra.mxu0 0
    %771 = vmatprep.mubr.bf16.mxu0 0
    %772 = vmatmul.mubr.bf16.gmra.mrb[0].mxu0 %v247
    %v773 = vpop.f32.mrb[0].mxu0
    %v774 = vadd.f32 0.0, %v773
    %v775 = vpop.f32.mrb[0].mxu0
    %v776 = vadd.f32 0.0, %v775
    %v777 = vpop.f32.mrb[0].mxu0
    %v778 = vadd.f32 0.0, %v777
    %v779 = vpop.f32.mrb[0].mxu0
    %v780 = vadd.f32 0.0, %v779
    %781 = vmatprep.mubr.bf16.mxu0 0
    %782 = vmatmul.mubr.bf16.gmra.mrb[0].mxu0 %v248
    %v783 = vpop.f32.mrb[0].mxu0
    %v784 = vadd.f32 0.0, %v783
    %v785 = vpop.f32.mrb[0].mxu0
    %v786 = vadd.f32 0.0, %v785
    %v787 = vpop.f32.mrb[0].mxu0
    %v788 = vadd.f32 0.0, %v787
    %v789 = vpop.f32.mrb[0].mxu0
    %v790 = vadd.f32 0.0, %v789
    %791 = vdwg.mxu0
    %792 = vmatprep.subr.bf16.mxu0 %v512
    %793 = vmatpush1.bf16.msra.mxu0 %v511
    %794 = vmatprep.subr.bf16.mxu0 %v520
    %795 = vmatpush1.bf16.msra.mxu0 %v519
    %796 = vmatprep.subr.bf16.mxu0 %v528
    %797 = vmatpush1.bf16.msra.mxu0 %v527
    %798 = vmatprep.subr.bf16.mxu0 %v536
    %799 = vmatpush1.bf16.msra.mxu0 %v535
    %800 = vmatprep.subr.bf16.mxu0 %v544
    %801 = vmatpush1.bf16.msra.mxu0 %v543
    %802 = vmatprep.subr.bf16.mxu0 %v552
    %803 = vmatpush1.bf16.msra.mxu0 %v551
    %804 = vmatprep.subr.bf16.mxu0 %v560
    %805 = vmatpush1.bf16.msra.mxu0 %v559
    %806 = vmatprep.subr.bf16.mxu0 %v568
    %807 = vmatpush1.bf16.msra.mxu0 %v567
    %808 = vmatprep.subr.bf16.mxu0 0
    %809 = vmatpush1.bf16.msra.mxu0 0
    %810 = vmatprep.subr.bf16.mxu0 0
    %811 = vmatpush1.bf16.msra.mxu0 0
    %812 = vmatprep.subr.bf16.mxu0 0
    %813 = vmatpush1.bf16.msra.mxu0 0
    %814 = vmatprep.subr.bf16.mxu0 0
    %815 = vmatpush1.bf16.msra.mxu0 0
    %816 = vmatprep.subr.bf16.mxu0 0
    %817 = vmatpush1.bf16.msra.mxu0 0
    %818 = vmatprep.subr.bf16.mxu0 0
    %819 = vmatpush1.bf16.msra.mxu0 0
    %820 = vmatprep.subr.bf16.mxu0 0
    %821 = vmatpush1.bf16.msra.mxu0 0
    %822 = vmatprep.subr.bf16.mxu0 0
    %823 = vmatpush1.bf16.msra.mxu0 0
    %824 = vmatprep.mubr.bf16.mxu0 0
    %825 = vmatmul.mubr.bf16.gmra.mrb[0].mxu0 %v247
    %v826 = vpop.f32.mrb[0].mxu0
    %v827 = vadd.f32 0.0, %v826
    %v828 = vpop.f32.mrb[0].mxu0
    %v829 = vadd.f32 0.0, %v828
    %v830 = vpop.f32.mrb[0].mxu0
    %v831 = vadd.f32 0.0, %v830
    %v832 = vpop.f32.mrb[0].mxu0
    %v833 = vadd.f32 0.0, %v832
    %834 = vmatprep.mubr.bf16.mxu0 0
    %835 = vmatmul.mubr.bf16.gmra.mrb[0].mxu0 %v248
    %v836 = vpop.f32.mrb[0].mxu0
    %v837 = vadd.f32 0.0, %v836
    %v838 = vpop.f32.mrb[0].mxu0
    %v839 = vadd.f32 0.0, %v838
    %v840 = vpop.f32.mrb[0].mxu0
    %v841 = vadd.f32 0.0, %v840
    %v842 = vpop.f32.mrb[0].mxu0
    %v843 = vadd.f32 0.0, %v842
    %844 = vdwg.mxu0
    %v845 = vmax.f32 %v668, %v672
    %v846 = vrot.slane %v845, 4
    %v847 = vmax.f32 %v845, %v846
    %v848 = vrot.slane %v847, 2
    %v849 = vmax.f32 %v847, %v848
    %v850 = vrot.slane %v849, 1
    %v851 = vmax.f32 %v849, %v850
    %v852 = vmax.f32 %v670, %v674
    %v853 = vrot.slane %v852, 4
    %v854 = vmax.f32 %v852, %v853
    %v855 = vrot.slane %v854, 2
    %v856 = vmax.f32 %v854, %v855
    %v857 = vrot.slane %v856, 1
    %v858 = vmax.f32 %v856, %v857
    %v859 = vmax.f32 %v721, %v725
    %v860 = vrot.slane %v859, 4
    %v861 = vmax.f32 %v859, %v860
    %v862 = vrot.slane %v861, 2
    %v863 = vmax.f32 %v861, %v862
    %v864 = vrot.slane %v863, 1
    %v865 = vmax.f32 %v863, %v864
    %v866 = vmax.f32 %v723, %v727
    %v867 = vrot.slane %v866, 4
    %v868 = vmax.f32 %v866, %v867
    %v869 = vrot.slane %v868, 2
    %v870 = vmax.f32 %v868, %v869
    %v871 = vrot.slane %v870, 1
    %v872 = vmax.f32 %v870, %v871
    %v873 = vmax.f32 %v774, %v778
    %v874 = vrot.slane %v873, 4
    %v875 = vmax.f32 %v873, %v874
    %v876 = vrot.slane %v875, 2
    %v877 = vmax.f32 %v875, %v876
    %v878 = vrot.slane %v877, 1
    %v879 = vmax.f32 %v877, %v878
    %v880 = vmax.f32 %v776, %v780
    %v881 = vrot.slane %v880, 4
    %v882 = vmax.f32 %v880, %v881
    %v883 = vrot.slane %v882, 2
    %v884 = vmax.f32 %v882, %v883
    %v885 = vrot.slane %v884, 1
    %v886 = vmax.f32 %v884, %v885
    %v887 = vmax.f32 %v827, %v831
    %v888 = vrot.slane %v887, 4
    %v889 = vmax.f32 %v887, %v888
    %v890 = vrot.slane %v889, 2
    %v891 = vmax.f32 %v889, %v890
    %v892 = vrot.slane %v891, 1
    %v893 = vmax.f32 %v891, %v892
    %v894 = vmax.f32 %v829, %v833
    %v895 = vrot.slane %v894, 4
    %v896 = vmax.f32 %v894, %v895
    %v897 = vrot.slane %v896, 2
    %v898 = vmax.f32 %v896, %v897
    %v899 = vrot.slane %v898, 1
    %v900 = vmax.f32 %v898, %v899
    %v901 = vmax.f32 %v678, %v682
    %v902 = vrot.slane %v901, 4
    %v903 = vmax.f32 %v901, %v902
    %v904 = vrot.slane %v903, 2
    %v905 = vmax.f32 %v903, %v904
    %v906 = vrot.slane %v905, 1
    %v907 = vmax.f32 %v905, %v906
    %v908 = vmax.f32 %v680, %v684
    %v909 = vrot.slane %v908, 4
    %v910 = vmax.f32 %v908, %v909
    %v911 = vrot.slane %v910, 2
    %v912 = vmax.f32 %v910, %v911
    %v913 = vrot.slane %v912, 1
    %v914 = vmax.f32 %v912, %v913
    %v915 = vmax.f32 %v731, %v735
    %v916 = vrot.slane %v915, 4
    %v917 = vmax.f32 %v915, %v916
    %v918 = vrot.slane %v917, 2
    %v919 = vmax.f32 %v917, %v918
    %v920 = vrot.slane %v919, 1
    %v921 = vmax.f32 %v919, %v920
    %v922 = vmax.f32 %v733, %v737
    %v923 = vrot.slane %v922, 4
    %v924 = vmax.f32 %v922, %v923
    %v925 = vrot.slane %v924, 2
    %v926 = vmax.f32 %v924, %v925
    %v927 = vrot.slane %v926, 1
    %v928 = vmax.f32 %v926, %v927
    %v929 = vmax.f32 %v784, %v788
    %v930 = vrot.slane %v929, 4
    %v931 = vmax.f32 %v929, %v930
    %v932 = vrot.slane %v931, 2
    %v933 = vmax.f32 %v931, %v932
    %v934 = vrot.slane %v933, 1
    %v935 = vmax.f32 %v933, %v934
    %v936 = vmax.f32 %v786, %v790
    %v937 = vrot.slane %v936, 4
    %v938 = vmax.f32 %v936, %v937
    %v939 = vrot.slane %v938, 2
    %v940 = vmax.f32 %v938, %v939
    %v941 = vrot.slane %v940, 1
    %v942 = vmax.f32 %v940, %v941
    %v943 = vmax.f32 %v837, %v841
    %v944 = vrot.slane %v943, 4
    %v945 = vmax.f32 %v943, %v944
    %v946 = vrot.slane %v945, 2
    %v947 = vmax.f32 %v945, %v946
    %v948 = vrot.slane %v947, 1
    %v949 = vmax.f32 %v947, %v948
    %v950 = vmax.f32 %v839, %v843
    %v951 = vrot.slane %v950, 4
    %v952 = vmax.f32 %v950, %v951
    %v953 = vrot.slane %v952, 2
    %v954 = vmax.f32 %v952, %v953
    %v955 = vrot.slane %v954, 1
    %v956 = vmax.f32 %v954, %v955
    %p957 = scmp.eq.s32.totalorder 0, 0
    // Predicated region
    $region46: #{t1_forward.1} parent=1 // pred_check
      %p958 = pneg %p957
    $region47: #{t1_forward.1} parent=1 // pred_check_branch
      %960 = sbr.rel (%p958) target = $region49
    $region48: #{t1_forward.1} parent=1 // pred_region
      %v977 = vcombine.low %v851, %v858
      %v978 = vcombine.low %v865, %v872
      %v980 = vunpack.c.l.s4 1983009808
      %v981 = vunpack.c.0.s8 %v980
      %v982 = vlaneseq
      %v983 = vshrl.u32 %v982, 7
      %v984 = vsub.s32 %v981, %v983
      %v985 = vrot.slane %v977, %v984
      %v987 = vunpack.c.l.s4 1983009808
      %v988 = vunpack.c.0.s8 %v987
      %v989 = vlaneseq
      %v990 = vshrl.u32 %v989, 7
      %v991 = vsub.s32 %v988, %v990
      %v992 = vrot.slane %v978, %v991
      %v993 = vcombine.low %v985, %v992
      %v994 = vcombine.low %v879, %v886
      %v995 = vcombine.low %v893, %v900
      %v997 = vunpack.c.l.s4 1983009808
      %v998 = vunpack.c.0.s8 %v997
      %v999 = vlaneseq
      %v1000 = vshrl.u32 %v999, 7
      %v1001 = vsub.s32 %v998, %v1000
      %v1002 = vrot.slane %v994, %v1001
      %v1004 = vunpack.c.l.s4 1983009808
      %v1005 = vunpack.c.0.s8 %v1004
      %v1006 = vlaneseq
      %v1007 = vshrl.u32 %v1006, 7
      %v1008 = vsub.s32 %v1005, %v1007
      %v1009 = vrot.slane %v995, %v1008
      %v1010 = vcombine.low %v1002, %v1009
      %v1011 = vcombine.low %v907, %v914
      %v1012 = vcombine.low %v921, %v928
      %v1014 = vunpack.c.l.s4 1983009808
      %v1015 = vunpack.c.0.s8 %v1014
      %v1016 = vlaneseq
      %v1017 = vshrl.u32 %v1016, 7
      %v1018 = vsub.s32 %v1015, %v1017
      %v1019 = vrot.slane %v1011, %v1018
      %v1021 = vunpack.c.l.s4 1983009808
      %v1022 = vunpack.c.0.s8 %v1021
      %v1023 = vlaneseq
      %v1024 = vshrl.u32 %v1023, 7
      %v1025 = vsub.s32 %v1022, %v1024
      %v1026 = vrot.slane %v1012, %v1025
      %v1027 = vcombine.low %v1019, %v1026
      %v1028 = vcombine.low %v935, %v942
      %v1029 = vcombine.low %v949, %v956
      %v1031 = vunpack.c.l.s4 1983009808
      %v1032 = vunpack.c.0.s8 %v1031
      %v1033 = vlaneseq
      %v1034 = vshrl.u32 %v1033, 7
      %v1035 = vsub.s32 %v1032, %v1034
      %v1036 = vrot.slane %v1028, %v1035
      %v1038 = vunpack.c.l.s4 1983009808
      %v1039 = vunpack.c.0.s8 %v1038
      %v1040 = vlaneseq
      %v1041 = vshrl.u32 %v1040, 7
      %v1042 = vsub.s32 %v1039, %v1041
      %v1043 = vrot.slane %v1029, %v1042
      %v1044 = vcombine.low %v1036, %v1043
      %vm1045 = vcmask 1044484
      %v1046 = vsel %vm1045, %v993, %v993
      %vm1047 = vcmask 1046534
      %v1048 = vsel %vm1047, %v993, %v1046
      %v1049 = vrot.slane %v1027, 7
      %vm1050 = vcmask 1041409
      %v1051 = vsel %vm1050, %v1049, %v1048
      %vm1052 = vcmask 1043459
      %v1053 = vsel %vm1052, %v1049, %v1051
      %vm1054 = vcmask 1045509
      %v1055 = vsel %vm1054, %v1049, %v1053
      %vm1056 = vcmask 1047559
      %v1057 = vsel %vm1056, %v1049, %v1055
      %v1058 = vsel %vm1045, %v1010, %v1010
      %v1059 = vsel %vm1047, %v1010, %v1058
      %v1060 = vrot.slane %v1044, 7
      %v1061 = vsel %vm1050, %v1060, %v1059
      %v1062 = vsel %vm1052, %v1060, %v1061
      %v1063 = vsel %vm1054, %v1060, %v1062
      %v1064 = vsel %vm1056, %v1060, %v1063
      %1067 = vst [vmem:[#allocation2] sm:$0xff] %v1057
      %1068 = vst [vmem:[#allocation2 + $0x8] sm:$0xff] %v1064
    $region49: #{t1_forward.1} parent=1 // pred_fallthru
      _
    %p1069 = scmp.gt.s32.totalorder 0, 0
    // Predicated region
    $region50: #{t1_forward.1} parent=1 // pred_check
      %p1070 = pneg %p1069
    $region51: #{t1_forward.1} parent=1 // pred_check_branch
      %1072 = sbr.rel (%p1070) target = $region53
    $region52: #{t1_forward.1} parent=1 // pred_region
      %v1073 = vld [vmem:[#allocation2] sm:$0xff]
      %v1074 = vld [vmem:[#allocation2 + $0x8] sm:$0xff]
      %v1091 = vcombine.low %v851, %v858
      %v1092 = vcombine.low %v865, %v872
      %v1094 = vunpack.c.l.s4 1983009808
      %v1095 = vunpack.c.0.s8 %v1094
      %v1096 = vlaneseq
      %v1097 = vshrl.u32 %v1096, 7
      %v1098 = vsub.s32 %v1095, %v1097
      %v1099 = vrot.slane %v1091, %v1098
      %v1101 = vunpack.c.l.s4 1983009808
      %v1102 = vunpack.c.0.s8 %v1101
      %v1103 = vlaneseq
      %v1104 = vshrl.u32 %v1103, 7
      %v1105 = vsub.s32 %v1102, %v1104
      %v1106 = vrot.slane %v1092, %v1105
      %v1107 = vcombine.low %v1099, %v1106
      %v1108 = vcombine.low %v879, %v886
      %v1109 = vcombine.low %v893, %v900
      %v1111 = vunpack.c.l.s4 1983009808
      %v1112 = vunpack.c.0.s8 %v1111
      %v1113 = vlaneseq
      %v1114 = vshrl.u32 %v1113, 7
      %v1115 = vsub.s32 %v1112, %v1114
      %v1116 = vrot.slane %v1108, %v1115
      %v1118 = vunpack.c.l.s4 1983009808
      %v1119 = vunpack.c.0.s8 %v1118
      %v1120 = vlaneseq
      %v1121 = vshrl.u32 %v1120, 7
      %v1122 = vsub.s32 %v1119, %v1121
      %v1123 = vrot.slane %v1109, %v1122
      %v1124 = vcombine.low %v1116, %v1123
      %v1125 = vcombine.low %v907, %v914
      %v1126 = vcombine.low %v921, %v928
      %v1128 = vunpack.c.l.s4 1983009808
      %v1129 = vunpack.c.0.s8 %v1128
      %v1130 = vlaneseq
      %v1131 = vshrl.u32 %v1130, 7
      %v1132 = vsub.s32 %v1129, %v1131
      %v1133 = vrot.slane %v1125, %v1132
      %v1135 = vunpack.c.l.s4 1983009808
      %v1136 = vunpack.c.0.s8 %v1135
      %v1137 = vlaneseq
      %v1138 = vshrl.u32 %v1137, 7
      %v1139 = vsub.s32 %v1136, %v1138
      %v1140 = vrot.slane %v1126, %v1139
      %v1141 = vcombine.low %v1133, %v1140
      %v1142 = vcombine.low %v935, %v942
      %v1143 = vcombine.low %v949, %v956
      %v1145 = vunpack.c.l.s4 1983009808
      %v1146 = vunpack.c.0.s8 %v1145
      %v1147 = vlaneseq
      %v1148 = vshrl.u32 %v1147, 7
      %v1149 = vsub.s32 %v1146, %v1148
      %v1150 = vrot.slane %v1142, %v1149
      %v1152 = vunpack.c.l.s4 1983009808
      %v1153 = vunpack.c.0.s8 %v1152
      %v1154 = vlaneseq
      %v1155 = vshrl.u32 %v1154, 7
      %v1156 = vsub.s32 %v1153, %v1155
      %v1157 = vrot.slane %v1143, %v1156
      %v1158 = vcombine.low %v1150, %v1157
      %vm1159 = vcmask 1044484
      %v1160 = vsel %vm1159, %v1107, %v1107
      %vm1161 = vcmask 1046534
      %v1162 = vsel %vm1161, %v1107, %v1160
      %v1163 = vrot.slane %v1141, 7
      %vm1164 = vcmask 1041409
      %v1165 = vsel %vm1164, %v1163, %v1162
      %vm1166 = vcmask 1043459
      %v1167 = vsel %vm1166, %v1163, %v1165
      %vm1168 = vcmask 1045509
      %v1169 = vsel %vm1168, %v1163, %v1167
      %vm1170 = vcmask 1047559
      %v1171 = vsel %vm1170, %v1163, %v1169
      %v1172 = vsel %vm1159, %v1124, %v1124
      %v1173 = vsel %vm1161, %v1124, %v1172
      %v1174 = vrot.slane %v1158, 7
      %v1175 = vsel %vm1164, %v1174, %v1173
      %v1176 = vsel %vm1166, %v1174, %v1175
      %v1177 = vsel %vm1168, %v1174, %v1176
      %v1178 = vsel %vm1170, %v1174, %v1177
      %v1181 = vmax.f32 %v1073, %v1171
      %v1182 = vmax.f32 %v1074, %v1178
      %1183 = vst [vmem:[#allocation2] sm:$0xff] %v1181
      %1184 = vst [vmem:[#allocation2 + $0x8] sm:$0xff] %v1182
    $region53: #{t1_forward.1} parent=1 // pred_fallthru
      _
    // Predicated region
    $region54: #{t1_forward.1} parent=1 // pred_check
      %p1185 = pneg %p957
    $region55: #{t1_forward.1} parent=1 // pred_check_branch
      %1187 = sbr.rel (%p1185) target = $region57
    $region56: #{t1_forward.1} parent=1 // pred_region
      %v1188 = vld [vmem:[#allocation2] sm:$0xff]
      %v1189 = vld [vmem:[#allocation2 + $0x8] sm:$0xff]
      %v1190 = vld [vmem:[%s6] sm:$0xff]
      %v1192 = vlaneseq
      %v1193 = vshrl.u32 %v1192, 7
      %v1194 = vsub.s32 0, %v1193
      %v1195 = vrot.slane %v1190, %v1194
      %v1196 = vlaneseq
      %v1197 = vshrl.u32 %v1196, 7
      %v1198 = vsub.s32 1, %v1197
      %v1199 = vrot.slane %v1190, %v1198
      %v1200 = vlaneseq
      %v1201 = vshrl.u32 %v1200, 7
      %v1202 = vsub.s32 2, %v1201
      %v1203 = vrot.slane %v1190, %v1202
      %v1204 = vlaneseq
      %v1205 = vshrl.u32 %v1204, 7
      %v1206 = vsub.s32 3, %v1205
      %v1207 = vrot.slane %v1190, %v1206
      %v1208 = vlaneseq
      %v1209 = vshrl.u32 %v1208, 7
      %v1210 = vsub.s32 4, %v1209
      %v1211 = vrot.slane %v1190, %v1210
      %v1212 = vlaneseq
      %v1213 = vshrl.u32 %v1212, 7
      %v1214 = vsub.s32 5, %v1213
      %v1215 = vrot.slane %v1190, %v1214
      %v1216 = vlaneseq
      %v1217 = vshrl.u32 %v1216, 7
      %v1218 = vsub.s32 6, %v1217
      %v1219 = vrot.slane %v1190, %v1218
      %v1220 = vlaneseq
      %v1221 = vshrl.u32 %v1220, 7
      %v1222 = vsub.s32 7, %v1221
      %v1223 = vrot.slane %v1190, %v1222
      %v1224 = vcombine.low %v1195, %v1199
      %v1225 = vcombine.low %v1203, %v1207
      %v1227 = vunpack.c.l.s4 1983009808
      %v1228 = vunpack.c.0.s8 %v1227
      %v1229 = vlaneseq
      %v1230 = vshrl.u32 %v1229, 7
      %v1231 = vsub.s32 %v1228, %v1230
      %v1232 = vrot.slane %v1224, %v1231
      %v1234 = vunpack.c.l.s4 1983009808
      %v1235 = vunpack.c.0.s8 %v1234
      %v1236 = vlaneseq
      %v1237 = vshrl.u32 %v1236, 7
      %v1238 = vsub.s32 %v1235, %v1237
      %v1239 = vrot.slane %v1225, %v1238
      %v1240 = vcombine.low %v1232, %v1239
      %v1241 = vcombine.low %v1211, %v1215
      %v1242 = vcombine.low %v1219, %v1223
      %v1244 = vunpack.c.l.s4 1983009808
      %v1245 = vunpack.c.0.s8 %v1244
      %v1246 = vlaneseq
      %v1247 = vshrl.u32 %v1246, 7
      %v1248 = vsub.s32 %v1245, %v1247
      %v1249 = vrot.slane %v1241, %v1248
      %v1251 = vunpack.c.l.s4 1983009808
      %v1252 = vunpack.c.0.s8 %v1251
      %v1253 = vlaneseq
      %v1254 = vshrl.u32 %v1253, 7
      %v1255 = vsub.s32 %v1252, %v1254
      %v1256 = vrot.slane %v1242, %v1255
      %v1257 = vcombine.low %v1249, %v1256
      %v1260 = vadd.f32 %v1188, %v1240
      %v1261 = vadd.f32 %v1189, %v1257
      %v1262 = vmax.f32 %v1260, 0.0
      %v1263 = vmax.f32 %v1261, 0.0
      %v1266 = vcombine.high %v1262, %v1262
      %v1268 = vunpack.c.l.s4 1983009808
      %v1269 = vunpack.c.0.s8 %v1268
      %v1270 = vlaneseq
      %v1271 = vshrl.u32 %v1270, 7
      %v1272 = vsub.s32 %v1269, %v1271
      %v1273 = vrot.slane %v1262, %v1272
      %v1275 = vunpack.c.l.s4 1983009808
      %v1276 = vunpack.c.0.s8 %v1275
      %v1277 = vlaneseq
      %v1278 = vshrl.u32 %v1277, 7
      %v1279 = vsub.s32 %v1276, %v1278
      %v1280 = vrot.slane %v1266, %v1279
      %v1281 = vcombine.high %v1273, %v1273
      %v1282 = vcombine.high %v1280, %v1280
      %v1283 = vcombine.high %v1263, %v1263
      %v1285 = vunpack.c.l.s4 1983009808
      %v1286 = vunpack.c.0.s8 %v1285
      %v1287 = vlaneseq
      %v1288 = vshrl.u32 %v1287, 7
      %v1289 = vsub.s32 %v1286, %v1288
      %v1290 = vrot.slane %v1263, %v1289
      %v1292 = vunpack.c.l.s4 1983009808
      %v1293 = vunpack.c.0.s8 %v1292
      %v1294 = vlaneseq
      %v1295 = vshrl.u32 %v1294, 7
      %v1296 = vsub.s32 %v1293, %v1295
      %v1297 = vrot.slane %v1283, %v1296
      %v1298 = vcombine.high %v1290, %v1290
      %v1299 = vcombine.high %v1297, %v1297
      %v1308 = vpack.c.bf16 %v1273, %v1273
      %v1309 = vpack.c.bf16 %v1281, %v1281
      %v1310 = vpack.c.bf16 %v1280, %v1280
      %v1311 = vpack.c.bf16 %v1282, %v1282
      %v1312 = vpack.c.bf16 %v1290, %v1290
      %v1313 = vpack.c.bf16 %v1298, %v1298
      %v1314 = vpack.c.bf16 %v1297, %v1297
      %v1315 = vpack.c.bf16 %v1299, %v1299
      %v1316 = vld [vmem:[%s7] sm:$0xff]
      %v1317 = vld [vmem:[%s7 + $0x8] sm:$0xff]
      %v1318 = vld [vmem:[%s7 + $0x10] sm:$0xff]
      %v1319 = vld [vmem:[%s7 + $0x18] sm:$0xff]
      %v1320 = vld [vmem:[%s7 + $0x20] sm:$0xff]
      %v1321 = vld [vmem:[%s7 + $0x28] sm:$0xff]
      %v1322 = vld [vmem:[%s7 + $0x30] sm:$0xff]
      %v1323 = vld [vmem:[%s7 + $0x38] sm:$0xff]
      %v1324 = vld [vmem:[%s7 + $0x40] sm:$0xff]
      %v1325 = vld [vmem:[%s7 + $0x48] sm:$0xff]
      %v1326 = vld [vmem:[%s7 + $0x50] sm:$0xff]
      %v1327 = vld [vmem:[%s7 + $0x58] sm:$0xff]
      %v1328 = vld [vmem:[%s7 + $0x60] sm:$0xff]
      %v1329 = vld [vmem:[%s7 + $0x68] sm:$0xff]
      %v1330 = vld [vmem:[%s7 + $0x70] sm:$0xff]
      %v1331 = vld [vmem:[%s7 + $0x78] sm:$0xff]
      %v1332 = vld [vmem:[%s7 + $0x80] sm:$0xff]
      %v1333 = vld [vmem:[%s7 + $0x88] sm:$0xff]
      %v1334 = vld [vmem:[%s7 + $0x90] sm:$0xff]
      %v1335 = vld [vmem:[%s7 + $0x98] sm:$0xff]
      %v1336 = vld [vmem:[%s7 + $0xa0] sm:$0xff]
      %v1337 = vld [vmem:[%s7 + $0xa8] sm:$0xff]
      %v1338 = vld [vmem:[%s7 + $0xb0] sm:$0xff]
      %v1339 = vld [vmem:[%s7 + $0xb8] sm:$0xff]
      %v1340 = vld [vmem:[%s7 + $0xc0] sm:$0xff]
      %v1341 = vld [vmem:[%s7 + $0xc8] sm:$0xff]
      %v1342 = vld [vmem:[%s7 + $0xd0] sm:$0xff]
      %v1343 = vld [vmem:[%s7 + $0xd8] sm:$0xff]
      %v1344 = vld [vmem:[%s7 + $0xe0] sm:$0xff]
      %v1345 = vld [vmem:[%s7 + $0xe8] sm:$0xff]
      %v1346 = vld [vmem:[%s7 + $0xf0] sm:$0xff]
      %v1347 = vld [vmem:[%s7 + $0xf8] sm:$0xff]
      %v1348 = vld [vmem:[%s7 + $0x100] sm:$0xff]
      %v1349 = vld [vmem:[%s7 + $0x108] sm:$0xff]
      %v1350 = vld [vmem:[%s7 + $0x110] sm:$0xff]
      %v1351 = vld [vmem:[%s7 + $0x118] sm:$0xff]
      %v1352 = vld [vmem:[%s7 + $0x120] sm:$0xff]
      %v1353 = vld [vmem:[%s7 + $0x128] sm:$0xff]
      %v1354 = vld [vmem:[%s7 + $0x130] sm:$0xff]
      %v1355 = vld [vmem:[%s7 + $0x138] sm:$0xff]
      %v1356 = vld [vmem:[%s7 + $0x140] sm:$0xff]
      %v1357 = vld [vmem:[%s7 + $0x148] sm:$0xff]
      %v1358 = vld [vmem:[%s7 + $0x150] sm:$0xff]
      %v1359 = vld [vmem:[%s7 + $0x158] sm:$0xff]
      %v1360 = vld [vmem:[%s7 + $0x160] sm:$0xff]
      %v1361 = vld [vmem:[%s7 + $0x168] sm:$0xff]
      %v1362 = vld [vmem:[%s7 + $0x170] sm:$0xff]
      %v1363 = vld [vmem:[%s7 + $0x178] sm:$0xff]
      %v1364 = vld [vmem:[%s7 + $0x180] sm:$0xff]
      %v1365 = vld [vmem:[%s7 + $0x188] sm:$0xff]
      %v1366 = vld [vmem:[%s7 + $0x190] sm:$0xff]
      %v1367 = vld [vmem:[%s7 + $0x198] sm:$0xff]
      %v1368 = vld [vmem:[%s7 + $0x1a0] sm:$0xff]
      %v1369 = vld [vmem:[%s7 + $0x1a8] sm:$0xff]
      %v1370 = vld [vmem:[%s7 + $0x1b0] sm:$0xff]
      %v1371 = vld [vmem:[%s7 + $0x1b8] sm:$0xff]
      %v1372 = vld [vmem:[%s7 + $0x1c0] sm:$0xff]
      %v1373 = vld [vmem:[%s7 + $0x1c8] sm:$0xff]
      %v1374 = vld [vmem:[%s7 + $0x1d0] sm:$0xff]
      %v1375 = vld [vmem:[%s7 + $0x1d8] sm:$0xff]
      %v1376 = vld [vmem:[%s7 + $0x1e0] sm:$0xff]
      %v1377 = vld [vmem:[%s7 + $0x1e8] sm:$0xff]
      %v1378 = vld [vmem:[%s7 + $0x1f0] sm:$0xff]
      %v1379 = vld [vmem:[%s7 + $0x1f8] sm:$0xff]
      %v1380 = vld [vmem:[%s7 + $0x200] sm:$0xff]
      %v1381 = vld [vmem:[%s7 + $0x208] sm:$0xff]
      %v1382 = vld [vmem:[%s7 + $0x210] sm:$0xff]
      %v1383 = vld [vmem:[%s7 + $0x218] sm:$0xff]
      %v1384 = vld [vmem:[%s7 + $0x220] sm:$0xff]
      %v1385 = vld [vmem:[%s7 + $0x228] sm:$0xff]
      %v1386 = vld [vmem:[%s7 + $0x230] sm:$0xff]
      %v1387 = vld [vmem:[%s7 + $0x238] sm:$0xff]
      %v1388 = vld [vmem:[%s7 + $0x240] sm:$0xff]
      %v1389 = vld [vmem:[%s7 + $0x248] sm:$0xff]
      %v1390 = vld [vmem:[%s7 + $0x250] sm:$0xff]
      %v1391 = vld [vmem:[%s7 + $0x258] sm:$0xff]
      %v1392 = vld [vmem:[%s7 + $0x260] sm:$0xff]
      %v1393 = vld [vmem:[%s7 + $0x268] sm:$0xff]
      %v1394 = vld [vmem:[%s7 + $0x270] sm:$0xff]
      %v1395 = vld [vmem:[%s7 + $0x278] sm:$0xff]
      %v1396 = vld [vmem:[%s7 + $0x280] sm:$0xff]
      %v1397 = vld [vmem:[%s7 + $0x288] sm:$0xff]
      %v1398 = vld [vmem:[%s7 + $0x290] sm:$0xff]
      %v1399 = vld [vmem:[%s7 + $0x298] sm:$0xff]
      %v1400 = vld [vmem:[%s7 + $0x2a0] sm:$0xff]
      %v1401 = vld [vmem:[%s7 + $0x2a8] sm:$0xff]
      %v1402 = vld [vmem:[%s7 + $0x2b0] sm:$0xff]
      %v1403 = vld [vmem:[%s7 + $0x2b8] sm:$0xff]
      %v1404 = vld [vmem:[%s7 + $0x2c0] sm:$0xff]
      %v1405 = vld [vmem:[%s7 + $0x2c8] sm:$0xff]
      %v1406 = vld [vmem:[%s7 + $0x2d0] sm:$0xff]
      %v1407 = vld [vmem:[%s7 + $0x2d8] sm:$0xff]
      %v1408 = vld [vmem:[%s7 + $0x2e0] sm:$0xff]
      %v1409 = vld [vmem:[%s7 + $0x2e8] sm:$0xff]
      %v1410 = vld [vmem:[%s7 + $0x2f0] sm:$0xff]
      %v1411 = vld [vmem:[%s7 + $0x2f8] sm:$0xff]
      %v1412 = vld [vmem:[%s7 + $0x300] sm:$0xff]
      %v1413 = vld [vmem:[%s7 + $0x308] sm:$0xff]
      %v1414 = vld [vmem:[%s7 + $0x310] sm:$0xff]
      %v1415 = vld [vmem:[%s7 + $0x318] sm:$0xff]
      %v1416 = vld [vmem:[%s7 + $0x320] sm:$0xff]
      %v1417 = vld [vmem:[%s7 + $0x328] sm:$0xff]
      %v1418 = vld [vmem:[%s7 + $0x330] sm:$0xff]
      %v1419 = vld [vmem:[%s7 + $0x338] sm:$0xff]
      %v1420 = vld [vmem:[%s7 + $0x340] sm:$0xff]
      %v1421 = vld [vmem:[%s7 + $0x348] sm:$0xff]
      %v1422 = vld [vmem:[%s7 + $0x350] sm:$0xff]
      %v1423 = vld [vmem:[%s7 + $0x358] sm:$0xff]
      %v1424 = vld [vmem:[%s7 + $0x360] sm:$0xff]
      %v1425 = vld [vmem:[%s7 + $0x368] sm:$0xff]
      %v1426 = vld [vmem:[%s7 + $0x370] sm:$0xff]
      %v1427 = vld [vmem:[%s7 + $0x378] sm:$0xff]
      %v1428 = vld [vmem:[%s7 + $0x380] sm:$0xff]
      %v1429 = vld [vmem:[%s7 + $0x388] sm:$0xff]
      %v1430 = vld [vmem:[%s7 + $0x390] sm:$0xff]
      %v1431 = vld [vmem:[%s7 + $0x398] sm:$0xff]
      %v1432 = vld [vmem:[%s7 + $0x3a0] sm:$0xff]
      %v1433 = vld [vmem:[%s7 + $0x3a8] sm:$0xff]
      %v1434 = vld [vmem:[%s7 + $0x3b0] sm:$0xff]
      %v1435 = vld [vmem:[%s7 + $0x3b8] sm:$0xff]
      %v1436 = vld [vmem:[%s7 + $0x3c0] sm:$0xff]
      %v1437 = vld [vmem:[%s7 + $0x3c8] sm:$0xff]
      %v1438 = vld [vmem:[%s7 + $0x3d0] sm:$0xff]
      %v1439 = vld [vmem:[%s7 + $0x3d8] sm:$0xff]
      %v1440 = vld [vmem:[%s7 + $0x3e0] sm:$0xff]
      %v1441 = vld [vmem:[%s7 + $0x3e8] sm:$0xff]
      %v1442 = vld [vmem:[%s7 + $0x3f0] sm:$0xff]
      %v1443 = vld [vmem:[%s7 + $0x3f8] sm:$0xff]
      %v1444 = vld [vmem:[%s7 + $0x400] sm:$0xff]
      %v1445 = vld [vmem:[%s7 + $0x408] sm:$0xff]
      %v1446 = vld [vmem:[%s7 + $0x410] sm:$0xff]
      %v1447 = vld [vmem:[%s7 + $0x418] sm:$0xff]
      %v1448 = vld [vmem:[%s7 + $0x420] sm:$0xff]
      %v1449 = vld [vmem:[%s7 + $0x428] sm:$0xff]
      %v1450 = vld [vmem:[%s7 + $0x430] sm:$0xff]
      %v1451 = vld [vmem:[%s7 + $0x438] sm:$0xff]
      %v1452 = vld [vmem:[%s7 + $0x440] sm:$0xff]
      %v1453 = vld [vmem:[%s7 + $0x448] sm:$0xff]
      %v1454 = vld [vmem:[%s7 + $0x450] sm:$0xff]
      %v1455 = vld [vmem:[%s7 + $0x458] sm:$0xff]
      %v1456 = vld [vmem:[%s7 + $0x460] sm:$0xff]
      %v1457 = vld [vmem:[%s7 + $0x468] sm:$0xff]
      %v1458 = vld [vmem:[%s7 + $0x470] sm:$0xff]
      %v1459 = vld [vmem:[%s7 + $0x478] sm:$0xff]
      %v1460 = vld [vmem:[%s7 + $0x480] sm:$0xff]
      %v1461 = vld [vmem:[%s7 + $0x488] sm:$0xff]
      %v1462 = vld [vmem:[%s7 + $0x490] sm:$0xff]
      %v1463 = vld [vmem:[%s7 + $0x498] sm:$0xff]
      %v1464 = vld [vmem:[%s7 + $0x4a0] sm:$0xff]
      %v1465 = vld [vmem:[%s7 + $0x4a8] sm:$0xff]
      %v1466 = vld [vmem:[%s7 + $0x4b0] sm:$0xff]
      %v1467 = vld [vmem:[%s7 + $0x4b8] sm:$0xff]
      %v1468 = vld [vmem:[%s7 + $0x4c0] sm:$0xff]
      %v1469 = vld [vmem:[%s7 + $0x4c8] sm:$0xff]
      %v1470 = vld [vmem:[%s7 + $0x4d0] sm:$0xff]
      %v1471 = vld [vmem:[%s7 + $0x4d8] sm:$0xff]
      %v1472 = vld [vmem:[%s7 + $0x4e0] sm:$0xff]
      %v1473 = vld [vmem:[%s7 + $0x4e8] sm:$0xff]
      %v1474 = vld [vmem:[%s7 + $0x4f0] sm:$0xff]
      %v1475 = vld [vmem:[%s7 + $0x4f8] sm:$0xff]
      %v1476 = vld [vmem:[%s7 + $0x500] sm:$0xff]
      %v1477 = vld [vmem:[%s7 + $0x508] sm:$0xff]
      %v1478 = vld [vmem:[%s7 + $0x510] sm:$0xff]
      %v1479 = vld [vmem:[%s7 + $0x518] sm:$0xff]
      %v1480 = vld [vmem:[%s7 + $0x520] sm:$0xff]
      %v1481 = vld [vmem:[%s7 + $0x528] sm:$0xff]
      %v1482 = vld [vmem:[%s7 + $0x530] sm:$0xff]
      %v1483 = vld [vmem:[%s7 + $0x538] sm:$0xff]
      %v1484 = vld [vmem:[%s7 + $0x540] sm:$0xff]
      %v1485 = vld [vmem:[%s7 + $0x548] sm:$0xff]
      %v1486 = vld [vmem:[%s7 + $0x550] sm:$0xff]
      %v1487 = vld [vmem:[%s7 + $0x558] sm:$0xff]
      %v1488 = vld [vmem:[%s7 + $0x560] sm:$0xff]
      %v1489 = vld [vmem:[%s7 + $0x568] sm:$0xff]
      %v1490 = vld [vmem:[%s7 + $0x570] sm:$0xff]
      %v1491 = vld [vmem:[%s7 + $0x578] sm:$0xff]
      %v1492 = vld [vmem:[%s7 + $0x580] sm:$0xff]
      %v1493 = vld [vmem:[%s7 + $0x588] sm:$0xff]
      %v1494 = vld [vmem:[%s7 + $0x590] sm:$0xff]
      %v1495 = vld [vmem:[%s7 + $0x598] sm:$0xff]
      %v1496 = vld [vmem:[%s7 + $0x5a0] sm:$0xff]
      %v1497 = vld [vmem:[%s7 + $0x5a8] sm:$0xff]
      %v1498 = vld [vmem:[%s7 + $0x5b0] sm:$0xff]
      %v1499 = vld [vmem:[%s7 + $0x5b8] sm:$0xff]
      %v1500 = vld [vmem:[%s7 + $0x5c0] sm:$0xff]
      %v1501 = vld [vmem:[%s7 + $0x5c8] sm:$0xff]
      %v1502 = vld [vmem:[%s7 + $0x5d0] sm:$0xff]
      %v1503 = vld [vmem:[%s7 + $0x5d8] sm:$0xff]
      %v1504 = vld [vmem:[%s7 + $0x5e0] sm:$0xff]
      %v1505 = vld [vmem:[%s7 + $0x5e8] sm:$0xff]
      %v1506 = vld [vmem:[%s7 + $0x5f0] sm:$0xff]
      %v1507 = vld [vmem:[%s7 + $0x5f8] sm:$0xff]
      %v1508 = vld [vmem:[%s7 + $0x600] sm:$0xff]
      %v1509 = vld [vmem:[%s7 + $0x608] sm:$0xff]
      %v1510 = vld [vmem:[%s7 + $0x610] sm:$0xff]
      %v1511 = vld [vmem:[%s7 + $0x618] sm:$0xff]
      %v1512 = vld [vmem:[%s7 + $0x620] sm:$0xff]
      %v1513 = vld [vmem:[%s7 + $0x628] sm:$0xff]
      %v1514 = vld [vmem:[%s7 + $0x630] sm:$0xff]
      %v1515 = vld [vmem:[%s7 + $0x638] sm:$0xff]
      %v1516 = vld [vmem:[%s7 + $0x640] sm:$0xff]
      %v1517 = vld [vmem:[%s7 + $0x648] sm:$0xff]
      %v1518 = vld [vmem:[%s7 + $0x650] sm:$0xff]
      %v1519 = vld [vmem:[%s7 + $0x658] sm:$0xff]
      %v1520 = vld [vmem:[%s7 + $0x660] sm:$0xff]
      %v1521 = vld [vmem:[%s7 + $0x668] sm:$0xff]
      %v1522 = vld [vmem:[%s7 + $0x670] sm:$0xff]
      %v1523 = vld [vmem:[%s7 + $0x678] sm:$0xff]
      %v1524 = vld [vmem:[%s7 + $0x680] sm:$0xff]
      %v1525 = vld [vmem:[%s7 + $0x688] sm:$0xff]
      %v1526 = vld [vmem:[%s7 + $0x690] sm:$0xff]
      %v1527 = vld [vmem:[%s7 + $0x698] sm:$0xff]
      %v1528 = vld [vmem:[%s7 + $0x6a0] sm:$0xff]
      %v1529 = vld [vmem:[%s7 + $0x6a8] sm:$0xff]
      %v1530 = vld [vmem:[%s7 + $0x6b0] sm:$0xff]
      %v1531 = vld [vmem:[%s7 + $0x6b8] sm:$0xff]
      %v1532 = vld [vmem:[%s7 + $0x6c0] sm:$0xff]
      %v1533 = vld [vmem:[%s7 + $0x6c8] sm:$0xff]
      %v1534 = vld [vmem:[%s7 + $0x6d0] sm:$0xff]
      %v1535 = vld [vmem:[%s7 + $0x6d8] sm:$0xff]
      %v1536 = vld [vmem:[%s7 + $0x6e0] sm:$0xff]
      %v1537 = vld [vmem:[%s7 + $0x6e8] sm:$0xff]
      %v1538 = vld [vmem:[%s7 + $0x6f0] sm:$0xff]
      %v1539 = vld [vmem:[%s7 + $0x6f8] sm:$0xff]
      %v1540 = vld [vmem:[%s7 + $0x700] sm:$0xff]
      %v1541 = vld [vmem:[%s7 + $0x708] sm:$0xff]
      %v1542 = vld [vmem:[%s7 + $0x710] sm:$0xff]
      %v1543 = vld [vmem:[%s7 + $0x718] sm:$0xff]
      %v1544 = vld [vmem:[%s7 + $0x720] sm:$0xff]
      %v1545 = vld [vmem:[%s7 + $0x728] sm:$0xff]
      %v1546 = vld [vmem:[%s7 + $0x730] sm:$0xff]
      %v1547 = vld [vmem:[%s7 + $0x738] sm:$0xff]
      %v1548 = vld [vmem:[%s7 + $0x740] sm:$0xff]
      %v1549 = vld [vmem:[%s7 + $0x748] sm:$0xff]
      %v1550 = vld [vmem:[%s7 + $0x750] sm:$0xff]
      %v1551 = vld [vmem:[%s7 + $0x758] sm:$0xff]
      %v1552 = vld [vmem:[%s7 + $0x760] sm:$0xff]
      %v1553 = vld [vmem:[%s7 + $0x768] sm:$0xff]
      %v1554 = vld [vmem:[%s7 + $0x770] sm:$0xff]
      %v1555 = vld [vmem:[%s7 + $0x778] sm:$0xff]
      %v1556 = vld [vmem:[%s7 + $0x780] sm:$0xff]
      %v1557 = vld [vmem:[%s7 + $0x788] sm:$0xff]
      %v1558 = vld [vmem:[%s7 + $0x790] sm:$0xff]
      %v1559 = vld [vmem:[%s7 + $0x798] sm:$0xff]
      %v1560 = vld [vmem:[%s7 + $0x7a0] sm:$0xff]
      %v1561 = vld [vmem:[%s7 + $0x7a8] sm:$0xff]
      %v1562 = vld [vmem:[%s7 + $0x7b0] sm:$0xff]
      %v1563 = vld [vmem:[%s7 + $0x7b8] sm:$0xff]
      %v1564 = vld [vmem:[%s7 + $0x7c0] sm:$0xff]
      %v1565 = vld [vmem:[%s7 + $0x7c8] sm:$0xff]
      %v1566 = vld [vmem:[%s7 + $0x7d0] sm:$0xff]
      %v1567 = vld [vmem:[%s7 + $0x7d8] sm:$0xff]
      %v1568 = vld [vmem:[%s7 + $0x7e0] sm:$0xff]
      %v1569 = vld [vmem:[%s7 + $0x7e8] sm:$0xff]
      %v1570 = vld [vmem:[%s7 + $0x7f0] sm:$0xff]
      %v1571 = vld [vmem:[%s7 + $0x7f8] sm:$0xff]
      %v1572 = vld [vmem:[%s8] sm:$0xf]
      %v1574 = vlaneseq
      %v1575 = vshrl.u32 %v1574, 7
      %v1576 = vsub.s32 0, %v1575
      %v1577 = vrot.slane %v1572, %v1576
      %v1578 = vlaneseq
      %v1579 = vshrl.u32 %v1578, 7
      %v1580 = vsub.s32 1, %v1579
      %v1581 = vrot.slane %v1572, %v1580
      %v1582 = vlaneseq
      %v1583 = vshrl.u32 %v1582, 7
      %v1584 = vsub.s32 2, %v1583
      %v1585 = vrot.slane %v1572, %v1584
      %v1586 = vlaneseq
      %v1587 = vshrl.u32 %v1586, 7
      %v1588 = vsub.s32 3, %v1587
      %v1589 = vrot.slane %v1572, %v1588
      %v1850 = vunpack.c.l.b16 %v1316
      %v1851 = vunpack.c.h.b16 %v1316
      %v1852 = vunpack.c.l.b16 %v1317
      %v1853 = vunpack.c.h.b16 %v1317
      %v1854 = vunpack.c.l.b16 %v1318
      %v1855 = vunpack.c.h.b16 %v1318
      %v1856 = vunpack.c.l.b16 %v1319
      %v1857 = vunpack.c.h.b16 %v1319
      %v1858 = vunpack.c.l.b16 %v1320
      %v1859 = vunpack.c.h.b16 %v1320
      %v1860 = vunpack.c.l.b16 %v1321
      %v1861 = vunpack.c.h.b16 %v1321
      %v1862 = vunpack.c.l.b16 %v1322
      %v1863 = vunpack.c.h.b16 %v1322
      %v1864 = vunpack.c.l.b16 %v1323
      %v1865 = vunpack.c.h.b16 %v1323
      %v1866 = vunpack.c.l.b16 %v1324
      %v1867 = vunpack.c.h.b16 %v1324
      %v1868 = vunpack.c.l.b16 %v1325
      %v1869 = vunpack.c.h.b16 %v1325
      %v1870 = vunpack.c.l.b16 %v1326
      %v1871 = vunpack.c.h.b16 %v1326
      %v1872 = vunpack.c.l.b16 %v1327
      %v1873 = vunpack.c.h.b16 %v1327
      %v1874 = vunpack.c.l.b16 %v1328
      %v1875 = vunpack.c.h.b16 %v1328
      %v1876 = vunpack.c.l.b16 %v1329
      %v1877 = vunpack.c.h.b16 %v1329
      %v1878 = vunpack.c.l.b16 %v1330
      %v1879 = vunpack.c.h.b16 %v1330
      %v1880 = vunpack.c.l.b16 %v1331
      %v1881 = vunpack.c.h.b16 %v1331
      %v1882 = vunpack.c.l.b16 %v1332
      %v1883 = vunpack.c.h.b16 %v1332
      %v1884 = vunpack.c.l.b16 %v1333
      %v1885 = vunpack.c.h.b16 %v1333
      %v1886 = vunpack.c.l.b16 %v1334
      %v1887 = vunpack.c.h.b16 %v1334
      %v1888 = vunpack.c.l.b16 %v1335
      %v1889 = vunpack.c.h.b16 %v1335
      %v1890 = vunpack.c.l.b16 %v1336
      %v1891 = vunpack.c.h.b16 %v1336
      %v1892 = vunpack.c.l.b16 %v1337
      %v1893 = vunpack.c.h.b16 %v1337
      %v1894 = vunpack.c.l.b16 %v1338
      %v1895 = vunpack.c.h.b16 %v1338
      %v1896 = vunpack.c.l.b16 %v1339
      %v1897 = vunpack.c.h.b16 %v1339
      %v1898 = vunpack.c.l.b16 %v1340
      %v1899 = vunpack.c.h.b16 %v1340
      %v1900 = vunpack.c.l.b16 %v1341
      %v1901 = vunpack.c.h.b16 %v1341
      %v1902 = vunpack.c.l.b16 %v1342
      %v1903 = vunpack.c.h.b16 %v1342
      %v1904 = vunpack.c.l.b16 %v1343
      %v1905 = vunpack.c.h.b16 %v1343
      %v1906 = vunpack.c.l.b16 %v1344
      %v1907 = vunpack.c.h.b16 %v1344
      %v1908 = vunpack.c.l.b16 %v1345
      %v1909 = vunpack.c.h.b16 %v1345
      %v1910 = vunpack.c.l.b16 %v1346
      %v1911 = vunpack.c.h.b16 %v1346
      %v1912 = vunpack.c.l.b16 %v1347
      %v1913 = vunpack.c.h.b16 %v1347
      %v1914 = vunpack.c.l.b16 %v1348
      %v1915 = vunpack.c.h.b16 %v1348
      %v1916 = vunpack.c.l.b16 %v1349
      %v1917 = vunpack.c.h.b16 %v1349
      %v1918 = vunpack.c.l.b16 %v1350
      %v1919 = vunpack.c.h.b16 %v1350
      %v1920 = vunpack.c.l.b16 %v1351
      %v1921 = vunpack.c.h.b16 %v1351
      %v1922 = vunpack.c.l.b16 %v1352
      %v1923 = vunpack.c.h.b16 %v1352
      %v1924 = vunpack.c.l.b16 %v1353
      %v1925 = vunpack.c.h.b16 %v1353
      %v1926 = vunpack.c.l.b16 %v1354
      %v1927 = vunpack.c.h.b16 %v1354
      %v1928 = vunpack.c.l.b16 %v1355
      %v1929 = vunpack.c.h.b16 %v1355
      %v1930 = vunpack.c.l.b16 %v1356
      %v1931 = vunpack.c.h.b16 %v1356
      %v1932 = vunpack.c.l.b16 %v1357
      %v1933 = vunpack.c.h.b16 %v1357
      %v1934 = vunpack.c.l.b16 %v1358
      %v1935 = vunpack.c.h.b16 %v1358
      %v1936 = vunpack.c.l.b16 %v1359
      %v1937 = vunpack.c.h.b16 %v1359
      %v1938 = vunpack.c.l.b16 %v1360
      %v1939 = vunpack.c.h.b16 %v1360
      %v1940 = vunpack.c.l.b16 %v1361
      %v1941 = vunpack.c.h.b16 %v1361
      %v1942 = vunpack.c.l.b16 %v1362
      %v1943 = vunpack.c.h.b16 %v1362
      %v1944 = vunpack.c.l.b16 %v1363
      %v1945 = vunpack.c.h.b16 %v1363
      %v1946 = vunpack.c.l.b16 %v1364
      %v1947 = vunpack.c.h.b16 %v1364
      %v1948 = vunpack.c.l.b16 %v1365
      %v1949 = vunpack.c.h.b16 %v1365
      %v1950 = vunpack.c.l.b16 %v1366
      %v1951 = vunpack.c.h.b16 %v1366
      %v1952 = vunpack.c.l.b16 %v1367
      %v1953 = vunpack.c.h.b16 %v1367
      %v1954 = vunpack.c.l.b16 %v1368
      %v1955 = vunpack.c.h.b16 %v1368
      %v1956 = vunpack.c.l.b16 %v1369
      %v1957 = vunpack.c.h.b16 %v1369
      %v1958 = vunpack.c.l.b16 %v1370
      %v1959 = vunpack.c.h.b16 %v1370
      %v1960 = vunpack.c.l.b16 %v1371
      %v1961 = vunpack.c.h.b16 %v1371
      %v1962 = vunpack.c.l.b16 %v1372
      %v1963 = vunpack.c.h.b16 %v1372
      %v1964 = vunpack.c.l.b16 %v1373
      %v1965 = vunpack.c.h.b16 %v1373
      %v1966 = vunpack.c.l.b16 %v1374
      %v1967 = vunpack.c.h.b16 %v1374
      %v1968 = vunpack.c.l.b16 %v1375
      %v1969 = vunpack.c.h.b16 %v1375
      %v1970 = vunpack.c.l.b16 %v1376
      %v1971 = vunpack.c.h.b16 %v1376
      %v1972 = vunpack.c.l.b16 %v1377
      %v1973 = vunpack.c.h.b16 %v1377
      %v1974 = vunpack.c.l.b16 %v1378
      %v1975 = vunpack.c.h.b16 %v1378
      %v1976 = vunpack.c.l.b16 %v1379
      %v1977 = vunpack.c.h.b16 %v1379
      %v1978 = vunpack.c.l.b16 %v1380
      %v1979 = vunpack.c.h.b16 %v1380
      %v1980 = vunpack.c.l.b16 %v1381
      %v1981 = vunpack.c.h.b16 %v1381
      %v1982 = vunpack.c.l.b16 %v1382
      %v1983 = vunpack.c.h.b16 %v1382
      %v1984 = vunpack.c.l.b16 %v1383
      %v1985 = vunpack.c.h.b16 %v1383
      %v1986 = vunpack.c.l.b16 %v1384
      %v1987 = vunpack.c.h.b16 %v1384
      %v1988 = vunpack.c.l.b16 %v1385
      %v1989 = vunpack.c.h.b16 %v1385
      %v1990 = vunpack.c.l.b16 %v1386
      %v1991 = vunpack.c.h.b16 %v1386
      %v1992 = vunpack.c.l.b16 %v1387
      %v1993 = vunpack.c.h.b16 %v1387
      %v1994 = vunpack.c.l.b16 %v1388
      %v1995 = vunpack.c.h.b16 %v1388
      %v1996 = vunpack.c.l.b16 %v1389
      %v1997 = vunpack.c.h.b16 %v1389
      %v1998 = vunpack.c.l.b16 %v1390
      %v1999 = vunpack.c.h.b16 %v1390
      %v2000 = vunpack.c.l.b16 %v1391
      %v2001 = vunpack.c.h.b16 %v1391
      %v2002 = vunpack.c.l.b16 %v1392
      %v2003 = vunpack.c.h.b16 %v1392
      %v2004 = vunpack.c.l.b16 %v1393
      %v2005 = vunpack.c.h.b16 %v1393
      %v2006 = vunpack.c.l.b16 %v1394
      %v2007 = vunpack.c.h.b16 %v1394
      %v2008 = vunpack.c.l.b16 %v1395
      %v2009 = vunpack.c.h.b16 %v1395
      %v2010 = vunpack.c.l.b16 %v1396
      %v2011 = vunpack.c.h.b16 %v1396
      %v2012 = vunpack.c.l.b16 %v1397
      %v2013 = vunpack.c.h.b16 %v1397
      %v2014 = vunpack.c.l.b16 %v1398
      %v2015 = vunpack.c.h.b16 %v1398
      %v2016 = vunpack.c.l.b16 %v1399
      %v2017 = vunpack.c.h.b16 %v1399
      %v2018 = vunpack.c.l.b16 %v1400
      %v2019 = vunpack.c.h.b16 %v1400
      %v2020 = vunpack.c.l.b16 %v1401
      %v2021 = vunpack.c.h.b16 %v1401
      %v2022 = vunpack.c.l.b16 %v1402
      %v2023 = vunpack.c.h.b16 %v1402
      %v2024 = vunpack.c.l.b16 %v1403
      %v2025 = vunpack.c.h.b16 %v1403
      %v2026 = vunpack.c.l.b16 %v1404
      %v2027 = vunpack.c.h.b16 %v1404
      %v2028 = vunpack.c.l.b16 %v1405
      %v2029 = vunpack.c.h.b16 %v1405
      %v2030 = vunpack.c.l.b16 %v1406
      %v2031 = vunpack.c.h.b16 %v1406
      %v2032 = vunpack.c.l.b16 %v1407
      %v2033 = vunpack.c.h.b16 %v1407
      %v2034 = vunpack.c.l.b16 %v1408
      %v2035 = vunpack.c.h.b16 %v1408
      %v2036 = vunpack.c.l.b16 %v1409
      %v2037 = vunpack.c.h.b16 %v1409
      %v2038 = vunpack.c.l.b16 %v1410
      %v2039 = vunpack.c.h.b16 %v1410
      %v2040 = vunpack.c.l.b16 %v1411
      %v2041 = vunpack.c.h.b16 %v1411
      %v2042 = vunpack.c.l.b16 %v1412
      %v2043 = vunpack.c.h.b16 %v1412
      %v2044 = vunpack.c.l.b16 %v1413
      %v2045 = vunpack.c.h.b16 %v1413
      %v2046 = vunpack.c.l.b16 %v1414
      %v2047 = vunpack.c.h.b16 %v1414
      %v2048 = vunpack.c.l.b16 %v1415
      %v2049 = vunpack.c.h.b16 %v1415
      %v2050 = vunpack.c.l.b16 %v1416
      %v2051 = vunpack.c.h.b16 %v1416
      %v2052 = vunpack.c.l.b16 %v1417
      %v2053 = vunpack.c.h.b16 %v1417
      %v2054 = vunpack.c.l.b16 %v1418
      %v2055 = vunpack.c.h.b16 %v1418
      %v2056 = vunpack.c.l.b16 %v1419
      %v2057 = vunpack.c.h.b16 %v1419
      %v2058 = vunpack.c.l.b16 %v1420
      %v2059 = vunpack.c.h.b16 %v1420
      %v2060 = vunpack.c.l.b16 %v1421
      %v2061 = vunpack.c.h.b16 %v1421
      %v2062 = vunpack.c.l.b16 %v1422
      %v2063 = vunpack.c.h.b16 %v1422
      %v2064 = vunpack.c.l.b16 %v1423
      %v2065 = vunpack.c.h.b16 %v1423
      %v2066 = vunpack.c.l.b16 %v1424
      %v2067 = vunpack.c.h.b16 %v1424
      %v2068 = vunpack.c.l.b16 %v1425
      %v2069 = vunpack.c.h.b16 %v1425
      %v2070 = vunpack.c.l.b16 %v1426
      %v2071 = vunpack.c.h.b16 %v1426
      %v2072 = vunpack.c.l.b16 %v1427
      %v2073 = vunpack.c.h.b16 %v1427
      %v2074 = vunpack.c.l.b16 %v1428
      %v2075 = vunpack.c.h.b16 %v1428
      %v2076 = vunpack.c.l.b16 %v1429
      %v2077 = vunpack.c.h.b16 %v1429
      %v2078 = vunpack.c.l.b16 %v1430
      %v2079 = vunpack.c.h.b16 %v1430
      %v2080 = vunpack.c.l.b16 %v1431
      %v2081 = vunpack.c.h.b16 %v1431
      %v2082 = vunpack.c.l.b16 %v1432
      %v2083 = vunpack.c.h.b16 %v1432
      %v2084 = vunpack.c.l.b16 %v1433
      %v2085 = vunpack.c.h.b16 %v1433
      %v2086 = vunpack.c.l.b16 %v1434
      %v2087 = vunpack.c.h.b16 %v1434
      %v2088 = vunpack.c.l.b16 %v1435
      %v2089 = vunpack.c.h.b16 %v1435
      %v2090 = vunpack.c.l.b16 %v1436
      %v2091 = vunpack.c.h.b16 %v1436
      %v2092 = vunpack.c.l.b16 %v1437
      %v2093 = vunpack.c.h.b16 %v1437
      %v2094 = vunpack.c.l.b16 %v1438
      %v2095 = vunpack.c.h.b16 %v1438
      %v2096 = vunpack.c.l.b16 %v1439
      %v2097 = vunpack.c.h.b16 %v1439
      %v2098 = vunpack.c.l.b16 %v1440
      %v2099 = vunpack.c.h.b16 %v1440
      %v2100 = vunpack.c.l.b16 %v1441
      %v2101 = vunpack.c.h.b16 %v1441
      %v2102 = vunpack.c.l.b16 %v1442
      %v2103 = vunpack.c.h.b16 %v1442
      %v2104 = vunpack.c.l.b16 %v1443
      %v2105 = vunpack.c.h.b16 %v1443
      %v2106 = vunpack.c.l.b16 %v1444
      %v2107 = vunpack.c.h.b16 %v1444
      %v2108 = vunpack.c.l.b16 %v1445
      %v2109 = vunpack.c.h.b16 %v1445
      %v2110 = vunpack.c.l.b16 %v1446
      %v2111 = vunpack.c.h.b16 %v1446
      %v2112 = vunpack.c.l.b16 %v1447
      %v2113 = vunpack.c.h.b16 %v1447
      %v2114 = vunpack.c.l.b16 %v1448
      %v2115 = vunpack.c.h.b16 %v1448
      %v2116 = vunpack.c.l.b16 %v1449
      %v2117 = vunpack.c.h.b16 %v1449
      %v2118 = vunpack.c.l.b16 %v1450
      %v2119 = vunpack.c.h.b16 %v1450
      %v2120 = vunpack.c.l.b16 %v1451
      %v2121 = vunpack.c.h.b16 %v1451
      %v2122 = vunpack.c.l.b16 %v1452
      %v2123 = vunpack.c.h.b16 %v1452
      %v2124 = vunpack.c.l.b16 %v1453
      %v2125 = vunpack.c.h.b16 %v1453
      %v2126 = vunpack.c.l.b16 %v1454
      %v2127 = vunpack.c.h.b16 %v1454
      %v2128 = vunpack.c.l.b16 %v1455
      %v2129 = vunpack.c.h.b16 %v1455
      %v2130 = vunpack.c.l.b16 %v1456
      %v2131 = vunpack.c.h.b16 %v1456
      %v2132 = vunpack.c.l.b16 %v1457
      %v2133 = vunpack.c.h.b16 %v1457
      %v2134 = vunpack.c.l.b16 %v1458
      %v2135 = vunpack.c.h.b16 %v1458
      %v2136 = vunpack.c.l.b16 %v1459
      %v2137 = vunpack.c.h.b16 %v1459
      %v2138 = vunpack.c.l.b16 %v1460
      %v2139 = vunpack.c.h.b16 %v1460
      %v2140 = vunpack.c.l.b16 %v1461
      %v2141 = vunpack.c.h.b16 %v1461
      %v2142 = vunpack.c.l.b16 %v1462
      %v2143 = vunpack.c.h.b16 %v1462
      %v2144 = vunpack.c.l.b16 %v1463
      %v2145 = vunpack.c.h.b16 %v1463
      %v2146 = vunpack.c.l.b16 %v1464
      %v2147 = vunpack.c.h.b16 %v1464
      %v2148 = vunpack.c.l.b16 %v1465
      %v2149 = vunpack.c.h.b16 %v1465
      %v2150 = vunpack.c.l.b16 %v1466
      %v2151 = vunpack.c.h.b16 %v1466
      %v2152 = vunpack.c.l.b16 %v1467
      %v2153 = vunpack.c.h.b16 %v1467
      %v2154 = vunpack.c.l.b16 %v1468
      %v2155 = vunpack.c.h.b16 %v1468
      %v2156 = vunpack.c.l.b16 %v1469
      %v2157 = vunpack.c.h.b16 %v1469
      %v2158 = vunpack.c.l.b16 %v1470
      %v2159 = vunpack.c.h.b16 %v1470
      %v2160 = vunpack.c.l.b16 %v1471
      %v2161 = vunpack.c.h.b16 %v1471
      %v2162 = vunpack.c.l.b16 %v1472
      %v2163 = vunpack.c.h.b16 %v1472
      %v2164 = vunpack.c.l.b16 %v1473
      %v2165 = vunpack.c.h.b16 %v1473
      %v2166 = vunpack.c.l.b16 %v1474
      %v2167 = vunpack.c.h.b16 %v1474
      %v2168 = vunpack.c.l.b16 %v1475
      %v2169 = vunpack.c.h.b16 %v1475
      %v2170 = vunpack.c.l.b16 %v1476
      %v2171 = vunpack.c.h.b16 %v1476
      %v2172 = vunpack.c.l.b16 %v1477
      %v2173 = vunpack.c.h.b16 %v1477
      %v2174 = vunpack.c.l.b16 %v1478
      %v2175 = vunpack.c.h.b16 %v1478
      %v2176 = vunpack.c.l.b16 %v1479
      %v2177 = vunpack.c.h.b16 %v1479
      %v2178 = vunpack.c.l.b16 %v1480
      %v2179 = vunpack.c.h.b16 %v1480
      %v2180 = vunpack.c.l.b16 %v1481
      %v2181 = vunpack.c.h.b16 %v1481
      %v2182 = vunpack.c.l.b16 %v1482
      %v2183 = vunpack.c.h.b16 %v1482
      %v2184 = vunpack.c.l.b16 %v1483
      %v2185 = vunpack.c.h.b16 %v1483
      %v2186 = vunpack.c.l.b16 %v1484
      %v2187 = vunpack.c.h.b16 %v1484
      %v2188 = vunpack.c.l.b16 %v1485
      %v2189 = vunpack.c.h.b16 %v1485
      %v2190 = vunpack.c.l.b16 %v1486
      %v2191 = vunpack.c.h.b16 %v1486
      %v2192 = vunpack.c.l.b16 %v1487
      %v2193 = vunpack.c.h.b16 %v1487
      %v2194 = vunpack.c.l.b16 %v1488
      %v2195 = vunpack.c.h.b16 %v1488
      %v2196 = vunpack.c.l.b16 %v1489
      %v2197 = vunpack.c.h.b16 %v1489
      %v2198 = vunpack.c.l.b16 %v1490
      %v2199 = vunpack.c.h.b16 %v1490
      %v2200 = vunpack.c.l.b16 %v1491
      %v2201 = vunpack.c.h.b16 %v1491
      %v2202 = vunpack.c.l.b16 %v1492
      %v2203 = vunpack.c.h.b16 %v1492
      %v2204 = vunpack.c.l.b16 %v1493
      %v2205 = vunpack.c.h.b16 %v1493
      %v2206 = vunpack.c.l.b16 %v1494
      %v2207 = vunpack.c.h.b16 %v1494
      %v2208 = vunpack.c.l.b16 %v1495
      %v2209 = vunpack.c.h.b16 %v1495
      %v2210 = vunpack.c.l.b16 %v1496
      %v2211 = vunpack.c.h.b16 %v1496
      %v2212 = vunpack.c.l.b16 %v1497
      %v2213 = vunpack.c.h.b16 %v1497
      %v2214 = vunpack.c.l.b16 %v1498
      %v2215 = vunpack.c.h.b16 %v1498
      %v2216 = vunpack.c.l.b16 %v1499
      %v2217 = vunpack.c.h.b16 %v1499
      %v2218 = vunpack.c.l.b16 %v1500
      %v2219 = vunpack.c.h.b16 %v1500
      %v2220 = vunpack.c.l.b16 %v1501
      %v2221 = vunpack.c.h.b16 %v1501
      %v2222 = vunpack.c.l.b16 %v1502
      %v2223 = vunpack.c.h.b16 %v1502
      %v2224 = vunpack.c.l.b16 %v1503
      %v2225 = vunpack.c.h.b16 %v1503
      %v2226 = vunpack.c.l.b16 %v1504
      %v2227 = vunpack.c.h.b16 %v1504
      %v2228 = vunpack.c.l.b16 %v1505
      %v2229 = vunpack.c.h.b16 %v1505
      %v2230 = vunpack.c.l.b16 %v1506
      %v2231 = vunpack.c.h.b16 %v1506
      %v2232 = vunpack.c.l.b16 %v1507
      %v2233 = vunpack.c.h.b16 %v1507
      %v2234 = vunpack.c.l.b16 %v1508
      %v2235 = vunpack.c.h.b16 %v1508
      %v2236 = vunpack.c.l.b16 %v1509
      %v2237 = vunpack.c.h.b16 %v1509
      %v2238 = vunpack.c.l.b16 %v1510
      %v2239 = vunpack.c.h.b16 %v1510
      %v2240 = vunpack.c.l.b16 %v1511
      %v2241 = vunpack.c.h.b16 %v1511
      %v2242 = vunpack.c.l.b16 %v1512
      %v2243 = vunpack.c.h.b16 %v1512
      %v2244 = vunpack.c.l.b16 %v1513
      %v2245 = vunpack.c.h.b16 %v1513
      %v2246 = vunpack.c.l.b16 %v1514
      %v2247 = vunpack.c.h.b16 %v1514
      %v2248 = vunpack.c.l.b16 %v1515
      %v2249 = vunpack.c.h.b16 %v1515
      %v2250 = vunpack.c.l.b16 %v1516
      %v2251 = vunpack.c.h.b16 %v1516
      %v2252 = vunpack.c.l.b16 %v1517
      %v2253 = vunpack.c.h.b16 %v1517
      %v2254 = vunpack.c.l.b16 %v1518
      %v2255 = vunpack.c.h.b16 %v1518
      %v2256 = vunpack.c.l.b16 %v1519
      %v2257 = vunpack.c.h.b16 %v1519
      %v2258 = vunpack.c.l.b16 %v1520
      %v2259 = vunpack.c.h.b16 %v1520
      %v2260 = vunpack.c.l.b16 %v1521
      %v2261 = vunpack.c.h.b16 %v1521
      %v2262 = vunpack.c.l.b16 %v1522
      %v2263 = vunpack.c.h.b16 %v1522
      %v2264 = vunpack.c.l.b16 %v1523
      %v2265 = vunpack.c.h.b16 %v1523
      %v2266 = vunpack.c.l.b16 %v1524
      %v2267 = vunpack.c.h.b16 %v1524
      %v2268 = vunpack.c.l.b16 %v1525
      %v2269 = vunpack.c.h.b16 %v1525
      %v2270 = vunpack.c.l.b16 %v1526
      %v2271 = vunpack.c.h.b16 %v1526
      %v2272 = vunpack.c.l.b16 %v1527
      %v2273 = vunpack.c.h.b16 %v1527
      %v2274 = vunpack.c.l.b16 %v1528
      %v2275 = vunpack.c.h.b16 %v1528
      %v2276 = vunpack.c.l.b16 %v1529
      %v2277 = vunpack.c.h.b16 %v1529
      %v2278 = vunpack.c.l.b16 %v1530
      %v2279 = vunpack.c.h.b16 %v1530
      %v2280 = vunpack.c.l.b16 %v1531
      %v2281 = vunpack.c.h.b16 %v1531
      %v2282 = vunpack.c.l.b16 %v1532
      %v2283 = vunpack.c.h.b16 %v1532
      %v2284 = vunpack.c.l.b16 %v1533
      %v2285 = vunpack.c.h.b16 %v1533
      %v2286 = vunpack.c.l.b16 %v1534
      %v2287 = vunpack.c.h.b16 %v1534
      %v2288 = vunpack.c.l.b16 %v1535
      %v2289 = vunpack.c.h.b16 %v1535
      %v2290 = vunpack.c.l.b16 %v1536
      %v2291 = vunpack.c.h.b16 %v1536
      %v2292 = vunpack.c.l.b16 %v1537
      %v2293 = vunpack.c.h.b16 %v1537
      %v2294 = vunpack.c.l.b16 %v1538
      %v2295 = vunpack.c.h.b16 %v1538
      %v2296 = vunpack.c.l.b16 %v1539
      %v2297 = vunpack.c.h.b16 %v1539
      %v2298 = vunpack.c.l.b16 %v1540
      %v2299 = vunpack.c.h.b16 %v1540
      %v2300 = vunpack.c.l.b16 %v1541
      %v2301 = vunpack.c.h.b16 %v1541
      %v2302 = vunpack.c.l.b16 %v1542
      %v2303 = vunpack.c.h.b16 %v1542
      %v2304 = vunpack.c.l.b16 %v1543
      %v2305 = vunpack.c.h.b16 %v1543
      %v2306 = vunpack.c.l.b16 %v1544
      %v2307 = vunpack.c.h.b16 %v1544
      %v2308 = vunpack.c.l.b16 %v1545
      %v2309 = vunpack.c.h.b16 %v1545
      %v2310 = vunpack.c.l.b16 %v1546
      %v2311 = vunpack.c.h.b16 %v1546
      %v2312 = vunpack.c.l.b16 %v1547
      %v2313 = vunpack.c.h.b16 %v1547
      %v2314 = vunpack.c.l.b16 %v1548
      %v2315 = vunpack.c.h.b16 %v1548
      %v2316 = vunpack.c.l.b16 %v1549
      %v2317 = vunpack.c.h.b16 %v1549
      %v2318 = vunpack.c.l.b16 %v1550
      %v2319 = vunpack.c.h.b16 %v1550
      %v2320 = vunpack.c.l.b16 %v1551
      %v2321 = vunpack.c.h.b16 %v1551
      %v2322 = vunpack.c.l.b16 %v1552
      %v2323 = vunpack.c.h.b16 %v1552
      %v2324 = vunpack.c.l.b16 %v1553
      %v2325 = vunpack.c.h.b16 %v1553
      %v2326 = vunpack.c.l.b16 %v1554
      %v2327 = vunpack.c.h.b16 %v1554
      %v2328 = vunpack.c.l.b16 %v1555
      %v2329 = vunpack.c.h.b16 %v1555
      %v2330 = vunpack.c.l.b16 %v1556
      %v2331 = vunpack.c.h.b16 %v1556
      %v2332 = vunpack.c.l.b16 %v1557
      %v2333 = vunpack.c.h.b16 %v1557
      %v2334 = vunpack.c.l.b16 %v1558
      %v2335 = vunpack.c.h.b16 %v1558
      %v2336 = vunpack.c.l.b16 %v1559
      %v2337 = vunpack.c.h.b16 %v1559
      %v2338 = vunpack.c.l.b16 %v1560
      %v2339 = vunpack.c.h.b16 %v1560
      %v2340 = vunpack.c.l.b16 %v1561
      %v2341 = vunpack.c.h.b16 %v1561
      %v2342 = vunpack.c.l.b16 %v1562
      %v2343 = vunpack.c.h.b16 %v1562
      %v2344 = vunpack.c.l.b16 %v1563
      %v2345 = vunpack.c.h.b16 %v1563
      %v2346 = vunpack.c.l.b16 %v1564
      %v2347 = vunpack.c.h.b16 %v1564
      %v2348 = vunpack.c.l.b16 %v1565
      %v2349 = vunpack.c.h.b16 %v1565
      %v2350 = vunpack.c.l.b16 %v1566
      %v2351 = vunpack.c.h.b16 %v1566
      %v2352 = vunpack.c.l.b16 %v1567
      %v2353 = vunpack.c.h.b16 %v1567
      %v2354 = vunpack.c.l.b16 %v1568
      %v2355 = vunpack.c.h.b16 %v1568
      %v2356 = vunpack.c.l.b16 %v1569
      %v2357 = vunpack.c.h.b16 %v1569
      %v2358 = vunpack.c.l.b16 %v1570
      %v2359 = vunpack.c.h.b16 %v1570
      %v2360 = vunpack.c.l.b16 %v1571
      %v2361 = vunpack.c.h.b16 %v1571
      %v2362 = vpack.c.b16 %v1854, %v1850
      %v2363 = vpack.c.b16 %v1855, %v1851
      %v2364 = vpack.c.b16 %v1856, %v1852
      %v2365 = vpack.c.b16 %v1857, %v1853
      %v2366 = vpack.c.b16 %v1862, %v1858
      %v2367 = vpack.c.b16 %v1863, %v1859
      %v2368 = vpack.c.b16 %v1864, %v1860
      %v2369 = vpack.c.b16 %v1865, %v1861
      %v2370 = vpack.c.b16 %v1870, %v1866
      %v2371 = vpack.c.b16 %v1871, %v1867
      %v2372 = vpack.c.b16 %v1872, %v1868
      %v2373 = vpack.c.b16 %v1873, %v1869
      %v2374 = vpack.c.b16 %v1878, %v1874
      %v2375 = vpack.c.b16 %v1879, %v1875
      %v2376 = vpack.c.b16 %v1880, %v1876
      %v2377 = vpack.c.b16 %v1881, %v1877
      %v2378 = vpack.c.b16 %v1886, %v1882
      %v2379 = vpack.c.b16 %v1887, %v1883
      %v2380 = vpack.c.b16 %v1888, %v1884
      %v2381 = vpack.c.b16 %v1889, %v1885
      %v2382 = vpack.c.b16 %v1894, %v1890
      %v2383 = vpack.c.b16 %v1895, %v1891
      %v2384 = vpack.c.b16 %v1896, %v1892
      %v2385 = vpack.c.b16 %v1897, %v1893
      %v2386 = vpack.c.b16 %v1902, %v1898
      %v2387 = vpack.c.b16 %v1903, %v1899
      %v2388 = vpack.c.b16 %v1904, %v1900
      %v2389 = vpack.c.b16 %v1905, %v1901
      %v2390 = vpack.c.b16 %v1910, %v1906
      %v2391 = vpack.c.b16 %v1911, %v1907
      %v2392 = vpack.c.b16 %v1912, %v1908
      %v2393 = vpack.c.b16 %v1913, %v1909
      %v2394 = vpack.c.b16 %v1918, %v1914
      %v2395 = vpack.c.b16 %v1919, %v1915
      %v2396 = vpack.c.b16 %v1920, %v1916
      %v2397 = vpack.c.b16 %v1921, %v1917
      %v2398 = vpack.c.b16 %v1926, %v1922
      %v2399 = vpack.c.b16 %v1927, %v1923
      %v2400 = vpack.c.b16 %v1928, %v1924
      %v2401 = vpack.c.b16 %v1929, %v1925
      %v2402 = vpack.c.b16 %v1934, %v1930
      %v2403 = vpack.c.b16 %v1935, %v1931
      %v2404 = vpack.c.b16 %v1936, %v1932
      %v2405 = vpack.c.b16 %v1937, %v1933
      %v2406 = vpack.c.b16 %v1942, %v1938
      %v2407 = vpack.c.b16 %v1943, %v1939
      %v2408 = vpack.c.b16 %v1944, %v1940
      %v2409 = vpack.c.b16 %v1945, %v1941
      %v2410 = vpack.c.b16 %v1950, %v1946
      %v2411 = vpack.c.b16 %v1951, %v1947
      %v2412 = vpack.c.b16 %v1952, %v1948
      %v2413 = vpack.c.b16 %v1953, %v1949
      %v2414 = vpack.c.b16 %v1958, %v1954
      %v2415 = vpack.c.b16 %v1959, %v1955
      %v2416 = vpack.c.b16 %v1960, %v1956
      %v2417 = vpack.c.b16 %v1961, %v1957
      %v2418 = vpack.c.b16 %v1966, %v1962
      %v2419 = vpack.c.b16 %v1967, %v1963
      %v2420 = vpack.c.b16 %v1968, %v1964
      %v2421 = vpack.c.b16 %v1969, %v1965
      %v2422 = vpack.c.b16 %v1974, %v1970
      %v2423 = vpack.c.b16 %v1975, %v1971
      %v2424 = vpack.c.b16 %v1976, %v1972
      %v2425 = vpack.c.b16 %v1977, %v1973
      %v2426 = vpack.c.b16 %v1982, %v1978
      %v2427 = vpack.c.b16 %v1983, %v1979
      %v2428 = vpack.c.b16 %v1984, %v1980
      %v2429 = vpack.c.b16 %v1985, %v1981
      %v2430 = vpack.c.b16 %v1990, %v1986
      %v2431 = vpack.c.b16 %v1991, %v1987
      %v2432 = vpack.c.b16 %v1992, %v1988
      %v2433 = vpack.c.b16 %v1993, %v1989
      %v2434 = vpack.c.b16 %v1998, %v1994
      %v2435 = vpack.c.b16 %v1999, %v1995
      %v2436 = vpack.c.b16 %v2000, %v1996
      %v2437 = vpack.c.b16 %v2001, %v1997
      %v2438 = vpack.c.b16 %v2006, %v2002
      %v2439 = vpack.c.b16 %v2007, %v2003
      %v2440 = vpack.c.b16 %v2008, %v2004
      %v2441 = vpack.c.b16 %v2009, %v2005
      %v2442 = vpack.c.b16 %v2014, %v2010
      %v2443 = vpack.c.b16 %v2015, %v2011
      %v2444 = vpack.c.b16 %v2016, %v2012
      %v2445 = vpack.c.b16 %v2017, %v2013
      %v2446 = vpack.c.b16 %v2022, %v2018
      %v2447 = vpack.c.b16 %v2023, %v2019
      %v2448 = vpack.c.b16 %v2024, %v2020
      %v2449 = vpack.c.b16 %v2025, %v2021
      %v2450 = vpack.c.b16 %v2030, %v2026
      %v2451 = vpack.c.b16 %v2031, %v2027
      %v2452 = vpack.c.b16 %v2032, %v2028
      %v2453 = vpack.c.b16 %v2033, %v2029
      %v2454 = vpack.c.b16 %v2038, %v2034
      %v2455 = vpack.c.b16 %v2039, %v2035
      %v2456 = vpack.c.b16 %v2040, %v2036
      %v2457 = vpack.c.b16 %v2041, %v2037
      %v2458 = vpack.c.b16 %v2046, %v2042
      %v2459 = vpack.c.b16 %v2047, %v2043
      %v2460 = vpack.c.b16 %v2048, %v2044
      %v2461 = vpack.c.b16 %v2049, %v2045
      %v2462 = vpack.c.b16 %v2054, %v2050
      %v2463 = vpack.c.b16 %v2055, %v2051
      %v2464 = vpack.c.b16 %v2056, %v2052
      %v2465 = vpack.c.b16 %v2057, %v2053
      %v2466 = vpack.c.b16 %v2062, %v2058
      %v2467 = vpack.c.b16 %v2063, %v2059
      %v2468 = vpack.c.b16 %v2064, %v2060
      %v2469 = vpack.c.b16 %v2065, %v2061
      %v2470 = vpack.c.b16 %v2070, %v2066
      %v2471 = vpack.c.b16 %v2071, %v2067
      %v2472 = vpack.c.b16 %v2072, %v2068
      %v2473 = vpack.c.b16 %v2073, %v2069
      %v2474 = vpack.c.b16 %v2078, %v2074
      %v2475 = vpack.c.b16 %v2079, %v2075
      %v2476 = vpack.c.b16 %v2080, %v2076
      %v2477 = vpack.c.b16 %v2081, %v2077
      %v2478 = vpack.c.b16 %v2086, %v2082
      %v2479 = vpack.c.b16 %v2087, %v2083
      %v2480 = vpack.c.b16 %v2088, %v2084
      %v2481 = vpack.c.b16 %v2089, %v2085
      %v2482 = vpack.c.b16 %v2094, %v2090
      %v2483 = vpack.c.b16 %v2095, %v2091
      %v2484 = vpack.c.b16 %v2096, %v2092
      %v2485 = vpack.c.b16 %v2097, %v2093
      %v2486 = vpack.c.b16 %v2102, %v2098
      %v2487 = vpack.c.b16 %v2103, %v2099
      %v2488 = vpack.c.b16 %v2104, %v2100
      %v2489 = vpack.c.b16 %v2105, %v2101
      %v2490 = vpack.c.b16 %v2110, %v2106
      %v2491 = vpack.c.b16 %v2111, %v2107
      %v2492 = vpack.c.b16 %v2112, %v2108
      %v2493 = vpack.c.b16 %v2113, %v2109
      %v2494 = vpack.c.b16 %v2118, %v2114
      %v2495 = vpack.c.b16 %v2119, %v2115
      %v2496 = vpack.c.b16 %v2120, %v2116
      %v2497 = vpack.c.b16 %v2121, %v2117
      %v2498 = vpack.c.b16 %v2126, %v2122
      %v2499 = vpack.c.b16 %v2127, %v2123
      %v2500 = vpack.c.b16 %v2128, %v2124
      %v2501 = vpack.c.b16 %v2129, %v2125
      %v2502 = vpack.c.b16 %v2134, %v2130
      %v2503 = vpack.c.b16 %v2135, %v2131
      %v2504 = vpack.c.b16 %v2136, %v2132
      %v2505 = vpack.c.b16 %v2137, %v2133
      %v2506 = vpack.c.b16 %v2142, %v2138
      %v2507 = vpack.c.b16 %v2143, %v2139
      %v2508 = vpack.c.b16 %v2144, %v2140
      %v2509 = vpack.c.b16 %v2145, %v2141
      %v2510 = vpack.c.b16 %v2150, %v2146
      %v2511 = vpack.c.b16 %v2151, %v2147
      %v2512 = vpack.c.b16 %v2152, %v2148
      %v2513 = vpack.c.b16 %v2153, %v2149
      %v2514 = vpack.c.b16 %v2158, %v2154
      %v2515 = vpack.c.b16 %v2159, %v2155
      %v2516 = vpack.c.b16 %v2160, %v2156
      %v2517 = vpack.c.b16 %v2161, %v2157
      %v2518 = vpack.c.b16 %v2166, %v2162
      %v2519 = vpack.c.b16 %v2167, %v2163
      %v2520 = vpack.c.b16 %v2168, %v2164
      %v2521 = vpack.c.b16 %v2169, %v2165
      %v2522 = vpack.c.b16 %v2174, %v2170
      %v2523 = vpack.c.b16 %v2175, %v2171
      %v2524 = vpack.c.b16 %v2176, %v2172
      %v2525 = vpack.c.b16 %v2177, %v2173
      %v2526 = vpack.c.b16 %v2182, %v2178
      %v2527 = vpack.c.b16 %v2183, %v2179
      %v2528 = vpack.c.b16 %v2184, %v2180
      %v2529 = vpack.c.b16 %v2185, %v2181
      %v2530 = vpack.c.b16 %v2190, %v2186
      %v2531 = vpack.c.b16 %v2191, %v2187
      %v2532 = vpack.c.b16 %v2192, %v2188
      %v2533 = vpack.c.b16 %v2193, %v2189
      %v2534 = vpack.c.b16 %v2198, %v2194
      %v2535 = vpack.c.b16 %v2199, %v2195
      %v2536 = vpack.c.b16 %v2200, %v2196
      %v2537 = vpack.c.b16 %v2201, %v2197
      %v2538 = vpack.c.b16 %v2206, %v2202
      %v2539 = vpack.c.b16 %v2207, %v2203
      %v2540 = vpack.c.b16 %v2208, %v2204
      %v2541 = vpack.c.b16 %v2209, %v2205
      %v2542 = vpack.c.b16 %v2214, %v2210
      %v2543 = vpack.c.b16 %v2215, %v2211
      %v2544 = vpack.c.b16 %v2216, %v2212
      %v2545 = vpack.c.b16 %v2217, %v2213
      %v2546 = vpack.c.b16 %v2222, %v2218
      %v2547 = vpack.c.b16 %v2223, %v2219
      %v2548 = vpack.c.b16 %v2224, %v2220
      %v2549 = vpack.c.b16 %v2225, %v2221
      %v2550 = vpack.c.b16 %v2230, %v2226
      %v2551 = vpack.c.b16 %v2231, %v2227
      %v2552 = vpack.c.b16 %v2232, %v2228
      %v2553 = vpack.c.b16 %v2233, %v2229
      %v2554 = vpack.c.b16 %v2238, %v2234
      %v2555 = vpack.c.b16 %v2239, %v2235
      %v2556 = vpack.c.b16 %v2240, %v2236
      %v2557 = vpack.c.b16 %v2241, %v2237
      %v2558 = vpack.c.b16 %v2246, %v2242
      %v2559 = vpack.c.b16 %v2247, %v2243
      %v2560 = vpack.c.b16 %v2248, %v2244
      %v2561 = vpack.c.b16 %v2249, %v2245
      %v2562 = vpack.c.b16 %v2254, %v2250
      %v2563 = vpack.c.b16 %v2255, %v2251
      %v2564 = vpack.c.b16 %v2256, %v2252
      %v2565 = vpack.c.b16 %v2257, %v2253
      %v2566 = vpack.c.b16 %v2262, %v2258
      %v2567 = vpack.c.b16 %v2263, %v2259
      %v2568 = vpack.c.b16 %v2264, %v2260
      %v2569 = vpack.c.b16 %v2265, %v2261
      %v2570 = vpack.c.b16 %v2270, %v2266
      %v2571 = vpack.c.b16 %v2271, %v2267
      %v2572 = vpack.c.b16 %v2272, %v2268
      %v2573 = vpack.c.b16 %v2273, %v2269
      %v2574 = vpack.c.b16 %v2278, %v2274
      %v2575 = vpack.c.b16 %v2279, %v2275
      %v2576 = vpack.c.b16 %v2280, %v2276
      %v2577 = vpack.c.b16 %v2281, %v2277
      %v2578 = vpack.c.b16 %v2286, %v2282
      %v2579 = vpack.c.b16 %v2287, %v2283
      %v2580 = vpack.c.b16 %v2288, %v2284
      %v2581 = vpack.c.b16 %v2289, %v2285
      %v2582 = vpack.c.b16 %v2294, %v2290
      %v2583 = vpack.c.b16 %v2295, %v2291
      %v2584 = vpack.c.b16 %v2296, %v2292
      %v2585 = vpack.c.b16 %v2297, %v2293
      %v2586 = vpack.c.b16 %v2302, %v2298
      %v2587 = vpack.c.b16 %v2303, %v2299
      %v2588 = vpack.c.b16 %v2304, %v2300
      %v2589 = vpack.c.b16 %v2305, %v2301
      %v2590 = vpack.c.b16 %v2310, %v2306
      %v2591 = vpack.c.b16 %v2311, %v2307
      %v2592 = vpack.c.b16 %v2312, %v2308
      %v2593 = vpack.c.b16 %v2313, %v2309
      %v2594 = vpack.c.b16 %v2318, %v2314
      %v2595 = vpack.c.b16 %v2319, %v2315
      %v2596 = vpack.c.b16 %v2320, %v2316
      %v2597 = vpack.c.b16 %v2321, %v2317
      %v2598 = vpack.c.b16 %v2326, %v2322
      %v2599 = vpack.c.b16 %v2327, %v2323
      %v2600 = vpack.c.b16 %v2328, %v2324
      %v2601 = vpack.c.b16 %v2329, %v2325
      %v2602 = vpack.c.b16 %v2334, %v2330
      %v2603 = vpack.c.b16 %v2335, %v2331
      %v2604 = vpack.c.b16 %v2336, %v2332
      %v2605 = vpack.c.b16 %v2337, %v2333
      %v2606 = vpack.c.b16 %v2342, %v2338
      %v2607 = vpack.c.b16 %v2343, %v2339
      %v2608 = vpack.c.b16 %v2344, %v2340
      %v2609 = vpack.c.b16 %v2345, %v2341
      %v2610 = vpack.c.b16 %v2350, %v2346
      %v2611 = vpack.c.b16 %v2351, %v2347
      %v2612 = vpack.c.b16 %v2352, %v2348
      %v2613 = vpack.c.b16 %v2353, %v2349
      %v2614 = vpack.c.b16 %v2358, %v2354
      %v2615 = vpack.c.b16 %v2359, %v2355
      %v2616 = vpack.c.b16 %v2360, %v2356
      %v2617 = vpack.c.b16 %v2361, %v2357
      %2874 = vmatprep.subr.bf16.mxu0 %v2363
      %2875 = vmatpush1.bf16.msra.mxu0 %v2362
      %2876 = vmatprep.subr.bf16.mxu0 %v2367
      %2877 = vmatpush1.bf16.msra.mxu0 %v2366
      %2878 = vmatprep.subr.bf16.mxu0 %v2371
      %2879 = vmatpush1.bf16.msra.mxu0 %v2370
      %2880 = vmatprep.subr.bf16.mxu0 %v2375
      %2881 = vmatpush1.bf16.msra.mxu0 %v2374
      %2882 = vmatprep.subr.bf16.mxu0 %v2379
      %2883 = vmatpush1.bf16.msra.mxu0 %v2378
      %2884 = vmatprep.subr.bf16.mxu0 %v2383
      %2885 = vmatpush1.bf16.msra.mxu0 %v2382
      %2886 = vmatprep.subr.bf16.mxu0 %v2387
      %2887 = vmatpush1.bf16.msra.mxu0 %v2386
      %2888 = vmatprep.subr.bf16.mxu0 %v2391
      %2889 = vmatpush1.bf16.msra.mxu0 %v2390
      %2890 = vmatprep.subr.bf16.mxu0 %v2395
      %2891 = vmatpush1.bf16.msra.mxu0 %v2394
      %2892 = vmatprep.subr.bf16.mxu0 %v2399
      %2893 = vmatpush1.bf16.msra.mxu0 %v2398
      %2894 = vmatprep.subr.bf16.mxu0 %v2403
      %2895 = vmatpush1.bf16.msra.mxu0 %v2402
      %2896 = vmatprep.subr.bf16.mxu0 %v2407
      %2897 = vmatpush1.bf16.msra.mxu0 %v2406
      %2898 = vmatprep.subr.bf16.mxu0 %v2411
      %2899 = vmatpush1.bf16.msra.mxu0 %v2410
      %2900 = vmatprep.subr.bf16.mxu0 %v2415
      %2901 = vmatpush1.bf16.msra.mxu0 %v2414
      %2902 = vmatprep.subr.bf16.mxu0 %v2419
      %2903 = vmatpush1.bf16.msra.mxu0 %v2418
      %2904 = vmatprep.subr.bf16.mxu0 %v2423
      %2905 = vmatpush1.bf16.msra.mxu0 %v2422
      %2906 = vmatprep.mubr.bf16.mxu0 %v1309
      %2907 = vmatmul.mubr.bf16.gmra.mrb[0].mxu0 %v1308
      %v2908 = vpop.f32.mrb[0].mxu0
      %v2909 = vadd.f32 %v1577, %v2908
      %v2910 = vpop.f32.mrb[0].mxu0
      %v2911 = vadd.f32 %v1581, %v2910
      %v2912 = vpop.f32.mrb[0].mxu0
      %v2913 = vpop.f32.mrb[0].mxu0
      %2914 = vdwg.mxu0
      %2915 = vmatprep.subr.bf16.mxu0 %v2427
      %2916 = vmatpush1.bf16.msra.mxu0 %v2426
      %2917 = vmatprep.subr.bf16.mxu0 %v2431
      %2918 = vmatpush1.bf16.msra.mxu0 %v2430
      %2919 = vmatprep.subr.bf16.mxu0 %v2435
      %2920 = vmatpush1.bf16.msra.mxu0 %v2434
      %2921 = vmatprep.subr.bf16.mxu0 %v2439
      %2922 = vmatpush1.bf16.msra.mxu0 %v2438
      %2923 = vmatprep.subr.bf16.mxu0 %v2443
      %2924 = vmatpush1.bf16.msra.mxu0 %v2442
      %2925 = vmatprep.subr.bf16.mxu0 %v2447
      %2926 = vmatpush1.bf16.msra.mxu0 %v2446
      %2927 = vmatprep.subr.bf16.mxu0 %v2451
      %2928 = vmatpush1.bf16.msra.mxu0 %v2450
      %2929 = vmatprep.subr.bf16.mxu0 %v2455
      %2930 = vmatpush1.bf16.msra.mxu0 %v2454
      %2931 = vmatprep.subr.bf16.mxu0 %v2459
      %2932 = vmatpush1.bf16.msra.mxu0 %v2458
      %2933 = vmatprep.subr.bf16.mxu0 %v2463
      %2934 = vmatpush1.bf16.msra.mxu0 %v2462
      %2935 = vmatprep.subr.bf16.mxu0 %v2467
      %2936 = vmatpush1.bf16.msra.mxu0 %v2466
      %2937 = vmatprep.subr.bf16.mxu0 %v2471
      %2938 = vmatpush1.bf16.msra.mxu0 %v2470
      %2939 = vmatprep.subr.bf16.mxu0 %v2475
      %2940 = vmatpush1.bf16.msra.mxu0 %v2474
      %2941 = vmatprep.subr.bf16.mxu0 %v2479
      %2942 = vmatpush1.bf16.msra.mxu0 %v2478
      %2943 = vmatprep.subr.bf16.mxu0 %v2483
      %2944 = vmatpush1.bf16.msra.mxu0 %v2482
      %2945 = vmatprep.subr.bf16.mxu0 %v2487
      %2946 = vmatpush1.bf16.msra.mxu0 %v2486
      %2947 = vmatprep.mubr.bf16.mxu0 %v1311
      %2948 = vmatmul.mubr.bf16.gmra.mrb[0].mxu0 %v1310
      %v2949 = vpop.f32.mrb[0].mxu0
      %v2950 = vadd.f32 %v2909, %v2949
      %v2951 = vpop.f32.mrb[0].mxu0
      %v2952 = vadd.f32 %v2911, %v2951
      %v2953 = vpop.f32.mrb[0].mxu0
      %v2954 = vpop.f32.mrb[0].mxu0
      %2955 = vdwg.mxu0
      %2956 = vmatprep.subr.bf16.mxu0 %v2491
      %2957 = vmatpush1.bf16.msra.mxu0 %v2490
      %2958 = vmatprep.subr.bf16.mxu0 %v2495
      %2959 = vmatpush1.bf16.msra.mxu0 %v2494
      %2960 = vmatprep.subr.bf16.mxu0 %v2499
      %2961 = vmatpush1.bf16.msra.mxu0 %v2498
      %2962 = vmatprep.subr.bf16.mxu0 %v2503
      %2963 = vmatpush1.bf16.msra.mxu0 %v2502
      %2964 = vmatprep.subr.bf16.mxu0 %v2507
      %2965 = vmatpush1.bf16.msra.mxu0 %v2506
      %2966 = vmatprep.subr.bf16.mxu0 %v2511
      %2967 = vmatpush1.bf16.msra.mxu0 %v2510
      %2968 = vmatprep.subr.bf16.mxu0 %v2515
      %2969 = vmatpush1.bf16.msra.mxu0 %v2514
      %2970 = vmatprep.subr.bf16.mxu0 %v2519
      %2971 = vmatpush1.bf16.msra.mxu0 %v2518
      %2972 = vmatprep.subr.bf16.mxu0 %v2523
      %2973 = vmatpush1.bf16.msra.mxu0 %v2522
      %2974 = vmatprep.subr.bf16.mxu0 %v2527
      %2975 = vmatpush1.bf16.msra.mxu0 %v2526
      %2976 = vmatprep.subr.bf16.mxu0 %v2531
      %2977 = vmatpush1.bf16.msra.mxu0 %v2530
      %2978 = vmatprep.subr.bf16.mxu0 %v2535
      %2979 = vmatpush1.bf16.msra.mxu0 %v2534
      %2980 = vmatprep.subr.bf16.mxu0 %v2539
      %2981 = vmatpush1.bf16.msra.mxu0 %v2538
      %2982 = vmatprep.subr.bf16.mxu0 %v2543
      %2983 = vmatpush1.bf16.msra.mxu0 %v2542
      %2984 = vmatprep.subr.bf16.mxu0 %v2547
      %2985 = vmatpush1.bf16.msra.mxu0 %v2546
      %2986 = vmatprep.subr.bf16.mxu0 %v2551
      %2987 = vmatpush1.bf16.msra.mxu0 %v2550
      %2988 = vmatprep.mubr.bf16.mxu0 %v1313
      %2989 = vmatmul.mubr.bf16.gmra.mrb[0].mxu0 %v1312
      %v2990 = vpop.f32.mrb[0].mxu0
      %v2991 = vadd.f32 %v2950, %v2990
      %v2992 = vpop.f32.mrb[0].mxu0
      %v2993 = vadd.f32 %v2952, %v2992
      %v2994 = vpop.f32.mrb[0].mxu0
      %v2995 = vpop.f32.mrb[0].mxu0
      %2996 = vdwg.mxu0
      %2997 = vmatprep.subr.bf16.mxu0 %v2555
      %2998 = vmatpush1.bf16.msra.mxu0 %v2554
      %2999 = vmatprep.subr.bf16.mxu0 %v2559
      %3000 = vmatpush1.bf16.msra.mxu0 %v2558
      %3001 = vmatprep.subr.bf16.mxu0 %v2563
      %3002 = vmatpush1.bf16.msra.mxu0 %v2562
      %3003 = vmatprep.subr.bf16.mxu0 %v2567
      %3004 = vmatpush1.bf16.msra.mxu0 %v2566
      %3005 = vmatprep.subr.bf16.mxu0 %v2571
      %3006 = vmatpush1.bf16.msra.mxu0 %v2570
      %3007 = vmatprep.subr.bf16.mxu0 %v2575
      %3008 = vmatpush1.bf16.msra.mxu0 %v2574
      %3009 = vmatprep.subr.bf16.mxu0 %v2579
      %3010 = vmatpush1.bf16.msra.mxu0 %v2578
      %3011 = vmatprep.subr.bf16.mxu0 %v2583
      %3012 = vmatpush1.bf16.msra.mxu0 %v2582
      %3013 = vmatprep.subr.bf16.mxu0 %v2587
      %3014 = vmatpush1.bf16.msra.mxu0 %v2586
      %3015 = vmatprep.subr.bf16.mxu0 %v2591
      %3016 = vmatpush1.bf16.msra.mxu0 %v2590
      %3017 = vmatprep.subr.bf16.mxu0 %v2595
      %3018 = vmatpush1.bf16.msra.mxu0 %v2594
      %3019 = vmatprep.subr.bf16.mxu0 %v2599
      %3020 = vmatpush1.bf16.msra.mxu0 %v2598
      %3021 = vmatprep.subr.bf16.mxu0 %v2603
      %3022 = vmatpush1.bf16.msra.mxu0 %v2602
      %3023 = vmatprep.subr.bf16.mxu0 %v2607
      %3024 = vmatpush1.bf16.msra.mxu0 %v2606
      %3025 = vmatprep.subr.bf16.mxu0 %v2611
      %3026 = vmatpush1.bf16.msra.mxu0 %v2610
      %3027 = vmatprep.subr.bf16.mxu0 %v2615
      %3028 = vmatpush1.bf16.msra.mxu0 %v2614
      %3029 = vmatprep.mubr.bf16.mxu0 %v1315
      %3030 = vmatmul.mubr.bf16.gmra.mrb[0].mxu0 %v1314
      %v3031 = vpop.f32.mrb[0].mxu0
      %v3032 = vadd.f32 %v2991, %v3031
      %v3033 = vpop.f32.mrb[0].mxu0
      %v3034 = vadd.f32 %v2993, %v3033
      %v3035 = vpop.f32.mrb[0].mxu0
      %v3036 = vpop.f32.mrb[0].mxu0
      %3037 = vdwg.mxu0
      %3038 = vmatprep.subr.bf16.mxu0 %v2365
      %3039 = vmatpush1.bf16.msra.mxu0 %v2364
      %3040 = vmatprep.subr.bf16.mxu0 %v2369
      %3041 = vmatpush1.bf16.msra.mxu0 %v2368
      %3042 = vmatprep.subr.bf16.mxu0 %v2373
      %3043 = vmatpush1.bf16.msra.mxu0 %v2372
      %3044 = vmatprep.subr.bf16.mxu0 %v2377
      %3045 = vmatpush1.bf16.msra.mxu0 %v2376
      %3046 = vmatprep.subr.bf16.mxu0 %v2381
      %3047 = vmatpush1.bf16.msra.mxu0 %v2380
      %3048 = vmatprep.subr.bf16.mxu0 %v2385
      %3049 = vmatpush1.bf16.msra.mxu0 %v2384
      %3050 = vmatprep.subr.bf16.mxu0 %v2389
      %3051 = vmatpush1.bf16.msra.mxu0 %v2388
      %3052 = vmatprep.subr.bf16.mxu0 %v2393
      %3053 = vmatpush1.bf16.msra.mxu0 %v2392
      %3054 = vmatprep.subr.bf16.mxu0 %v2397
      %3055 = vmatpush1.bf16.msra.mxu0 %v2396
      %3056 = vmatprep.subr.bf16.mxu0 %v2401
      %3057 = vmatpush1.bf16.msra.mxu0 %v2400
      %3058 = vmatprep.subr.bf16.mxu0 %v2405
      %3059 = vmatpush1.bf16.msra.mxu0 %v2404
      %3060 = vmatprep.subr.bf16.mxu0 %v2409
      %3061 = vmatpush1.bf16.msra.mxu0 %v2408
      %3062 = vmatprep.subr.bf16.mxu0 %v2413
      %3063 = vmatpush1.bf16.msra.mxu0 %v2412
      %3064 = vmatprep.subr.bf16.mxu0 %v2417
      %3065 = vmatpush1.bf16.msra.mxu0 %v2416
      %3066 = vmatprep.subr.bf16.mxu0 %v2421
      %3067 = vmatpush1.bf16.msra.mxu0 %v2420
      %3068 = vmatprep.subr.bf16.mxu0 %v2425
      %3069 = vmatpush1.bf16.msra.mxu0 %v2424
      %3070 = vmatprep.mubr.bf16.mxu0 %v1309
      %3071 = vmatmul.mubr.bf16.gmra.mrb[0].mxu0 %v1308
      %v3072 = vpop.f32.mrb[0].mxu0
      %v3073 = vadd.f32 %v1585, %v3072
      %v3074 = vpop.f32.mrb[0].mxu0
      %v3075 = vadd.f32 %v1589, %v3074
      %v3076 = vpop.f32.mrb[0].mxu0
      %v3077 = vpop.f32.mrb[0].mxu0
      %3078 = vdwg.mxu0
      %3079 = vmatprep.subr.bf16.mxu0 %v2429
      %3080 = vmatpush1.bf16.msra.mxu0 %v2428
      %3081 = vmatprep.subr.bf16.mxu0 %v2433
      %3082 = vmatpush1.bf16.msra.mxu0 %v2432
      %3083 = vmatprep.subr.bf16.mxu0 %v2437
      %3084 = vmatpush1.bf16.msra.mxu0 %v2436
      %3085 = vmatprep.subr.bf16.mxu0 %v2441
      %3086 = vmatpush1.bf16.msra.mxu0 %v2440
      %3087 = vmatprep.subr.bf16.mxu0 %v2445
      %3088 = vmatpush1.bf16.msra.mxu0 %v2444
      %3089 = vmatprep.subr.bf16.mxu0 %v2449
      %3090 = vmatpush1.bf16.msra.mxu0 %v2448
      %3091 = vmatprep.subr.bf16.mxu0 %v2453
      %3092 = vmatpush1.bf16.msra.mxu0 %v2452
      %3093 = vmatprep.subr.bf16.mxu0 %v2457
      %3094 = vmatpush1.bf16.msra.mxu0 %v2456
      %3095 = vmatprep.subr.bf16.mxu0 %v2461
      %3096 = vmatpush1.bf16.msra.mxu0 %v2460
      %3097 = vmatprep.subr.bf16.mxu0 %v2465
      %3098 = vmatpush1.bf16.msra.mxu0 %v2464
      %3099 = vmatprep.subr.bf16.mxu0 %v2469
      %3100 = vmatpush1.bf16.msra.mxu0 %v2468
      %3101 = vmatprep.subr.bf16.mxu0 %v2473
      %3102 = vmatpush1.bf16.msra.mxu0 %v2472
      %3103 = vmatprep.subr.bf16.mxu0 %v2477
      %3104 = vmatpush1.bf16.msra.mxu0 %v2476
      %3105 = vmatprep.subr.bf16.mxu0 %v2481
      %3106 = vmatpush1.bf16.msra.mxu0 %v2480
      %3107 = vmatprep.subr.bf16.mxu0 %v2485
      %3108 = vmatpush1.bf16.msra.mxu0 %v2484
      %3109 = vmatprep.subr.bf16.mxu0 %v2489
      %3110 = vmatpush1.bf16.msra.mxu0 %v2488
      %3111 = vmatprep.mubr.bf16.mxu0 %v1311
      %3112 = vmatmul.mubr.bf16.gmra.mrb[0].mxu0 %v1310
      %v3113 = vpop.f32.mrb[0].mxu0
      %v3114 = vadd.f32 %v3073, %v3113
      %v3115 = vpop.f32.mrb[0].mxu0
      %v3116 = vadd.f32 %v3075, %v3115
      %v3117 = vpop.f32.mrb[0].mxu0
      %v3118 = vpop.f32.mrb[0].mxu0
      %3119 = vdwg.mxu0
      %3120 = vmatprep.subr.bf16.mxu0 %v2493
      %3121 = vmatpush1.bf16.msra.mxu0 %v2492
      %3122 = vmatprep.subr.bf16.mxu0 %v2497
      %3123 = vmatpush1.bf16.msra.mxu0 %v2496
      %3124 = vmatprep.subr.bf16.mxu0 %v2501
      %3125 = vmatpush1.bf16.msra.mxu0 %v2500
      %3126 = vmatprep.subr.bf16.mxu0 %v2505
      %3127 = vmatpush1.bf16.msra.mxu0 %v2504
      %3128 = vmatprep.subr.bf16.mxu0 %v2509
      %3129 = vmatpush1.bf16.msra.mxu0 %v2508
      %3130 = vmatprep.subr.bf16.mxu0 %v2513
      %3131 = vmatpush1.bf16.msra.mxu0 %v2512
      %3132 = vmatprep.subr.bf16.mxu0 %v2517
      %3133 = vmatpush1.bf16.msra.mxu0 %v2516
      %3134 = vmatprep.subr.bf16.mxu0 %v2521
      %3135 = vmatpush1.bf16.msra.mxu0 %v2520
      %3136 = vmatprep.subr.bf16.mxu0 %v2525
      %3137 = vmatpush1.bf16.msra.mxu0 %v2524
      %3138 = vmatprep.subr.bf16.mxu0 %v2529
      %3139 = vmatpush1.bf16.msra.mxu0 %v2528
      %3140 = vmatprep.subr.bf16.mxu0 %v2533
      %3141 = vmatpush1.bf16.msra.mxu0 %v2532
      %3142 = vmatprep.subr.bf16.mxu0 %v2537
      %3143 = vmatpush1.bf16.msra.mxu0 %v2536
      %3144 = vmatprep.subr.bf16.mxu0 %v2541
      %3145 = vmatpush1.bf16.msra.mxu0 %v2540
      %3146 = vmatprep.subr.bf16.mxu0 %v2545
      %3147 = vmatpush1.bf16.msra.mxu0 %v2544
      %3148 = vmatprep.subr.bf16.mxu0 %v2549
      %3149 = vmatpush1.bf16.msra.mxu0 %v2548
      %3150 = vmatprep.subr.bf16.mxu0 %v2553
      %3151 = vmatpush1.bf16.msra.mxu0 %v2552
      %3152 = vmatprep.mubr.bf16.mxu0 %v1313
      %3153 = vmatmul.mubr.bf16.gmra.mrb[0].mxu0 %v1312
      %v3154 = vpop.f32.mrb[0].mxu0
      %v3155 = vadd.f32 %v3114, %v3154
      %v3156 = vpop.f32.mrb[0].mxu0
      %v3157 = vadd.f32 %v3116, %v3156
      %v3158 = vpop.f32.mrb[0].mxu0
      %v3159 = vpop.f32.mrb[0].mxu0
      %3160 = vdwg.mxu0
      %3161 = vmatprep.subr.bf16.mxu0 %v2557
      %3162 = vmatpush1.bf16.msra.mxu0 %v2556
      %3163 = vmatprep.subr.bf16.mxu0 %v2561
      %3164 = vmatpush1.bf16.msra.mxu0 %v2560
      %3165 = vmatprep.subr.bf16.mxu0 %v2565
      %3166 = vmatpush1.bf16.msra.mxu0 %v2564
      %3167 = vmatprep.subr.bf16.mxu0 %v2569
      %3168 = vmatpush1.bf16.msra.mxu0 %v2568
      %3169 = vmatprep.subr.bf16.mxu0 %v2573
      %3170 = vmatpush1.bf16.msra.mxu0 %v2572
      %3171 = vmatprep.subr.bf16.mxu0 %v2577
      %3172 = vmatpush1.bf16.msra.mxu0 %v2576
      %3173 = vmatprep.subr.bf16.mxu0 %v2581
      %3174 = vmatpush1.bf16.msra.mxu0 %v2580
      %3175 = vmatprep.subr.bf16.mxu0 %v2585
      %3176 = vmatpush1.bf16.msra.mxu0 %v2584
      %3177 = vmatprep.subr.bf16.mxu0 %v2589
      %3178 = vmatpush1.bf16.msra.mxu0 %v2588
      %3179 = vmatprep.subr.bf16.mxu0 %v2593
      %3180 = vmatpush1.bf16.msra.mxu0 %v2592
      %3181 = vmatprep.subr.bf16.mxu0 %v2597
      %3182 = vmatpush1.bf16.msra.mxu0 %v2596
      %3183 = vmatprep.subr.bf16.mxu0 %v2601
      %3184 = vmatpush1.bf16.msra.mxu0 %v2600
      %3185 = vmatprep.subr.bf16.mxu0 %v2605
      %3186 = vmatpush1.bf16.msra.mxu0 %v2604
      %3187 = vmatprep.subr.bf16.mxu0 %v2609
      %3188 = vmatpush1.bf16.msra.mxu0 %v2608
      %3189 = vmatprep.subr.bf16.mxu0 %v2613
      %3190 = vmatpush1.bf16.msra.mxu0 %v2612
      %3191 = vmatprep.subr.bf16.mxu0 %v2617
      %3192 = vmatpush1.bf16.msra.mxu0 %v2616
      %3193 = vmatprep.mubr.bf16.mxu0 %v1315
      %3194 = vmatmul.mubr.bf16.gmra.mrb[0].mxu0 %v1314
      %v3195 = vpop.f32.mrb[0].mxu0
      %v3196 = vadd.f32 %v3155, %v3195
      %v3197 = vpop.f32.mrb[0].mxu0
      %v3198 = vadd.f32 %v3157, %v3197
      %v3199 = vpop.f32.mrb[0].mxu0
      %v3200 = vpop.f32.mrb[0].mxu0
      %3201 = vdwg.mxu0
      %v3202 = vmax.f32 %v3032, 0.0
      %v3203 = vmax.f32 %v3034, 0.0
      %v3204 = vmax.f32 %v3196, 0.0
      %v3205 = vmax.f32 %v3198, 0.0
      %v3206 = vpack.c.bf16 %v3202, %v3202
      %v3207 = vpack.c.bf16 %v3203, %v3203
      %v3208 = vpack.c.bf16 %v3204, %v3204
      %v3209 = vpack.c.bf16 %v3205, %v3205
      %v3210 = vld [vmem:[%s9] sm:$0xff]
      %v3211 = vld [vmem:[%s9 + $0x8] sm:$0xff]
      %v3212 = vld [vmem:[%s9 + $0x10] sm:$0xff]
      %v3213 = vld [vmem:[%s9 + $0x18] sm:$0xff]
      %v3214 = vld [vmem:[%s9 + $0x20] sm:$0xff]
      %v3215 = vld [vmem:[%s9 + $0x28] sm:$0xff]
      %v3216 = vld [vmem:[%s9 + $0x30] sm:$0xff]
      %v3217 = vld [vmem:[%s9 + $0x38] sm:$0xff]
      %v3218 = vld [vmem:[%s9 + $0x40] sm:$0xff]
      %v3219 = vld [vmem:[%s9 + $0x48] sm:$0xff]
      %v3220 = vld [vmem:[%s9 + $0x50] sm:$0xff]
      %v3221 = vld [vmem:[%s9 + $0x58] sm:$0xff]
      %v3222 = vld [vmem:[%s9 + $0x60] sm:$0xff]
      %v3223 = vld [vmem:[%s9 + $0x68] sm:$0xff]
      %v3224 = vld [vmem:[%s9 + $0x70] sm:$0xff]
      %v3225 = vld [vmem:[%s9 + $0x78] sm:$0xff]
      %v3226 = vld [vmem:[%s9 + $0x80] sm:$0xff]
      %v3227 = vld [vmem:[%s9 + $0x88] sm:$0xff]
      %v3228 = vld [vmem:[%s9 + $0x90] sm:$0xff]
      %v3229 = vld [vmem:[%s9 + $0x98] sm:$0xff]
      %v3230 = vld [vmem:[%s9 + $0xa0] sm:$0xff]
      %v3231 = vld [vmem:[%s9 + $0xa8] sm:$0xff]
      %v3232 = vld [vmem:[%s9 + $0xb0] sm:$0xff]
      %v3233 = vld [vmem:[%s9 + $0xb8] sm:$0xff]
      %v3234 = vld [vmem:[%s9 + $0xc0] sm:$0xff]
      %v3235 = vld [vmem:[%s9 + $0xc8] sm:$0xff]
      %v3236 = vld [vmem:[%s9 + $0xd0] sm:$0xff]
      %v3237 = vld [vmem:[%s9 + $0xd8] sm:$0xff]
      %v3238 = vld [vmem:[%s9 + $0xe0] sm:$0xff]
      %v3239 = vld [vmem:[%s9 + $0xe8] sm:$0xff]
      %v3240 = vld [vmem:[%s9 + $0xf0] sm:$0xff]
      %v3241 = vld [vmem:[%s9 + $0xf8] sm:$0xff]
      %v3242 = vld [vmem:[%s9 + $0x100] sm:$0xff]
      %v3243 = vld [vmem:[%s9 + $0x108] sm:$0xff]
      %v3244 = vld [vmem:[%s9 + $0x110] sm:$0xff]
      %v3245 = vld [vmem:[%s9 + $0x118] sm:$0xff]
      %v3246 = vld [vmem:[%s9 + $0x120] sm:$0xff]
      %v3247 = vld [vmem:[%s9 + $0x128] sm:$0xff]
      %v3248 = vld [vmem:[%s9 + $0x130] sm:$0xff]
      %v3249 = vld [vmem:[%s9 + $0x138] sm:$0xff]
      %v3250 = vld [vmem:[%s9 + $0x140] sm:$0xff]
      %v3251 = vld [vmem:[%s9 + $0x148] sm:$0xff]
      %v3252 = vld [vmem:[%s9 + $0x150] sm:$0xff]
      %v3253 = vld [vmem:[%s9 + $0x158] sm:$0xff]
      %v3254 = vld [vmem:[%s9 + $0x160] sm:$0xff]
      %v3255 = vld [vmem:[%s9 + $0x168] sm:$0xff]
      %v3256 = vld [vmem:[%s9 + $0x170] sm:$0xff]
      %v3257 = vld [vmem:[%s9 + $0x178] sm:$0xff]
      %v3258 = vld [vmem:[%s9 + $0x180] sm:$0xff]
      %v3259 = vld [vmem:[%s9 + $0x188] sm:$0xff]
      %v3260 = vld [vmem:[%s9 + $0x190] sm:$0xff]
      %v3261 = vld [vmem:[%s9 + $0x198] sm:$0xff]
      %v3262 = vld [vmem:[%s9 + $0x1a0] sm:$0xff]
      %v3263 = vld [vmem:[%s9 + $0x1a8] sm:$0xff]
      %v3264 = vld [vmem:[%s9 + $0x1b0] sm:$0xff]
      %v3265 = vld [vmem:[%s9 + $0x1b8] sm:$0xff]
      %v3266 = vld [vmem:[%s9 + $0x1c0] sm:$0xff]
      %v3267 = vld [vmem:[%s9 + $0x1c8] sm:$0xff]
      %v3268 = vld [vmem:[%s9 + $0x1d0] sm:$0xff]
      %v3269 = vld [vmem:[%s9 + $0x1d8] sm:$0xff]
      %v3270 = vld [vmem:[%s9 + $0x1e0] sm:$0xff]
      %v3271 = vld [vmem:[%s9 + $0x1e8] sm:$0xff]
      %v3272 = vld [vmem:[%s9 + $0x1f0] sm:$0xff]
      %v3273 = vld [vmem:[%s9 + $0x1f8] sm:$0xff]
      %v3274 = vld [vmem:[%s10] sm:$0x3]
      %v3276 = vlaneseq
      %v3277 = vshrl.u32 %v3276, 7
      %v3278 = vsub.s32 0, %v3277
      %v3279 = vrot.slane %v3274, %v3278
      %v3280 = vlaneseq
      %v3281 = vshrl.u32 %v3280, 7
      %v3282 = vsub.s32 1, %v3281
      %v3283 = vrot.slane %v3274, %v3282
      %v3350 = vunpack.c.l.b16 %v3210
      %v3351 = vunpack.c.h.b16 %v3210
      %v3352 = vunpack.c.l.b16 %v3211
      %v3353 = vunpack.c.h.b16 %v3211
      %v3354 = vunpack.c.l.b16 %v3212
      %v3355 = vunpack.c.h.b16 %v3212
      %v3356 = vunpack.c.l.b16 %v3213
      %v3357 = vunpack.c.h.b16 %v3213
      %v3358 = vunpack.c.l.b16 %v3214
      %v3359 = vunpack.c.h.b16 %v3214
      %v3360 = vunpack.c.l.b16 %v3215
      %v3361 = vunpack.c.h.b16 %v3215
      %v3362 = vunpack.c.l.b16 %v3216
      %v3363 = vunpack.c.h.b16 %v3216
      %v3364 = vunpack.c.l.b16 %v3217
      %v3365 = vunpack.c.h.b16 %v3217
      %v3366 = vunpack.c.l.b16 %v3218
      %v3367 = vunpack.c.h.b16 %v3218
      %v3368 = vunpack.c.l.b16 %v3219
      %v3369 = vunpack.c.h.b16 %v3219
      %v3370 = vunpack.c.l.b16 %v3220
      %v3371 = vunpack.c.h.b16 %v3220
      %v3372 = vunpack.c.l.b16 %v3221
      %v3373 = vunpack.c.h.b16 %v3221
      %v3374 = vunpack.c.l.b16 %v3222
      %v3375 = vunpack.c.h.b16 %v3222
      %v3376 = vunpack.c.l.b16 %v3223
      %v3377 = vunpack.c.h.b16 %v3223
      %v3378 = vunpack.c.l.b16 %v3224
      %v3379 = vunpack.c.h.b16 %v3224
      %v3380 = vunpack.c.l.b16 %v3225
      %v3381 = vunpack.c.h.b16 %v3225
      %v3382 = vunpack.c.l.b16 %v3226
      %v3383 = vunpack.c.h.b16 %v3226
      %v3384 = vunpack.c.l.b16 %v3227
      %v3385 = vunpack.c.h.b16 %v3227
      %v3386 = vunpack.c.l.b16 %v3228
      %v3387 = vunpack.c.h.b16 %v3228
      %v3388 = vunpack.c.l.b16 %v3229
      %v3389 = vunpack.c.h.b16 %v3229
      %v3390 = vunpack.c.l.b16 %v3230
      %v3391 = vunpack.c.h.b16 %v3230
      %v3392 = vunpack.c.l.b16 %v3231
      %v3393 = vunpack.c.h.b16 %v3231
      %v3394 = vunpack.c.l.b16 %v3232
      %v3395 = vunpack.c.h.b16 %v3232
      %v3396 = vunpack.c.l.b16 %v3233
      %v3397 = vunpack.c.h.b16 %v3233
      %v3398 = vunpack.c.l.b16 %v3234
      %v3399 = vunpack.c.h.b16 %v3234
      %v3400 = vunpack.c.l.b16 %v3235
      %v3401 = vunpack.c.h.b16 %v3235
      %v3402 = vunpack.c.l.b16 %v3236
      %v3403 = vunpack.c.h.b16 %v3236
      %v3404 = vunpack.c.l.b16 %v3237
      %v3405 = vunpack.c.h.b16 %v3237
      %v3406 = vunpack.c.l.b16 %v3238
      %v3407 = vunpack.c.h.b16 %v3238
      %v3408 = vunpack.c.l.b16 %v3239
      %v3409 = vunpack.c.h.b16 %v3239
      %v3410 = vunpack.c.l.b16 %v3240
      %v3411 = vunpack.c.h.b16 %v3240
      %v3412 = vunpack.c.l.b16 %v3241
      %v3413 = vunpack.c.h.b16 %v3241
      %v3414 = vunpack.c.l.b16 %v3242
      %v3415 = vunpack.c.h.b16 %v3242
      %v3416 = vunpack.c.l.b16 %v3243
      %v3417 = vunpack.c.h.b16 %v3243
      %v3418 = vunpack.c.l.b16 %v3244
      %v3419 = vunpack.c.h.b16 %v3244
      %v3420 = vunpack.c.l.b16 %v3245
      %v3421 = vunpack.c.h.b16 %v3245
      %v3422 = vunpack.c.l.b16 %v3246
      %v3423 = vunpack.c.h.b16 %v3246
      %v3424 = vunpack.c.l.b16 %v3247
      %v3425 = vunpack.c.h.b16 %v3247
      %v3426 = vunpack.c.l.b16 %v3248
      %v3427 = vunpack.c.h.b16 %v3248
      %v3428 = vunpack.c.l.b16 %v3249
      %v3429 = vunpack.c.h.b16 %v3249
      %v3430 = vunpack.c.l.b16 %v3250
      %v3431 = vunpack.c.h.b16 %v3250
      %v3432 = vunpack.c.l.b16 %v3251
      %v3433 = vunpack.c.h.b16 %v3251
      %v3434 = vunpack.c.l.b16 %v3252
      %v3435 = vunpack.c.h.b16 %v3252
      %v3436 = vunpack.c.l.b16 %v3253
      %v3437 = vunpack.c.h.b16 %v3253
      %v3438 = vunpack.c.l.b16 %v3254
      %v3439 = vunpack.c.h.b16 %v3254
      %v3440 = vunpack.c.l.b16 %v3255
      %v3441 = vunpack.c.h.b16 %v3255
      %v3442 = vunpack.c.l.b16 %v3256
      %v3443 = vunpack.c.h.b16 %v3256
      %v3444 = vunpack.c.l.b16 %v3257
      %v3445 = vunpack.c.h.b16 %v3257
      %v3446 = vunpack.c.l.b16 %v3258
      %v3447 = vunpack.c.h.b16 %v3258
      %v3448 = vunpack.c.l.b16 %v3259
      %v3449 = vunpack.c.h.b16 %v3259
      %v3450 = vunpack.c.l.b16 %v3260
      %v3451 = vunpack.c.h.b16 %v3260
      %v3452 = vunpack.c.l.b16 %v3261
      %v3453 = vunpack.c.h.b16 %v3261
      %v3454 = vunpack.c.l.b16 %v3262
      %v3455 = vunpack.c.h.b16 %v3262
      %v3456 = vunpack.c.l.b16 %v3263
      %v3457 = vunpack.c.h.b16 %v3263
      %v3458 = vunpack.c.l.b16 %v3264
      %v3459 = vunpack.c.h.b16 %v3264
      %v3460 = vunpack.c.l.b16 %v3265
      %v3461 = vunpack.c.h.b16 %v3265
      %v3462 = vunpack.c.l.b16 %v3266
      %v3463 = vunpack.c.h.b16 %v3266
      %v3464 = vunpack.c.l.b16 %v3267
      %v3465 = vunpack.c.h.b16 %v3267
      %v3466 = vunpack.c.l.b16 %v3268
      %v3467 = vunpack.c.h.b16 %v3268
      %v3468 = vunpack.c.l.b16 %v3269
      %v3469 = vunpack.c.h.b16 %v3269
      %v3470 = vunpack.c.l.b16 %v3270
      %v3471 = vunpack.c.h.b16 %v3270
      %v3472 = vunpack.c.l.b16 %v3271
      %v3473 = vunpack.c.h.b16 %v3271
      %v3474 = vunpack.c.l.b16 %v3272
      %v3475 = vunpack.c.h.b16 %v3272
      %v3476 = vunpack.c.l.b16 %v3273
      %v3477 = vunpack.c.h.b16 %v3273
      %v3478 = vpack.c.b16 %v3352, %v3350
      %v3479 = vpack.c.b16 %v3353, %v3351
      %v3480 = vpack.c.b16 %v3356, %v3354
      %v3481 = vpack.c.b16 %v3357, %v3355
      %v3482 = vpack.c.b16 %v3360, %v3358
      %v3483 = vpack.c.b16 %v3361, %v3359
      %v3484 = vpack.c.b16 %v3364, %v3362
      %v3485 = vpack.c.b16 %v3365, %v3363
      %v3486 = vpack.c.b16 %v3368, %v3366
      %v3487 = vpack.c.b16 %v3369, %v3367
      %v3488 = vpack.c.b16 %v3372, %v3370
      %v3489 = vpack.c.b16 %v3373, %v3371
      %v3490 = vpack.c.b16 %v3376, %v3374
      %v3491 = vpack.c.b16 %v3377, %v3375
      %v3492 = vpack.c.b16 %v3380, %v3378
      %v3493 = vpack.c.b16 %v3381, %v3379
      %v3494 = vpack.c.b16 %v3384, %v3382
      %v3495 = vpack.c.b16 %v3385, %v3383
      %v3496 = vpack.c.b16 %v3388, %v3386
      %v3497 = vpack.c.b16 %v3389, %v3387
      %v3498 = vpack.c.b16 %v3392, %v3390
      %v3499 = vpack.c.b16 %v3393, %v3391
      %v3500 = vpack.c.b16 %v3396, %v3394
      %v3501 = vpack.c.b16 %v3397, %v3395
      %v3502 = vpack.c.b16 %v3400, %v3398
      %v3503 = vpack.c.b16 %v3401, %v3399
      %v3504 = vpack.c.b16 %v3404, %v3402
      %v3505 = vpack.c.b16 %v3405, %v3403
      %v3506 = vpack.c.b16 %v3408, %v3406
      %v3507 = vpack.c.b16 %v3409, %v3407
      %v3508 = vpack.c.b16 %v3412, %v3410
      %v3509 = vpack.c.b16 %v3413, %v3411
      %v3510 = vpack.c.b16 %v3416, %v3414
      %v3511 = vpack.c.b16 %v3417, %v3415
      %v3512 = vpack.c.b16 %v3420, %v3418
      %v3513 = vpack.c.b16 %v3421, %v3419
      %v3514 = vpack.c.b16 %v3424, %v3422
      %v3515 = vpack.c.b16 %v3425, %v3423
      %v3516 = vpack.c.b16 %v3428, %v3426
      %v3517 = vpack.c.b16 %v3429, %v3427
      %v3518 = vpack.c.b16 %v3432, %v3430
      %v3519 = vpack.c.b16 %v3433, %v3431
      %v3520 = vpack.c.b16 %v3436, %v3434
      %v3521 = vpack.c.b16 %v3437, %v3435
      %v3522 = vpack.c.b16 %v3440, %v3438
      %v3523 = vpack.c.b16 %v3441, %v3439
      %v3524 = vpack.c.b16 %v3444, %v3442
      %v3525 = vpack.c.b16 %v3445, %v3443
      %v3526 = vpack.c.b16 %v3448, %v3446
      %v3527 = vpack.c.b16 %v3449, %v3447
      %v3528 = vpack.c.b16 %v3452, %v3450
      %v3529 = vpack.c.b16 %v3453, %v3451
      %v3530 = vpack.c.b16 %v3456, %v3454
      %v3531 = vpack.c.b16 %v3457, %v3455
      %v3532 = vpack.c.b16 %v3460, %v3458
      %v3533 = vpack.c.b16 %v3461, %v3459
      %v3534 = vpack.c.b16 %v3464, %v3462
      %v3535 = vpack.c.b16 %v3465, %v3463
      %v3536 = vpack.c.b16 %v3468, %v3466
      %v3537 = vpack.c.b16 %v3469, %v3467
      %v3538 = vpack.c.b16 %v3472, %v3470
      %v3539 = vpack.c.b16 %v3473, %v3471
      %v3540 = vpack.c.b16 %v3476, %v3474
      %v3541 = vpack.c.b16 %v3477, %v3475
      %3606 = vmatprep.subr.bf16.mxu0 %v3479
      %3607 = vmatpush1.bf16.msra.mxu0 %v3478
      %3608 = vmatprep.subr.bf16.mxu0 %v3481
      %3609 = vmatpush1.bf16.msra.mxu0 %v3480
      %3610 = vmatprep.subr.bf16.mxu0 %v3483
      %3611 = vmatpush1.bf16.msra.mxu0 %v3482
      %3612 = vmatprep.subr.bf16.mxu0 %v3485
      %3613 = vmatpush1.bf16.msra.mxu0 %v3484
      %3614 = vmatprep.subr.bf16.mxu0 %v3487
      %3615 = vmatpush1.bf16.msra.mxu0 %v3486
      %3616 = vmatprep.subr.bf16.mxu0 %v3489
      %3617 = vmatpush1.bf16.msra.mxu0 %v3488
      %3618 = vmatprep.subr.bf16.mxu0 %v3491
      %3619 = vmatpush1.bf16.msra.mxu0 %v3490
      %3620 = vmatprep.subr.bf16.mxu0 %v3493
      %3621 = vmatpush1.bf16.msra.mxu0 %v3492
      %3622 = vmatprep.subr.bf16.mxu0 %v3495
      %3623 = vmatpush1.bf16.msra.mxu0 %v3494
      %3624 = vmatprep.subr.bf16.mxu0 %v3497
      %3625 = vmatpush1.bf16.msra.mxu0 %v3496
      %3626 = vmatprep.subr.bf16.mxu0 %v3499
      %3627 = vmatpush1.bf16.msra.mxu0 %v3498
      %3628 = vmatprep.subr.bf16.mxu0 %v3501
      %3629 = vmatpush1.bf16.msra.mxu0 %v3500
      %3630 = vmatprep.subr.bf16.mxu0 %v3503
      %3631 = vmatpush1.bf16.msra.mxu0 %v3502
      %3632 = vmatprep.subr.bf16.mxu0 %v3505
      %3633 = vmatpush1.bf16.msra.mxu0 %v3504
      %3634 = vmatprep.subr.bf16.mxu0 %v3507
      %3635 = vmatpush1.bf16.msra.mxu0 %v3506
      %3636 = vmatprep.subr.bf16.mxu0 %v3509
      %3637 = vmatpush1.bf16.msra.mxu0 %v3508
      %3638 = vmatprep.mubr.bf16.mxu0 %v3207
      %3639 = vmatmul.mubr.bf16.gmra.mrb[0].mxu0 %v3206
      %v3640 = vpop.f32.mrb[0].mxu0
      %v3641 = vadd.f32 %v3279, %v3640
      %v3642 = vpop.f32.mrb[0].mxu0
      %v3643 = vadd.f32 %v3283, %v3642
      %v3644 = vpop.f32.mrb[0].mxu0
      %v3645 = vpop.f32.mrb[0].mxu0
      %3646 = vdwg.mxu0
      %3647 = vmatprep.subr.bf16.mxu0 %v3511
      %3648 = vmatpush1.bf16.msra.mxu0 %v3510
      %3649 = vmatprep.subr.bf16.mxu0 %v3513
      %3650 = vmatpush1.bf16.msra.mxu0 %v3512
      %3651 = vmatprep.subr.bf16.mxu0 %v3515
      %3652 = vmatpush1.bf16.msra.mxu0 %v3514
      %3653 = vmatprep.subr.bf16.mxu0 %v3517
      %3654 = vmatpush1.bf16.msra.mxu0 %v3516
      %3655 = vmatprep.subr.bf16.mxu0 %v3519
      %3656 = vmatpush1.bf16.msra.mxu0 %v3518
      %3657 = vmatprep.subr.bf16.mxu0 %v3521
      %3658 = vmatpush1.bf16.msra.mxu0 %v3520
      %3659 = vmatprep.subr.bf16.mxu0 %v3523
      %3660 = vmatpush1.bf16.msra.mxu0 %v3522
      %3661 = vmatprep.subr.bf16.mxu0 %v3525
      %3662 = vmatpush1.bf16.msra.mxu0 %v3524
      %3663 = vmatprep.subr.bf16.mxu0 %v3527
      %3664 = vmatpush1.bf16.msra.mxu0 %v3526
      %3665 = vmatprep.subr.bf16.mxu0 %v3529
      %3666 = vmatpush1.bf16.msra.mxu0 %v3528
      %3667 = vmatprep.subr.bf16.mxu0 %v3531
      %3668 = vmatpush1.bf16.msra.mxu0 %v3530
      %3669 = vmatprep.subr.bf16.mxu0 %v3533
      %3670 = vmatpush1.bf16.msra.mxu0 %v3532
      %3671 = vmatprep.subr.bf16.mxu0 %v3535
      %3672 = vmatpush1.bf16.msra.mxu0 %v3534
      %3673 = vmatprep.subr.bf16.mxu0 %v3537
      %3674 = vmatpush1.bf16.msra.mxu0 %v3536
      %3675 = vmatprep.subr.bf16.mxu0 %v3539
      %3676 = vmatpush1.bf16.msra.mxu0 %v3538
      %3677 = vmatprep.subr.bf16.mxu0 %v3541
      %3678 = vmatpush1.bf16.msra.mxu0 %v3540
      %3679 = vmatprep.mubr.bf16.mxu0 %v3209
      %3680 = vmatmul.mubr.bf16.gmra.mrb[0].mxu0 %v3208
      %v3681 = vpop.f32.mrb[0].mxu0
      %v3682 = vadd.f32 %v3641, %v3681
      %v3683 = vpop.f32.mrb[0].mxu0
      %v3684 = vadd.f32 %v3643, %v3683
      %v3685 = vpop.f32.mrb[0].mxu0
      %v3686 = vpop.f32.mrb[0].mxu0
      %3687 = vdwg.mxu0
      %v3688 = vmax.f32 %v3682, 0.0
      %v3689 = vmax.f32 %v3684, 0.0
      %v3692 = vcombine.low %v3688, %v3689
      %v3694 = vunpack.c.l.s4 1983009808
      %v3695 = vunpack.c.0.s8 %v3694
      %v3696 = vlaneseq
      %v3697 = vshrl.u32 %v3696, 7
      %v3698 = vsub.s32 %v3695, %v3697
      %v3699 = vrot.slane %v3692, %v3698
      %3701 = vst [vmem:[#allocation3] sm:$0xf] %v3699
    $region57: #{t1_forward.1} parent=1 // pred_fallthru
      _
    // Predicated region
    $region58: #{t1_forward.1} parent=1 // pred_check
      _
    $region59: #{t1_forward.1} parent=1 // pred_check_branch
      %3703 = sbr.rel (0) target = $region61
    $region60: #{t1_forward.1} parent=1 // pred_region
      %s3705 = ssub.s32 64, 64
      %3706 = vsyncadd [#allocation4], %s3705
      %s3708 = sshll.u32 [#allocation3], 4
      %s3709 = int_to_ptr.vmem [resolvable:$true] %s3708
      %3711 = dma.vmem_to_hbm [thread:$0]  %s3709, 64, %s11, [#allocation4]
    $region61: #{t1_forward.1} parent=1 // pred_fallthru
      _
    // Predicated region
    $region62: #{t1_forward.1} parent=1 // pred_check
      _
    $region63: #{t1_forward.1} parent=1 // pred_check_branch
      %3713 = sbr.rel (0) target = $region65
    $region64: #{t1_forward.1} parent=1 // pred_region
      %3714 = dma.done [#allocation4], 64
    $region65: #{t1_forward.1} parent=1 // pred_fallthru
      _
    %3715 = vsyncpa [#allocation4], 1

</llo_original>
